<compile_context>
chip_gen: v5e
topology: v5e:2x2
jax: 0.10.0
libtpu: 0.0.40
codegen_flags: <defaults>
</compile_context>

<pallas_src>
import math
import jax
import jax.numpy as jnp
from jax.experimental import pallas as pl
from jax.experimental.pallas import tpu as pltpu

# ---------------- synthetic small BertConfig ----------------
HIDDEN = 32
NUM_HEADS = 4
HEAD_DIM = HIDDEN // NUM_HEADS
INTERMEDIATE = 64
NUM_LAYERS = 2
VOCAB = 64
TYPE_VOCAB = 2
MAX_POS = 16
LN_EPS = 1e-12

BATCH = 2
SEQ = 8
HEAD_HID = 512
OUT_PAD = 128        # lane-dense padded classifier width (real classes = 2)
OUT_ROWS = 8         # sublane-padded output rows -> unmasked final store


def _pick_mxu_dtype():
    """bf16 MXU operands on v6e/v7x; f32 on v5e and older (no bf16 VPU/EUP)."""
    try:
        kind = jax.devices()[0].device_kind.lower()
    except Exception:
        return jnp.float32
    if any(tag in kind for tag in ("v6", "v7", "tpu7")):
        return jnp.bfloat16
    return jnp.float32


MXU_DTYPE = _pick_mxu_dtype()


def _layer_norm(x, gamma, beta):
    # independent reductions (mean(x), mean(x*x)) -> the two XLU passes can overlap
    mean = jnp.mean(x, axis=-1, keepdims=True)
    mean_sq = jnp.mean(x * x, axis=-1, keepdims=True)
    var = jnp.maximum(mean_sq - mean * mean, 0.0)
    return (x - mean) * jax.lax.rsqrt(var + LN_EPS) * gamma + beta


def _softmax_lastdim_approx(x):
    m = jnp.max(x, axis=-1, keepdims=True)
    e = jnp.exp(x - m)
    return e * pl.reciprocal(jnp.sum(e, axis=-1, keepdims=True), approx=True)


# ---------------- single fused Pallas kernel (one grid point == one sentence pair) ----------------
def conliner_kernel(emb_ref, mask_ref, emb_ln_ref,
                    w_qkv_ref, b_qkv_ref, w_o_ref, b_o_ref, ln_ref,
                    w_int_ref, b_int_ref, w_ffo_ref, b_ffo_ref,
                    w1_ref, b1_ref, w2_ref, b2_ref,
                    out_ref):
    N, S, H, NH, DH = 2, SEQ, HIDDEN, NUM_HEADS, HEAD_DIM   # N = {source, target}
    NS = N * S
    scale = 1.0 / math.sqrt(DH)

    emb_ln = emb_ln_ref[...]                                      # (2, H): gamma, beta
    x = _layer_norm(emb_ref[0], emb_ln[0:1], emb_ln[1:2])         # (2, S, H)
    x = x.reshape(NS, H)

    # additive key mask, broadcast ONCE before the layer/head loops
    add_mask = jnp.broadcast_to(mask_ref[0], (N, S, S))           # (2, S, S)

    for l in range(NUM_LAYERS):                                   # unrolled (2 layers)
        w_qkv = w_qkv_ref[l]                                      # (H, 3H) = [Wq | Wk | Wv]
        w_o = w_o_ref[l]                                          # (H, H)
        ln = ln_ref[l]                                            # (4, H) = [g1; b1; g2; b2]

        # fused Q/K/V projection: one (NS,H)@(H,3H) matmul (weights may be bf16)
        qkv = jnp.dot(x.astype(w_qkv.dtype), w_qkv,
                      preferred_element_type=jnp.float32) + b_qkv_ref[l]
        q = qkv[:, 0 * H:1 * H].reshape(N, S, H)
        k = qkv[:, 1 * H:2 * H].reshape(N, S, H)
        v = qkv[:, 2 * H:3 * H].reshape(N, S, H)

        # per-head attention; contexts stay in vregs (no VMEM scratch, no masked stores)
        ctx_parts = []
        for h in range(NH):
            sl = slice(h * DH, (h + 1) * DH)
            scores = jnp.einsum('nqd,nkd->nqk', q[..., sl], k[..., sl],
                                preferred_element_type=jnp.float32) * scale + add_mask
            probs = _softmax_lastdim_approx(scores)
            ctx_parts.append(jnp.einsum('nqk,nkd->nqd', probs, v[..., sl],
                                        preferred_element_type=jnp.float32))
        ctx = jnp.concatenate(ctx_parts, axis=-1).reshape(NS, H)

        attn = jnp.dot(ctx.astype(w_o.dtype), w_o,
                       preferred_element_type=jnp.float32) + b_o_ref[l]
        h1 = _layer_norm(attn + x, ln[0:1], ln[1:2])

        # TODO(synk): HF BERT uses exact (erf) GELU; tanh approximation used here.
        w_int = w_int_ref[l]
        w_ffo = w_ffo_ref[l]
        inter = jax.nn.gelu(jnp.dot(h1.astype(w_int.dtype), w_int,
                                    preferred_element_type=jnp.float32) + b_int_ref[l],
                            approximate=True)
        ffn = jnp.dot(inter.astype(w_ffo.dtype), w_ffo,
                      preferred_element_type=jnp.float32) + b_ffo_ref[l]
        x = _layer_norm(ffn + h1, ln[2:3], ln[3:4])

    # ---- classifier head on this pair's [CLS] rows ----
    cls = x.reshape(N, S, H)[:, 0, :]                             # one strided sublane gather
    src = cls[0:1, :]                                             # (1, H)
    tgt = cls[1:2, :]                                             # (1, H)
    feat = jnp.concatenate([src, tgt, jnp.abs(src - tgt)], axis=-1)   # (1, 3H) -> one matmul

    w1 = w1_ref[...]
    w2 = w2_ref[...]
    hid = jnp.maximum(jnp.dot(feat.astype(w1.dtype), w1,
                              preferred_element_type=jnp.float32) + b1_ref[...], 0.0)
    # lane-dense padded logits: cols >= 2 carry a -1e30 bias so softmax is exact.
    logits = jnp.dot(hid.astype(w2.dtype), w2,
                     preferred_element_type=jnp.float32) + b2_ref[...]
    m = jnp.max(logits, axis=-1, keepdims=True)
    e = jnp.exp(logits - m)
    probs = e / jnp.sum(e, axis=-1, keepdims=True)                # exact divide for class probs

    # sublane-broadcast so the final store is a full unmasked (8, 128) tile
    out_ref[...] = jnp.broadcast_to(probs[:, None, :],
                                    (1, OUT_ROWS, OUT_PAD)).astype(out_ref.dtype)


# ---------------- parameter init (deterministic, synthetic) ----------------
def init_params(key):
    def nrm(k, shape):
        return 0.02 * jax.random.normal(k, shape, dtype=jnp.float32)

    keys = iter(jax.random.split(key, 16))
    L, H, I = NUM_LAYERS, HIDDEN, INTERMEDIATE
    ln_rows = jnp.stack([jnp.ones(H), jnp.zeros(H),
                         jnp.ones(H), jnp.zeros(H)]).astype(jnp.float32)     # g1,b1,g2,b2

    head_w2 = nrm(next(keys), (HEAD_HID, 2))
    head_b2 = jnp.zeros((1, 2), jnp.float32)
    # padded classifier output weights are built ONCE here (not per forward call)
    w2_pad = jnp.zeros((HEAD_HID, OUT_PAD), jnp.float32).at[:, :2].set(head_w2)
    b2_pad = jnp.full((1, OUT_PAD), -1e30, jnp.float32).at[:, :2].set(head_b2)

    params = {
        "word_emb": nrm(next(keys), (VOCAB, H)),
        "pos_emb": nrm(next(keys), (MAX_POS, H)),
        "type_emb": nrm(next(keys), (TYPE_VOCAB, H)),
        "emb_ln": jnp.stack([jnp.ones(H), jnp.zeros(H)]).astype(jnp.float32),   # (2, H)
        # per-layer params stacked over a leading layer dim; QKV packed, Wo separate
        "w_qkv": nrm(next(keys), (L, H, 3 * H)).astype(MXU_DTYPE),
        "b_qkv": jnp.zeros((L, 1, 3 * H), jnp.float32),
        "w_o": nrm(next(keys), (L, H, H)).astype(MXU_DTYPE),
        "b_o": jnp.zeros((L, 1, H), jnp.float32),
        "ln": jnp.tile(ln_rows[None], (L, 1, 1)),                 # (L, 4, H)
        "w_inter": nrm(next(keys), (L, H, I)).astype(MXU_DTYPE),
        "b_inter": jnp.zeros((L, 1, I), jnp.float32),
        "w_ffout": nrm(next(keys), (L, I, H)).astype(MXU_DTYPE),
        "b_ffout": jnp.zeros((L, 1, H), jnp.float32),
        # classifier head
        "head_w1": nrm(next(keys), (3 * H, HEAD_HID)).astype(MXU_DTYPE),
        "head_b1": jnp.zeros((1, HEAD_HID), jnp.float32),
        "head_w2_pad": w2_pad.astype(MXU_DTYPE),
        "head_b2_pad": b2_pad,
    }
    return params


# ---------------- forward (embedding gathers in JAX, everything else in Pallas) ----------------
def conliner_forward(params,
                     source_input_ids, source_attention_mask, source_token_type_ids,
                     target_input_ids, target_attention_mask, target_token_type_ids,
                     c=None):
    # NOTE: `c` is unused by the reference forward pass.
    B, S = source_input_ids.shape
    L, H, I = NUM_LAYERS, HIDDEN, INTERMEDIATE

    def embed(ids, type_ids):
        return (params["word_emb"][ids]
                + params["pos_emb"][:S][None, :, :]
                + params["type_emb"][type_ids])

    # pair layout (B, 2, S, H): axis 1 = [source, target] -> each grid point owns one pair
    emb = jnp.stack([embed(source_input_ids, source_token_type_ids),
                     embed(target_input_ids, target_token_type_ids)],
                    axis=1).astype(jnp.float32)                               # (B, 2, S, H)
    attn_mask = jnp.stack([source_attention_mask, target_attention_mask],
                          axis=1).astype(jnp.float32)                         # (B, 2, S)
    add_mask = ((1.0 - attn_mask) * -10000.0)[:, :, None, :]                  # (B, 2, 1, S)

    def fixed(rank):
        return lambda b, _r=rank: (0,) * _r

    in_specs = [
        pl.BlockSpec((1, 2, S, H), lambda b: (b, 0, 0, 0)),          # emb (per pair)
        pl.BlockSpec((1, 2, 1, S), lambda b: (b, 0, 0, 0)),          # add_mask (per pair)
        pl.BlockSpec((2, H), fixed(2)),                              # emb_ln
        pl.BlockSpec((L, H, 3 * H), fixed(3)),                       # w_qkv
        pl.BlockSpec((L, 1, 3 * H), fixed(3)),                       # b_qkv
        pl.BlockSpec((L, H, H), fixed(3)),                           # w_o
        pl.BlockSpec((L, 1, H), fixed(3)),                           # b_o
        pl.BlockSpec((L, 4, H), fixed(3)),                           # ln
        pl.BlockSpec((L, H, I), fixed(3)),                           # w_inter
        pl.BlockSpec((L, 1, I), fixed(3)),                           # b_inter
        pl.BlockSpec((L, I, H), fixed(3)),                           # w_ffout
        pl.BlockSpec((L, 1, H), fixed(3)),                           # b_ffout
        pl.BlockSpec((3 * H, HEAD_HID), fixed(2)),                   # head_w1
        pl.BlockSpec((1, HEAD_HID), fixed(2)),                       # head_b1
        pl.BlockSpec((HEAD_HID, OUT_PAD), fixed(2)),                 # head_w2_pad
        pl.BlockSpec((1, OUT_PAD), fixed(2)),                        # head_b2_pad
    ]
    out_spec = pl.BlockSpec((1, OUT_ROWS, OUT_PAD), lambda b: (b, 0, 0))

    probs_padded = pl.pallas_call(
        conliner_kernel,
        out_shape=jax.ShapeDtypeStruct((B, OUT_ROWS, OUT_PAD), jnp.float32),
        grid=(B,),                                                   # one pair per grid point
        in_specs=in_specs,
        out_specs=out_spec,
        compiler_params=pltpu.CompilerParams(
            dimension_semantics=("parallel",)),                      # uses both TCs on v7x
    )(emb, add_mask, params["emb_ln"],
      params["w_qkv"], params["b_qkv"], params["w_o"], params["b_o"], params["ln"],
      params["w_inter"], params["b_inter"], params["w_ffout"], params["b_ffout"],
      params["head_w1"], params["head_b1"], params["head_w2_pad"], params["head_b2_pad"])

    return probs_padded[:, 0, :2]


if __name__ == "__main__":
    key = jax.random.PRNGKey(0)
    kp, k1, k2 = jax.random.split(key, 3)
    params = init_params(kp)

    source_input_ids = jax.random.randint(k1, (BATCH, SEQ), 0, VOCAB, dtype=jnp.int32)
    target_input_ids = jax.random.randint(k2, (BATCH, SEQ), 0, VOCAB, dtype=jnp.int32)
    source_attention_mask = jnp.ones((BATCH, SEQ), jnp.int32)
    target_attention_mask = jnp.ones((BATCH, SEQ), jnp.int32)
    source_token_type_ids = jnp.zeros((BATCH, SEQ), jnp.int32)
    target_token_type_ids = jnp.zeros((BATCH, SEQ), jnp.int32)

    probs = conliner_forward(params,
                             source_input_ids, source_attention_mask, source_token_type_ids,
                             target_input_ids, target_attention_mask, target_token_type_ids,
                             c=None)
    probs = jax.block_until_ready(probs)
    assert probs.shape == (BATCH, 2)
    assert bool(jnp.all(jnp.isfinite(probs)))
    print("KERNEL_OK")
</pallas_src>

<mosaic_0001>
module attributes {stable_mosaic.version = 11 : i64} {
  func.func @conliner_kernel(%arg0: i32, %arg1: memref<1x2x8x32xf32, #tpu.memory_space<vmem>>, %arg2: memref<1x2x1x8xf32, #tpu.memory_space<vmem>>, %arg3: memref<2x32xf32, #tpu.memory_space<vmem>>, %arg4: memref<2x32x96xf32, #tpu.memory_space<vmem>>, %arg5: memref<2x1x96xf32, #tpu.memory_space<vmem>>, %arg6: memref<2x32x32xf32, #tpu.memory_space<vmem>>, %arg7: memref<2x1x32xf32, #tpu.memory_space<vmem>>, %arg8: memref<2x4x32xf32, #tpu.memory_space<vmem>>, %arg9: memref<2x32x64xf32, #tpu.memory_space<vmem>>, %arg10: memref<2x1x64xf32, #tpu.memory_space<vmem>>, %arg11: memref<2x64x32xf32, #tpu.memory_space<vmem>>, %arg12: memref<2x1x32xf32, #tpu.memory_space<vmem>>, %arg13: memref<96x512xf32, #tpu.memory_space<vmem>>, %arg14: memref<1x512xf32, #tpu.memory_space<vmem>>, %arg15: memref<512x128xf32, #tpu.memory_space<vmem>>, %arg16: memref<1x128xf32, #tpu.memory_space<vmem>>, %arg17: memref<1x8x128xf32, #tpu.memory_space<vmem>>) attributes {dimension_semantics = [#tpu.dimension_semantics<parallel>], iteration_bounds = array<i64: 2>, scalar_prefetch = 0 : i64, scratch_operands = 0 : i64, tpu.core_type = #tpu.core_type<tc>, window_params = [{transform_indices = @transform_0, window_bounds = array<i64: 1, 2, 8, 32>}, {transform_indices = @transform_1, window_bounds = array<i64: 1, 2, 1, 8>}, {pipeline_mode = #tpu.pipeline_mode<synchronous>, transform_indices = @transform_2, window_bounds = array<i64: 2, 32>}, {pipeline_mode = #tpu.pipeline_mode<synchronous>, transform_indices = @transform_3, window_bounds = array<i64: 2, 32, 96>}, {pipeline_mode = #tpu.pipeline_mode<synchronous>, transform_indices = @transform_4, window_bounds = array<i64: 2, 1, 96>}, {pipeline_mode = #tpu.pipeline_mode<synchronous>, transform_indices = @transform_5, window_bounds = array<i64: 2, 32, 32>}, {pipeline_mode = #tpu.pipeline_mode<synchronous>, transform_indices = @transform_6, window_bounds = array<i64: 2, 1, 32>}, {pipeline_mode = #tpu.pipeline_mode<synchronous>, transform_indices = @transform_7, window_bounds = array<i64: 2, 4, 32>}, {pipeline_mode = #tpu.pipeline_mode<synchronous>, transform_indices = @transform_8, window_bounds = array<i64: 2, 32, 64>}, {pipeline_mode = #tpu.pipeline_mode<synchronous>, transform_indices = @transform_9, window_bounds = array<i64: 2, 1, 64>}, {pipeline_mode = #tpu.pipeline_mode<synchronous>, transform_indices = @transform_10, window_bounds = array<i64: 2, 64, 32>}, {pipeline_mode = #tpu.pipeline_mode<synchronous>, transform_indices = @transform_11, window_bounds = array<i64: 2, 1, 32>}, {pipeline_mode = #tpu.pipeline_mode<synchronous>, transform_indices = @transform_12, window_bounds = array<i64: 96, 512>}, {pipeline_mode = #tpu.pipeline_mode<synchronous>, transform_indices = @transform_13, window_bounds = array<i64: 1, 512>}, {pipeline_mode = #tpu.pipeline_mode<synchronous>, transform_indices = @transform_14, window_bounds = array<i64: 512, 128>}, {pipeline_mode = #tpu.pipeline_mode<synchronous>, transform_indices = @transform_15, window_bounds = array<i64: 1, 128>}, {transform_indices = @transform_16, window_bounds = array<i64: 1, 8, 128>}]} {
    %c0 = arith.constant 0 : index
    %c0_0 = arith.constant 0 : index
    %0 = vector.load %arg3[%c0, %c0_0] : memref<2x32xf32, #tpu.memory_space<vmem>>, vector<2x32xf32>
    %c0_1 = arith.constant 0 : index
    %c0_2 = arith.constant 0 : index
    %c0_3 = arith.constant 0 : index
    %c0_4 = arith.constant 0 : index
    %1 = vector.load %arg1[%c0_1, %c0_2, %c0_3, %c0_4] : memref<1x2x8x32xf32, #tpu.memory_space<vmem>>, vector<1x2x8x32xf32>
    %2 = vector.shape_cast %1 : vector<1x2x8x32xf32> to vector<2x8x32xf32>
    %3 = vector.extract_strided_slice %0 {offsets = [0, 0], sizes = [1, 32], strides = [1, 1]} : vector<2x32xf32> to vector<1x32xf32>
    %4 = vector.extract_strided_slice %0 {offsets = [1, 0], sizes = [1, 32], strides = [1, 1]} : vector<2x32xf32> to vector<1x32xf32>
    %cst = arith.constant dense<0.000000e+00> : vector<2x8xf32>
    %5 = vector.multi_reduction <add>, %2, %cst [2] : vector<2x8x32xf32> to vector<2x8xf32>
    %6 = vector.shape_cast %5 : vector<2x8xf32> to vector<2x8x1xf32>
    %cst_5 = arith.constant 3.200000e+01 : f32
    %7 = vector.broadcast %cst_5 : f32 to vector<2x8x1xf32>
    %8 = arith.divf %6, %7 : vector<2x8x1xf32>
    %9 = arith.mulf %2, %2 : vector<2x8x32xf32>
    %cst_6 = arith.constant dense<0.000000e+00> : vector<2x8xf32>
    %10 = vector.multi_reduction <add>, %9, %cst_6 [2] : vector<2x8x32xf32> to vector<2x8xf32>
    %11 = vector.shape_cast %10 : vector<2x8xf32> to vector<2x8x1xf32>
    %cst_7 = arith.constant 3.200000e+01 : f32
    %12 = vector.broadcast %cst_7 : f32 to vector<2x8x1xf32>
    %13 = arith.divf %11, %12 : vector<2x8x1xf32>
    %14 = arith.mulf %8, %8 : vector<2x8x1xf32>
    %15 = arith.subf %13, %14 : vector<2x8x1xf32>
    %cst_8 = arith.constant 0.000000e+00 : f32
    %16 = vector.broadcast %cst_8 : f32 to vector<2x8x1xf32>
    %17 = arith.maximumf %15, %16 : vector<2x8x1xf32>
    %18 = vector.broadcast %8 : vector<2x8x1xf32> to vector<2x8x32xf32>
    %19 = arith.subf %2, %18 : vector<2x8x32xf32>
    %cst_9 = arith.constant 9.99999996E-13 : f32
    %20 = vector.broadcast %cst_9 : f32 to vector<2x8x1xf32>
    %21 = arith.addf %17, %20 : vector<2x8x1xf32>
    %22 = math.rsqrt %21 : vector<2x8x1xf32>
    %23 = vector.broadcast %22 : vector<2x8x1xf32> to vector<2x8x32xf32>
    %24 = arith.mulf %19, %23 : vector<2x8x32xf32>
    %25 = vector.shape_cast %3 : vector<1x32xf32> to vector<1x1x32xf32>
    %26 = vector.broadcast %25 : vector<1x1x32xf32> to vector<2x8x32xf32>
    %27 = arith.mulf %24, %26 : vector<2x8x32xf32>
    %28 = vector.shape_cast %4 : vector<1x32xf32> to vector<1x1x32xf32>
    %29 = vector.broadcast %28 : vector<1x1x32xf32> to vector<2x8x32xf32>
    %30 = arith.addf %27, %29 : vector<2x8x32xf32>
    %31 = vector.shape_cast %30 : vector<2x8x32xf32> to vector<16x32xf32>
    %c0_10 = arith.constant 0 : index
    %c0_11 = arith.constant 0 : index
    %c0_12 = arith.constant 0 : index
    %c0_13 = arith.constant 0 : index
    %32 = vector.load %arg2[%c0_10, %c0_11, %c0_12, %c0_13] : memref<1x2x1x8xf32, #tpu.memory_space<vmem>>, vector<1x2x1x8xf32>
    %33 = vector.shape_cast %32 : vector<1x2x1x8xf32> to vector<2x1x8xf32>
    %34 = vector.shape_cast %33 : vector<2x1x8xf32> to vector<2x1x8xf32>
    %35 = vector.broadcast %34 : vector<2x1x8xf32> to vector<2x8x8xf32>
    %c0_14 = arith.constant 0 : index
    %c0_15 = arith.constant 0 : index
    %c0_16 = arith.constant 0 : index
    %36 = vector.load %arg4[%c0_14, %c0_15, %c0_16] : memref<2x32x96xf32, #tpu.memory_space<vmem>>, vector<1x32x96xf32>
    %37 = vector.shape_cast %36 : vector<1x32x96xf32> to vector<32x96xf32>
    %c0_17 = arith.constant 0 : index
    %c0_18 = arith.constant 0 : index
    %c0_19 = arith.constant 0 : index
    %38 = vector.load %arg6[%c0_17, %c0_18, %c0_19] : memref<2x32x32xf32, #tpu.memory_space<vmem>>, vector<1x32x32xf32>
    %39 = vector.shape_cast %38 : vector<1x32x32xf32> to vector<32x32xf32>
    %c0_20 = arith.constant 0 : index
    %c0_21 = arith.constant 0 : index
    %c0_22 = arith.constant 0 : index
    %40 = vector.load %arg8[%c0_20, %c0_21, %c0_22] : memref<2x4x32xf32, #tpu.memory_space<vmem>>, vector<1x4x32xf32>
    %41 = vector.shape_cast %40 : vector<1x4x32xf32> to vector<4x32xf32>
    %cst_23 = arith.constant dense<0.000000e+00> : vector<16x96xf32>
    %42 = tpu.matmul %31, %37, %cst_23 {dimension_numbers = #tpu.dot_dimension_numbers<[1], [0], [0], [1], [0, 0, 1, 1], [], []>} : vector<16x32xf32>, vector<32x96xf32>, vector<16x96xf32> -> vector<16x96xf32>
    %c0_24 = arith.constant 0 : index
    %c0_25 = arith.constant 0 : index
    %c0_26 = arith.constant 0 : index
    %43 = vector.load %arg5[%c0_24, %c0_25, %c0_26] : memref<2x1x96xf32, #tpu.memory_space<vmem>>, vector<1x1x96xf32>
    %44 = vector.shape_cast %43 : vector<1x1x96xf32> to vector<1x96xf32>
    %45 = vector.broadcast %44 : vector<1x96xf32> to vector<16x96xf32>
    %46 = arith.addf %42, %45 : vector<16x96xf32>
    %47 = vector.extract_strided_slice %46 {offsets = [0, 0], sizes = [16, 32], strides = [1, 1]} : vector<16x96xf32> to vector<16x32xf32>
    %48 = vector.shape_cast %47 : vector<16x32xf32> to vector<2x8x32xf32>
    %49 = vector.extract_strided_slice %46 {offsets = [0, 32], sizes = [16, 32], strides = [1, 1]} : vector<16x96xf32> to vector<16x32xf32>
    %50 = vector.shape_cast %49 : vector<16x32xf32> to vector<2x8x32xf32>
    %51 = vector.extract_strided_slice %46 {offsets = [0, 64], sizes = [16, 32], strides = [1, 1]} : vector<16x96xf32> to vector<16x32xf32>
    %52 = vector.shape_cast %51 : vector<16x32xf32> to vector<2x8x32xf32>
    %53 = vector.extract_strided_slice %48 {offsets = [0, 0, 0], sizes = [2, 8, 8], strides = [1, 1, 1]} : vector<2x8x32xf32> to vector<2x8x8xf32>
    %54 = vector.extract_strided_slice %50 {offsets = [0, 0, 0], sizes = [2, 8, 8], strides = [1, 1, 1]} : vector<2x8x32xf32> to vector<2x8x8xf32>
    "tpu.trace_start"() <{level = 10 : i32, message = "nqd,nkd->nqk"}> : () -> ()
    %cst_27 = arith.constant dense<0.000000e+00> : vector<2x8x8xf32>
    %55 = tpu.matmul %53, %54, %cst_27 {dimension_numbers = #tpu.dot_dimension_numbers<[2], [2], [1], [1], [0, 0, 0, 1, 1, 1], [0], [0]>} : vector<2x8x8xf32>, vector<2x8x8xf32>, vector<2x8x8xf32> -> vector<2x8x8xf32>
    "tpu.trace_stop"() : () -> ()
    %cst_28 = arith.constant 0.353553385 : f32
    %56 = vector.broadcast %cst_28 : f32 to vector<2x8x8xf32>
    %57 = arith.mulf %55, %56 : vector<2x8x8xf32>
    %58 = arith.addf %57, %35 : vector<2x8x8xf32>
    %cst_29 = arith.constant dense<0xFF800000> : vector<2x8xf32>
    %59 = vector.multi_reduction <maximumf>, %58, %cst_29 [2] : vector<2x8x8xf32> to vector<2x8xf32>
    %60 = vector.shape_cast %59 : vector<2x8xf32> to vector<2x8x1xf32>
    %61 = vector.broadcast %60 : vector<2x8x1xf32> to vector<2x8x8xf32>
    %62 = arith.subf %58, %61 : vector<2x8x8xf32>
    %63 = math.exp %62 : vector<2x8x8xf32>
    %cst_30 = arith.constant dense<0.000000e+00> : vector<2x8xf32>
    %64 = vector.multi_reduction <add>, %63, %cst_30 [2] : vector<2x8x8xf32> to vector<2x8xf32>
    %65 = vector.shape_cast %64 : vector<2x8xf32> to vector<2x8x1xf32>
    %66 = tpu.reciprocal %65 {approx = true} : vector<2x8x1xf32> -> vector<2x8x1xf32>
    %67 = vector.broadcast %66 : vector<2x8x1xf32> to vector<2x8x8xf32>
    %68 = arith.mulf %63, %67 : vector<2x8x8xf32>
    %69 = vector.extract_strided_slice %52 {offsets = [0, 0, 0], sizes = [2, 8, 8], strides = [1, 1, 1]} : vector<2x8x32xf32> to vector<2x8x8xf32>
    "tpu.trace_start"() <{level = 10 : i32, message = "nqk,nkd->nqd"}> : () -> ()
    %cst_31 = arith.constant dense<0.000000e+00> : vector<2x8x8xf32>
    %70 = tpu.matmul %68, %69, %cst_31 {dimension_numbers = #tpu.dot_dimension_numbers<[2], [1], [1], [2], [0, 0, 0, 1, 1, 2], [0], [0]>} : vector<2x8x8xf32>, vector<2x8x8xf32>, vector<2x8x8xf32> -> vector<2x8x8xf32>
    "tpu.trace_stop"() : () -> ()
    %71 = vector.extract_strided_slice %48 {offsets = [0, 0, 8], sizes = [2, 8, 8], strides = [1, 1, 1]} : vector<2x8x32xf32> to vector<2x8x8xf32>
    %72 = vector.extract_strided_slice %50 {offsets = [0, 0, 8], sizes = [2, 8, 8], strides = [1, 1, 1]} : vector<2x8x32xf32> to vector<2x8x8xf32>
    "tpu.trace_start"() <{level = 10 : i32, message = "nqd,nkd->nqk"}> : () -> ()
    %cst_32 = arith.constant dense<0.000000e+00> : vector<2x8x8xf32>
    %73 = tpu.matmul %71, %72, %cst_32 {dimension_numbers = #tpu.dot_dimension_numbers<[2], [2], [1], [1], [0, 0, 0, 1, 1, 1], [0], [0]>} : vector<2x8x8xf32>, vector<2x8x8xf32>, vector<2x8x8xf32> -> vector<2x8x8xf32>
    "tpu.trace_stop"() : () -> ()
    %cst_33 = arith.constant 0.353553385 : f32
    %74 = vector.broadcast %cst_33 : f32 to vector<2x8x8xf32>
    %75 = arith.mulf %73, %74 : vector<2x8x8xf32>
    %76 = arith.addf %75, %35 : vector<2x8x8xf32>
    %cst_34 = arith.constant dense<0xFF800000> : vector<2x8xf32>
    %77 = vector.multi_reduction <maximumf>, %76, %cst_34 [2] : vector<2x8x8xf32> to vector<2x8xf32>
    %78 = vector.shape_cast %77 : vector<2x8xf32> to vector<2x8x1xf32>
    %79 = vector.broadcast %78 : vector<2x8x1xf32> to vector<2x8x8xf32>
    %80 = arith.subf %76, %79 : vector<2x8x8xf32>
    %81 = math.exp %80 : vector<2x8x8xf32>
    %cst_35 = arith.constant dense<0.000000e+00> : vector<2x8xf32>
    %82 = vector.multi_reduction <add>, %81, %cst_35 [2] : vector<2x8x8xf32> to vector<2x8xf32>
    %83 = vector.shape_cast %82 : vector<2x8xf32> to vector<2x8x1xf32>
    %84 = tpu.reciprocal %83 {approx = true} : vector<2x8x1xf32> -> vector<2x8x1xf32>
    %85 = vector.broadcast %84 : vector<2x8x1xf32> to vector<2x8x8xf32>
    %86 = arith.mulf %81, %85 : vector<2x8x8xf32>
    %87 = vector.extract_strided_slice %52 {offsets = [0, 0, 8], sizes = [2, 8, 8], strides = [1, 1, 1]} : vector<2x8x32xf32> to vector<2x8x8xf32>
    "tpu.trace_start"() <{level = 10 : i32, message = "nqk,nkd->nqd"}> : () -> ()
    %cst_36 = arith.constant dense<0.000000e+00> : vector<2x8x8xf32>
    %88 = tpu.matmul %86, %87, %cst_36 {dimension_numbers = #tpu.dot_dimension_numbers<[2], [1], [1], [2], [0, 0, 0, 1, 1, 2], [0], [0]>} : vector<2x8x8xf32>, vector<2x8x8xf32>, vector<2x8x8xf32> -> vector<2x8x8xf32>
    "tpu.trace_stop"() : () -> ()
    %89 = vector.extract_strided_slice %48 {offsets = [0, 0, 16], sizes = [2, 8, 8], strides = [1, 1, 1]} : vector<2x8x32xf32> to vector<2x8x8xf32>
    %90 = vector.extract_strided_slice %50 {offsets = [0, 0, 16], sizes = [2, 8, 8], strides = [1, 1, 1]} : vector<2x8x32xf32> to vector<2x8x8xf32>
    "tpu.trace_start"() <{level = 10 : i32, message = "nqd,nkd->nqk"}> : () -> ()
    %cst_37 = arith.constant dense<0.000000e+00> : vector<2x8x8xf32>
    %91 = tpu.matmul %89, %90, %cst_37 {dimension_numbers = #tpu.dot_dimension_numbers<[2], [2], [1], [1], [0, 0, 0, 1, 1, 1], [0], [0]>} : vector<2x8x8xf32>, vector<2x8x8xf32>, vector<2x8x8xf32> -> vector<2x8x8xf32>
    "tpu.trace_stop"() : () -> ()
    %cst_38 = arith.constant 0.353553385 : f32
    %92 = vector.broadcast %cst_38 : f32 to vector<2x8x8xf32>
    %93 = arith.mulf %91, %92 : vector<2x8x8xf32>
    %94 = arith.addf %93, %35 : vector<2x8x8xf32>
    %cst_39 = arith.constant dense<0xFF800000> : vector<2x8xf32>
    %95 = vector.multi_reduction <maximumf>, %94, %cst_39 [2] : vector<2x8x8xf32> to vector<2x8xf32>
    %96 = vector.shape_cast %95 : vector<2x8xf32> to vector<2x8x1xf32>
    %97 = vector.broadcast %96 : vector<2x8x1xf32> to vector<2x8x8xf32>
    %98 = arith.subf %94, %97 : vector<2x8x8xf32>
    %99 = math.exp %98 : vector<2x8x8xf32>
    %cst_40 = arith.constant dense<0.000000e+00> : vector<2x8xf32>
    %100 = vector.multi_reduction <add>, %99, %cst_40 [2] : vector<2x8x8xf32> to vector<2x8xf32>
    %101 = vector.shape_cast %100 : vector<2x8xf32> to vector<2x8x1xf32>
    %102 = tpu.reciprocal %101 {approx = true} : vector<2x8x1xf32> -> vector<2x8x1xf32>
    %103 = vector.broadcast %102 : vector<2x8x1xf32> to vector<2x8x8xf32>
    %104 = arith.mulf %99, %103 : vector<2x8x8xf32>
    %105 = vector.extract_strided_slice %52 {offsets = [0, 0, 16], sizes = [2, 8, 8], strides = [1, 1, 1]} : vector<2x8x32xf32> to vector<2x8x8xf32>
    "tpu.trace_start"() <{level = 10 : i32, message = "nqk,nkd->nqd"}> : () -> ()
    %cst_41 = arith.constant dense<0.000000e+00> : vector<2x8x8xf32>
    %106 = tpu.matmul %104, %105, %cst_41 {dimension_numbers = #tpu.dot_dimension_numbers<[2], [1], [1], [2], [0, 0, 0, 1, 1, 2], [0], [0]>} : vector<2x8x8xf32>, vector<2x8x8xf32>, vector<2x8x8xf32> -> vector<2x8x8xf32>
    "tpu.trace_stop"() : () -> ()
    %107 = vector.extract_strided_slice %48 {offsets = [0, 0, 24], sizes = [2, 8, 8], strides = [1, 1, 1]} : vector<2x8x32xf32> to vector<2x8x8xf32>
    %108 = vector.extract_strided_slice %50 {offsets = [0, 0, 24], sizes = [2, 8, 8], strides = [1, 1, 1]} : vector<2x8x32xf32> to vector<2x8x8xf32>
    "tpu.trace_start"() <{level = 10 : i32, message = "nqd,nkd->nqk"}> : () -> ()
    %cst_42 = arith.constant dense<0.000000e+00> : vector<2x8x8xf32>
    %109 = tpu.matmul %107, %108, %cst_42 {dimension_numbers = #tpu.dot_dimension_numbers<[2], [2], [1], [1], [0, 0, 0, 1, 1, 1], [0], [0]>} : vector<2x8x8xf32>, vector<2x8x8xf32>, vector<2x8x8xf32> -> vector<2x8x8xf32>
    "tpu.trace_stop"() : () -> ()
    %cst_43 = arith.constant 0.353553385 : f32
    %110 = vector.broadcast %cst_43 : f32 to vector<2x8x8xf32>
    %111 = arith.mulf %109, %110 : vector<2x8x8xf32>
    %112 = arith.addf %111, %35 : vector<2x8x8xf32>
    %cst_44 = arith.constant dense<0xFF800000> : vector<2x8xf32>
    %113 = vector.multi_reduction <maximumf>, %112, %cst_44 [2] : vector<2x8x8xf32> to vector<2x8xf32>
    %114 = vector.shape_cast %113 : vector<2x8xf32> to vector<2x8x1xf32>
    %115 = vector.broadcast %114 : vector<2x8x1xf32> to vector<2x8x8xf32>
    %116 = arith.subf %112, %115 : vector<2x8x8xf32>
    %117 = math.exp %116 : vector<2x8x8xf32>
    %cst_45 = arith.constant dense<0.000000e+00> : vector<2x8xf32>
    %118 = vector.multi_reduction <add>, %117, %cst_45 [2] : vector<2x8x8xf32> to vector<2x8xf32>
    %119 = vector.shape_cast %118 : vector<2x8xf32> to vector<2x8x1xf32>
    %120 = tpu.reciprocal %119 {approx = true} : vector<2x8x1xf32> -> vector<2x8x1xf32>
    %121 = vector.broadcast %120 : vector<2x8x1xf32> to vector<2x8x8xf32>
    %122 = arith.mulf %117, %121 : vector<2x8x8xf32>
    %123 = vector.extract_strided_slice %52 {offsets = [0, 0, 24], sizes = [2, 8, 8], strides = [1, 1, 1]} : vector<2x8x32xf32> to vector<2x8x8xf32>
    "tpu.trace_start"() <{level = 10 : i32, message = "nqk,nkd->nqd"}> : () -> ()
    %cst_46 = arith.constant dense<0.000000e+00> : vector<2x8x8xf32>
    %124 = tpu.matmul %122, %123, %cst_46 {dimension_numbers = #tpu.dot_dimension_numbers<[2], [1], [1], [2], [0, 0, 0, 1, 1, 2], [0], [0]>} : vector<2x8x8xf32>, vector<2x8x8xf32>, vector<2x8x8xf32> -> vector<2x8x8xf32>
    "tpu.trace_stop"() : () -> ()
    %125 = tpu.concatenate %70, %88, %106, %124 in 2 : vector<2x8x8xf32>, vector<2x8x8xf32>, vector<2x8x8xf32>, vector<2x8x8xf32> -> vector<2x8x32xf32>
    %126 = vector.shape_cast %125 : vector<2x8x32xf32> to vector<16x32xf32>
    %cst_47 = arith.constant dense<0.000000e+00> : vector<16x32xf32>
    %127 = tpu.matmul %126, %39, %cst_47 {dimension_numbers = #tpu.dot_dimension_numbers<[1], [0], [0], [1], [0, 0, 1, 1], [], []>} : vector<16x32xf32>, vector<32x32xf32>, vector<16x32xf32> -> vector<16x32xf32>
    %c0_48 = arith.constant 0 : index
    %c0_49 = arith.constant 0 : index
    %c0_50 = arith.constant 0 : index
    %128 = vector.load %arg7[%c0_48, %c0_49, %c0_50] : memref<2x1x32xf32, #tpu.memory_space<vmem>>, vector<1x1x32xf32>
    %129 = vector.shape_cast %128 : vector<1x1x32xf32> to vector<1x32xf32>
    %130 = vector.broadcast %129 : vector<1x32xf32> to vector<16x32xf32>
    %131 = arith.addf %127, %130 : vector<16x32xf32>
    %132 = arith.addf %131, %31 : vector<16x32xf32>
    %133 = vector.extract_strided_slice %41 {offsets = [0, 0], sizes = [1, 32], strides = [1, 1]} : vector<4x32xf32> to vector<1x32xf32>
    %134 = vector.extract_strided_slice %41 {offsets = [1, 0], sizes = [1, 32], strides = [1, 1]} : vector<4x32xf32> to vector<1x32xf32>
    %cst_51 = arith.constant dense<0.000000e+00> : vector<16xf32>
    %135 = vector.multi_reduction <add>, %132, %cst_51 [1] : vector<16x32xf32> to vector<16xf32>
    %136 = vector.shape_cast %135 : vector<16xf32> to vector<16x1xf32>
    %cst_52 = arith.constant 3.200000e+01 : f32
    %137 = vector.broadcast %cst_52 : f32 to vector<16x1xf32>
    %138 = arith.divf %136, %137 : vector<16x1xf32>
    %139 = arith.mulf %132, %132 : vector<16x32xf32>
    %cst_53 = arith.constant dense<0.000000e+00> : vector<16xf32>
    %140 = vector.multi_reduction <add>, %139, %cst_53 [1] : vector<16x32xf32> to vector<16xf32>
    %141 = vector.shape_cast %140 : vector<16xf32> to vector<16x1xf32>
    %cst_54 = arith.constant 3.200000e+01 : f32
    %142 = vector.broadcast %cst_54 : f32 to vector<16x1xf32>
    %143 = arith.divf %141, %142 : vector<16x1xf32>
    %144 = arith.mulf %138, %138 : vector<16x1xf32>
    %145 = arith.subf %143, %144 : vector<16x1xf32>
    %cst_55 = arith.constant 0.000000e+00 : f32
    %146 = vector.broadcast %cst_55 : f32 to vector<16x1xf32>
    %147 = arith.maximumf %145, %146 : vector<16x1xf32>
    %148 = vector.broadcast %138 : vector<16x1xf32> to vector<16x32xf32>
    %149 = arith.subf %132, %148 : vector<16x32xf32>
    %cst_56 = arith.constant 9.99999996E-13 : f32
    %150 = vector.broadcast %cst_56 : f32 to vector<16x1xf32>
    %151 = arith.addf %147, %150 : vector<16x1xf32>
    %152 = math.rsqrt %151 : vector<16x1xf32>
    %153 = vector.broadcast %152 : vector<16x1xf32> to vector<16x32xf32>
    %154 = arith.mulf %149, %153 : vector<16x32xf32>
    %155 = vector.broadcast %133 : vector<1x32xf32> to vector<16x32xf32>
    %156 = arith.mulf %154, %155 : vector<16x32xf32>
    %157 = vector.broadcast %134 : vector<1x32xf32> to vector<16x32xf32>
    %158 = arith.addf %156, %157 : vector<16x32xf32>
    %c0_57 = arith.constant 0 : index
    %c0_58 = arith.constant 0 : index
    %c0_59 = arith.constant 0 : index
    %159 = vector.load %arg9[%c0_57, %c0_58, %c0_59] : memref<2x32x64xf32, #tpu.memory_space<vmem>>, vector<1x32x64xf32>
    %160 = vector.shape_cast %159 : vector<1x32x64xf32> to vector<32x64xf32>
    %c0_60 = arith.constant 0 : index
    %c0_61 = arith.constant 0 : index
    %c0_62 = arith.constant 0 : index
    %161 = vector.load %arg11[%c0_60, %c0_61, %c0_62] : memref<2x64x32xf32, #tpu.memory_space<vmem>>, vector<1x64x32xf32>
    %162 = vector.shape_cast %161 : vector<1x64x32xf32> to vector<64x32xf32>
    %cst_63 = arith.constant dense<0.000000e+00> : vector<16x64xf32>
    %163 = tpu.matmul %158, %160, %cst_63 {dimension_numbers = #tpu.dot_dimension_numbers<[1], [0], [0], [1], [0, 0, 1, 1], [], []>} : vector<16x32xf32>, vector<32x64xf32>, vector<16x64xf32> -> vector<16x64xf32>
    %c0_64 = arith.constant 0 : index
    %c0_65 = arith.constant 0 : index
    %c0_66 = arith.constant 0 : index
    %164 = vector.load %arg10[%c0_64, %c0_65, %c0_66] : memref<2x1x64xf32, #tpu.memory_space<vmem>>, vector<1x1x64xf32>
    %165 = vector.shape_cast %164 : vector<1x1x64xf32> to vector<1x64xf32>
    %166 = vector.broadcast %165 : vector<1x64xf32> to vector<16x64xf32>
    %167 = arith.addf %163, %166 : vector<16x64xf32>
    %168 = arith.mulf %167, %167 : vector<16x64xf32>
    %169 = arith.mulf %167, %168 : vector<16x64xf32>
    %cst_67 = arith.constant 4.471500e-02 : f32
    %170 = vector.broadcast %cst_67 : f32 to vector<16x64xf32>
    %171 = arith.mulf %170, %169 : vector<16x64xf32>
    %172 = arith.addf %167, %171 : vector<16x64xf32>
    %cst_68 = arith.constant 0.797884583 : f32
    %173 = vector.broadcast %cst_68 : f32 to vector<16x64xf32>
    %174 = arith.mulf %173, %172 : vector<16x64xf32>
    %175 = math.tanh %174 : vector<16x64xf32>
    %cst_69 = arith.constant 1.000000e+00 : f32
    %176 = vector.broadcast %cst_69 : f32 to vector<16x64xf32>
    %177 = arith.addf %176, %175 : vector<16x64xf32>
    %cst_70 = arith.constant 5.000000e-01 : f32
    %178 = vector.broadcast %cst_70 : f32 to vector<16x64xf32>
    %179 = arith.mulf %178, %177 : vector<16x64xf32>
    %180 = arith.mulf %167, %179 : vector<16x64xf32>
    %cst_71 = arith.constant dense<0.000000e+00> : vector<16x32xf32>
    %181 = tpu.matmul %180, %162, %cst_71 {dimension_numbers = #tpu.dot_dimension_numbers<[1], [0], [0], [1], [0, 0, 1, 1], [], []>} : vector<16x64xf32>, vector<64x32xf32>, vector<16x32xf32> -> vector<16x32xf32>
    %c0_72 = arith.constant 0 : index
    %c0_73 = arith.constant 0 : index
    %c0_74 = arith.constant 0 : index
    %182 = vector.load %arg12[%c0_72, %c0_73, %c0_74] : memref<2x1x32xf32, #tpu.memory_space<vmem>>, vector<1x1x32xf32>
    %183 = vector.shape_cast %182 : vector<1x1x32xf32> to vector<1x32xf32>
    %184 = vector.broadcast %183 : vector<1x32xf32> to vector<16x32xf32>
    %185 = arith.addf %181, %184 : vector<16x32xf32>
    %186 = arith.addf %185, %158 : vector<16x32xf32>
    %187 = vector.extract_strided_slice %41 {offsets = [2, 0], sizes = [1, 32], strides = [1, 1]} : vector<4x32xf32> to vector<1x32xf32>
    %188 = vector.extract_strided_slice %41 {offsets = [3, 0], sizes = [1, 32], strides = [1, 1]} : vector<4x32xf32> to vector<1x32xf32>
    %cst_75 = arith.constant dense<0.000000e+00> : vector<16xf32>
    %189 = vector.multi_reduction <add>, %186, %cst_75 [1] : vector<16x32xf32> to vector<16xf32>
    %190 = vector.shape_cast %189 : vector<16xf32> to vector<16x1xf32>
    %cst_76 = arith.constant 3.200000e+01 : f32
    %191 = vector.broadcast %cst_76 : f32 to vector<16x1xf32>
    %192 = arith.divf %190, %191 : vector<16x1xf32>
    %193 = arith.mulf %186, %186 : vector<16x32xf32>
    %cst_77 = arith.constant dense<0.000000e+00> : vector<16xf32>
    %194 = vector.multi_reduction <add>, %193, %cst_77 [1] : vector<16x32xf32> to vector<16xf32>
    %195 = vector.shape_cast %194 : vector<16xf32> to vector<16x1xf32>
    %cst_78 = arith.constant 3.200000e+01 : f32
    %196 = vector.broadcast %cst_78 : f32 to vector<16x1xf32>
    %197 = arith.divf %195, %196 : vector<16x1xf32>
    %198 = arith.mulf %192, %192 : vector<16x1xf32>
    %199 = arith.subf %197, %198 : vector<16x1xf32>
    %cst_79 = arith.constant 0.000000e+00 : f32
    %200 = vector.broadcast %cst_79 : f32 to vector<16x1xf32>
    %201 = arith.maximumf %199, %200 : vector<16x1xf32>
    %202 = vector.broadcast %192 : vector<16x1xf32> to vector<16x32xf32>
    %203 = arith.subf %186, %202 : vector<16x32xf32>
    %cst_80 = arith.constant 9.99999996E-13 : f32
    %204 = vector.broadcast %cst_80 : f32 to vector<16x1xf32>
    %205 = arith.addf %201, %204 : vector<16x1xf32>
    %206 = math.rsqrt %205 : vector<16x1xf32>
    %207 = vector.broadcast %206 : vector<16x1xf32> to vector<16x32xf32>
    %208 = arith.mulf %203, %207 : vector<16x32xf32>
    %209 = vector.broadcast %187 : vector<1x32xf32> to vector<16x32xf32>
    %210 = arith.mulf %208, %209 : vector<16x32xf32>
    %211 = vector.broadcast %188 : vector<1x32xf32> to vector<16x32xf32>
    %212 = arith.addf %210, %211 : vector<16x32xf32>
    %c1 = arith.constant 1 : index
    %c0_81 = arith.constant 0 : index
    %c0_82 = arith.constant 0 : index
    %213 = vector.load %arg4[%c1, %c0_81, %c0_82] : memref<2x32x96xf32, #tpu.memory_space<vmem>>, vector<1x32x96xf32>
    %214 = vector.shape_cast %213 : vector<1x32x96xf32> to vector<32x96xf32>
    %c1_83 = arith.constant 1 : index
    %c0_84 = arith.constant 0 : index
    %c0_85 = arith.constant 0 : index
    %215 = vector.load %arg6[%c1_83, %c0_84, %c0_85] : memref<2x32x32xf32, #tpu.memory_space<vmem>>, vector<1x32x32xf32>
    %216 = vector.shape_cast %215 : vector<1x32x32xf32> to vector<32x32xf32>
    %c1_86 = arith.constant 1 : index
    %c0_87 = arith.constant 0 : index
    %c0_88 = arith.constant 0 : index
    %217 = vector.load %arg8[%c1_86, %c0_87, %c0_88] : memref<2x4x32xf32, #tpu.memory_space<vmem>>, vector<1x4x32xf32>
    %218 = vector.shape_cast %217 : vector<1x4x32xf32> to vector<4x32xf32>
    %cst_89 = arith.constant dense<0.000000e+00> : vector<16x96xf32>
    %219 = tpu.matmul %212, %214, %cst_89 {dimension_numbers = #tpu.dot_dimension_numbers<[1], [0], [0], [1], [0, 0, 1, 1], [], []>} : vector<16x32xf32>, vector<32x96xf32>, vector<16x96xf32> -> vector<16x96xf32>
    %c1_90 = arith.constant 1 : index
    %c0_91 = arith.constant 0 : index
    %c0_92 = arith.constant 0 : index
    %220 = vector.load %arg5[%c1_90, %c0_91, %c0_92] : memref<2x1x96xf32, #tpu.memory_space<vmem>>, vector<1x1x96xf32>
    %221 = vector.shape_cast %220 : vector<1x1x96xf32> to vector<1x96xf32>
    %222 = vector.broadcast %221 : vector<1x96xf32> to vector<16x96xf32>
    %223 = arith.addf %219, %222 : vector<16x96xf32>
    %224 = vector.extract_strided_slice %223 {offsets = [0, 0], sizes = [16, 32], strides = [1, 1]} : vector<16x96xf32> to vector<16x32xf32>
    %225 = vector.shape_cast %224 : vector<16x32xf32> to vector<2x8x32xf32>
    %226 = vector.extract_strided_slice %223 {offsets = [0, 32], sizes = [16, 32], strides = [1, 1]} : vector<16x96xf32> to vector<16x32xf32>
    %227 = vector.shape_cast %226 : vector<16x32xf32> to vector<2x8x32xf32>
    %228 = vector.extract_strided_slice %223 {offsets = [0, 64], sizes = [16, 32], strides = [1, 1]} : vector<16x96xf32> to vector<16x32xf32>
    %229 = vector.shape_cast %228 : vector<16x32xf32> to vector<2x8x32xf32>
    %230 = vector.extract_strided_slice %225 {offsets = [0, 0, 0], sizes = [2, 8, 8], strides = [1, 1, 1]} : vector<2x8x32xf32> to vector<2x8x8xf32>
    %231 = vector.extract_strided_slice %227 {offsets = [0, 0, 0], sizes = [2, 8, 8], strides = [1, 1, 1]} : vector<2x8x32xf32> to vector<2x8x8xf32>
    "tpu.trace_start"() <{level = 10 : i32, message = "nqd,nkd->nqk"}> : () -> ()
    %cst_93 = arith.constant dense<0.000000e+00> : vector<2x8x8xf32>
    %232 = tpu.matmul %230, %231, %cst_93 {dimension_numbers = #tpu.dot_dimension_numbers<[2], [2], [1], [1], [0, 0, 0, 1, 1, 1], [0], [0]>} : vector<2x8x8xf32>, vector<2x8x8xf32>, vector<2x8x8xf32> -> vector<2x8x8xf32>
    "tpu.trace_stop"() : () -> ()
    %cst_94 = arith.constant 0.353553385 : f32
    %233 = vector.broadcast %cst_94 : f32 to vector<2x8x8xf32>
    %234 = arith.mulf %232, %233 : vector<2x8x8xf32>
    %235 = arith.addf %234, %35 : vector<2x8x8xf32>
    %cst_95 = arith.constant dense<0xFF800000> : vector<2x8xf32>
    %236 = vector.multi_reduction <maximumf>, %235, %cst_95 [2] : vector<2x8x8xf32> to vector<2x8xf32>
    %237 = vector.shape_cast %236 : vector<2x8xf32> to vector<2x8x1xf32>
    %238 = vector.broadcast %237 : vector<2x8x1xf32> to vector<2x8x8xf32>
    %239 = arith.subf %235, %238 : vector<2x8x8xf32>
    %240 = math.exp %239 : vector<2x8x8xf32>
    %cst_96 = arith.constant dense<0.000000e+00> : vector<2x8xf32>
    %241 = vector.multi_reduction <add>, %240, %cst_96 [2] : vector<2x8x8xf32> to vector<2x8xf32>
    %242 = vector.shape_cast %241 : vector<2x8xf32> to vector<2x8x1xf32>
    %243 = tpu.reciprocal %242 {approx = true} : vector<2x8x1xf32> -> vector<2x8x1xf32>
    %244 = vector.broadcast %243 : vector<2x8x1xf32> to vector<2x8x8xf32>
    %245 = arith.mulf %240, %244 : vector<2x8x8xf32>
    %246 = vector.extract_strided_slice %229 {offsets = [0, 0, 0], sizes = [2, 8, 8], strides = [1, 1, 1]} : vector<2x8x32xf32> to vector<2x8x8xf32>
    "tpu.trace_start"() <{level = 10 : i32, message = "nqk,nkd->nqd"}> : () -> ()
    %cst_97 = arith.constant dense<0.000000e+00> : vector<2x8x8xf32>
    %247 = tpu.matmul %245, %246, %cst_97 {dimension_numbers = #tpu.dot_dimension_numbers<[2], [1], [1], [2], [0, 0, 0, 1, 1, 2], [0], [0]>} : vector<2x8x8xf32>, vector<2x8x8xf32>, vector<2x8x8xf32> -> vector<2x8x8xf32>
    "tpu.trace_stop"() : () -> ()
    %248 = vector.extract_strided_slice %225 {offsets = [0, 0, 8], sizes = [2, 8, 8], strides = [1, 1, 1]} : vector<2x8x32xf32> to vector<2x8x8xf32>
    %249 = vector.extract_strided_slice %227 {offsets = [0, 0, 8], sizes = [2, 8, 8], strides = [1, 1, 1]} : vector<2x8x32xf32> to vector<2x8x8xf32>
    "tpu.trace_start"() <{level = 10 : i32, message = "nqd,nkd->nqk"}> : () -> ()
    %cst_98 = arith.constant dense<0.000000e+00> : vector<2x8x8xf32>
    %250 = tpu.matmul %248, %249, %cst_98 {dimension_numbers = #tpu.dot_dimension_numbers<[2], [2], [1], [1], [0, 0, 0, 1, 1, 1], [0], [0]>} : vector<2x8x8xf32>, vector<2x8x8xf32>, vector<2x8x8xf32> -> vector<2x8x8xf32>
    "tpu.trace_stop"() : () -> ()
    %cst_99 = arith.constant 0.353553385 : f32
    %251 = vector.broadcast %cst_99 : f32 to vector<2x8x8xf32>
    %252 = arith.mulf %250, %251 : vector<2x8x8xf32>
    %253 = arith.addf %252, %35 : vector<2x8x8xf32>
    %cst_100 = arith.constant dense<0xFF800000> : vector<2x8xf32>
    %254 = vector.multi_reduction <maximumf>, %253, %cst_100 [2] : vector<2x8x8xf32> to vector<2x8xf32>
    %255 = vector.shape_cast %254 : vector<2x8xf32> to vector<2x8x1xf32>
    %256 = vector.broadcast %255 : vector<2x8x1xf32> to vector<2x8x8xf32>
    %257 = arith.subf %253, %256 : vector<2x8x8xf32>
    %258 = math.exp %257 : vector<2x8x8xf32>
    %cst_101 = arith.constant dense<0.000000e+00> : vector<2x8xf32>
    %259 = vector.multi_reduction <add>, %258, %cst_101 [2] : vector<2x8x8xf32> to vector<2x8xf32>
    %260 = vector.shape_cast %259 : vector<2x8xf32> to vector<2x8x1xf32>
    %261 = tpu.reciprocal %260 {approx = true} : vector<2x8x1xf32> -> vector<2x8x1xf32>
    %262 = vector.broadcast %261 : vector<2x8x1xf32> to vector<2x8x8xf32>
    %263 = arith.mulf %258, %262 : vector<2x8x8xf32>
    %264 = vector.extract_strided_slice %229 {offsets = [0, 0, 8], sizes = [2, 8, 8], strides = [1, 1, 1]} : vector<2x8x32xf32> to vector<2x8x8xf32>
    "tpu.trace_start"() <{level = 10 : i32, message = "nqk,nkd->nqd"}> : () -> ()
    %cst_102 = arith.constant dense<0.000000e+00> : vector<2x8x8xf32>
    %265 = tpu.matmul %263, %264, %cst_102 {dimension_numbers = #tpu.dot_dimension_numbers<[2], [1], [1], [2], [0, 0, 0, 1, 1, 2], [0], [0]>} : vector<2x8x8xf32>, vector<2x8x8xf32>, vector<2x8x8xf32> -> vector<2x8x8xf32>
    "tpu.trace_stop"() : () -> ()
    %266 = vector.extract_strided_slice %225 {offsets = [0, 0, 16], sizes = [2, 8, 8], strides = [1, 1, 1]} : vector<2x8x32xf32> to vector<2x8x8xf32>
    %267 = vector.extract_strided_slice %227 {offsets = [0, 0, 16], sizes = [2, 8, 8], strides = [1, 1, 1]} : vector<2x8x32xf32> to vector<2x8x8xf32>
    "tpu.trace_start"() <{level = 10 : i32, message = "nqd,nkd->nqk"}> : () -> ()
    %cst_103 = arith.constant dense<0.000000e+00> : vector<2x8x8xf32>
    %268 = tpu.matmul %266, %267, %cst_103 {dimension_numbers = #tpu.dot_dimension_numbers<[2], [2], [1], [1], [0, 0, 0, 1, 1, 1], [0], [0]>} : vector<2x8x8xf32>, vector<2x8x8xf32>, vector<2x8x8xf32> -> vector<2x8x8xf32>
    "tpu.trace_stop"() : () -> ()
    %cst_104 = arith.constant 0.353553385 : f32
    %269 = vector.broadcast %cst_104 : f32 to vector<2x8x8xf32>
    %270 = arith.mulf %268, %269 : vector<2x8x8xf32>
    %271 = arith.addf %270, %35 : vector<2x8x8xf32>
    %cst_105 = arith.constant dense<0xFF800000> : vector<2x8xf32>
    %272 = vector.multi_reduction <maximumf>, %271, %cst_105 [2] : vector<2x8x8xf32> to vector<2x8xf32>
    %273 = vector.shape_cast %272 : vector<2x8xf32> to vector<2x8x1xf32>
    %274 = vector.broadcast %273 : vector<2x8x1xf32> to vector<2x8x8xf32>
    %275 = arith.subf %271, %274 : vector<2x8x8xf32>
    %276 = math.exp %275 : vector<2x8x8xf32>
    %cst_106 = arith.constant dense<0.000000e+00> : vector<2x8xf32>
    %277 = vector.multi_reduction <add>, %276, %cst_106 [2] : vector<2x8x8xf32> to vector<2x8xf32>
    %278 = vector.shape_cast %277 : vector<2x8xf32> to vector<2x8x1xf32>
    %279 = tpu.reciprocal %278 {approx = true} : vector<2x8x1xf32> -> vector<2x8x1xf32>
    %280 = vector.broadcast %279 : vector<2x8x1xf32> to vector<2x8x8xf32>
    %281 = arith.mulf %276, %280 : vector<2x8x8xf32>
    %282 = vector.extract_strided_slice %229 {offsets = [0, 0, 16], sizes = [2, 8, 8], strides = [1, 1, 1]} : vector<2x8x32xf32> to vector<2x8x8xf32>
    "tpu.trace_start"() <{level = 10 : i32, message = "nqk,nkd->nqd"}> : () -> ()
    %cst_107 = arith.constant dense<0.000000e+00> : vector<2x8x8xf32>
    %283 = tpu.matmul %281, %282, %cst_107 {dimension_numbers = #tpu.dot_dimension_numbers<[2], [1], [1], [2], [0, 0, 0, 1, 1, 2], [0], [0]>} : vector<2x8x8xf32>, vector<2x8x8xf32>, vector<2x8x8xf32> -> vector<2x8x8xf32>
    "tpu.trace_stop"() : () -> ()
    %284 = vector.extract_strided_slice %225 {offsets = [0, 0, 24], sizes = [2, 8, 8], strides = [1, 1, 1]} : vector<2x8x32xf32> to vector<2x8x8xf32>
    %285 = vector.extract_strided_slice %227 {offsets = [0, 0, 24], sizes = [2, 8, 8], strides = [1, 1, 1]} : vector<2x8x32xf32> to vector<2x8x8xf32>
    "tpu.trace_start"() <{level = 10 : i32, message = "nqd,nkd->nqk"}> : () -> ()
    %cst_108 = arith.constant dense<0.000000e+00> : vector<2x8x8xf32>
    %286 = tpu.matmul %284, %285, %cst_108 {dimension_numbers = #tpu.dot_dimension_numbers<[2], [2], [1], [1], [0, 0, 0, 1, 1, 1], [0], [0]>} : vector<2x8x8xf32>, vector<2x8x8xf32>, vector<2x8x8xf32> -> vector<2x8x8xf32>
    "tpu.trace_stop"() : () -> ()
    %cst_109 = arith.constant 0.353553385 : f32
    %287 = vector.broadcast %cst_109 : f32 to vector<2x8x8xf32>
    %288 = arith.mulf %286, %287 : vector<2x8x8xf32>
    %289 = arith.addf %288, %35 : vector<2x8x8xf32>
    %cst_110 = arith.constant dense<0xFF800000> : vector<2x8xf32>
    %290 = vector.multi_reduction <maximumf>, %289, %cst_110 [2] : vector<2x8x8xf32> to vector<2x8xf32>
    %291 = vector.shape_cast %290 : vector<2x8xf32> to vector<2x8x1xf32>
    %292 = vector.broadcast %291 : vector<2x8x1xf32> to vector<2x8x8xf32>
    %293 = arith.subf %289, %292 : vector<2x8x8xf32>
    %294 = math.exp %293 : vector<2x8x8xf32>
    %cst_111 = arith.constant dense<0.000000e+00> : vector<2x8xf32>
    %295 = vector.multi_reduction <add>, %294, %cst_111 [2] : vector<2x8x8xf32> to vector<2x8xf32>
    %296 = vector.shape_cast %295 : vector<2x8xf32> to vector<2x8x1xf32>
    %297 = tpu.reciprocal %296 {approx = true} : vector<2x8x1xf32> -> vector<2x8x1xf32>
    %298 = vector.broadcast %297 : vector<2x8x1xf32> to vector<2x8x8xf32>
    %299 = arith.mulf %294, %298 : vector<2x8x8xf32>
    %300 = vector.extract_strided_slice %229 {offsets = [0, 0, 24], sizes = [2, 8, 8], strides = [1, 1, 1]} : vector<2x8x32xf32> to vector<2x8x8xf32>
    "tpu.trace_start"() <{level = 10 : i32, message = "nqk,nkd->nqd"}> : () -> ()
    %cst_112 = arith.constant dense<0.000000e+00> : vector<2x8x8xf32>
    %301 = tpu.matmul %299, %300, %cst_112 {dimension_numbers = #tpu.dot_dimension_numbers<[2], [1], [1], [2], [0, 0, 0, 1, 1, 2], [0], [0]>} : vector<2x8x8xf32>, vector<2x8x8xf32>, vector<2x8x8xf32> -> vector<2x8x8xf32>
    "tpu.trace_stop"() : () -> ()
    %302 = tpu.concatenate %247, %265, %283, %301 in 2 : vector<2x8x8xf32>, vector<2x8x8xf32>, vector<2x8x8xf32>, vector<2x8x8xf32> -> vector<2x8x32xf32>
    %303 = vector.shape_cast %302 : vector<2x8x32xf32> to vector<16x32xf32>
    %cst_113 = arith.constant dense<0.000000e+00> : vector<16x32xf32>
    %304 = tpu.matmul %303, %216, %cst_113 {dimension_numbers = #tpu.dot_dimension_numbers<[1], [0], [0], [1], [0, 0, 1, 1], [], []>} : vector<16x32xf32>, vector<32x32xf32>, vector<16x32xf32> -> vector<16x32xf32>
    %c1_114 = arith.constant 1 : index
    %c0_115 = arith.constant 0 : index
    %c0_116 = arith.constant 0 : index
    %305 = vector.load %arg7[%c1_114, %c0_115, %c0_116] : memref<2x1x32xf32, #tpu.memory_space<vmem>>, vector<1x1x32xf32>
    %306 = vector.shape_cast %305 : vector<1x1x32xf32> to vector<1x32xf32>
    %307 = vector.broadcast %306 : vector<1x32xf32> to vector<16x32xf32>
    %308 = arith.addf %304, %307 : vector<16x32xf32>
    %309 = arith.addf %308, %212 : vector<16x32xf32>
    %310 = vector.extract_strided_slice %218 {offsets = [0, 0], sizes = [1, 32], strides = [1, 1]} : vector<4x32xf32> to vector<1x32xf32>
    %311 = vector.extract_strided_slice %218 {offsets = [1, 0], sizes = [1, 32], strides = [1, 1]} : vector<4x32xf32> to vector<1x32xf32>
    %cst_117 = arith.constant dense<0.000000e+00> : vector<16xf32>
    %312 = vector.multi_reduction <add>, %309, %cst_117 [1] : vector<16x32xf32> to vector<16xf32>
    %313 = vector.shape_cast %312 : vector<16xf32> to vector<16x1xf32>
    %cst_118 = arith.constant 3.200000e+01 : f32
    %314 = vector.broadcast %cst_118 : f32 to vector<16x1xf32>
    %315 = arith.divf %313, %314 : vector<16x1xf32>
    %316 = arith.mulf %309, %309 : vector<16x32xf32>
    %cst_119 = arith.constant dense<0.000000e+00> : vector<16xf32>
    %317 = vector.multi_reduction <add>, %316, %cst_119 [1] : vector<16x32xf32> to vector<16xf32>
    %318 = vector.shape_cast %317 : vector<16xf32> to vector<16x1xf32>
    %cst_120 = arith.constant 3.200000e+01 : f32
    %319 = vector.broadcast %cst_120 : f32 to vector<16x1xf32>
    %320 = arith.divf %318, %319 : vector<16x1xf32>
    %321 = arith.mulf %315, %315 : vector<16x1xf32>
    %322 = arith.subf %320, %321 : vector<16x1xf32>
    %cst_121 = arith.constant 0.000000e+00 : f32
    %323 = vector.broadcast %cst_121 : f32 to vector<16x1xf32>
    %324 = arith.maximumf %322, %323 : vector<16x1xf32>
    %325 = vector.broadcast %315 : vector<16x1xf32> to vector<16x32xf32>
    %326 = arith.subf %309, %325 : vector<16x32xf32>
    %cst_122 = arith.constant 9.99999996E-13 : f32
    %327 = vector.broadcast %cst_122 : f32 to vector<16x1xf32>
    %328 = arith.addf %324, %327 : vector<16x1xf32>
    %329 = math.rsqrt %328 : vector<16x1xf32>
    %330 = vector.broadcast %329 : vector<16x1xf32> to vector<16x32xf32>
    %331 = arith.mulf %326, %330 : vector<16x32xf32>
    %332 = vector.broadcast %310 : vector<1x32xf32> to vector<16x32xf32>
    %333 = arith.mulf %331, %332 : vector<16x32xf32>
    %334 = vector.broadcast %311 : vector<1x32xf32> to vector<16x32xf32>
    %335 = arith.addf %333, %334 : vector<16x32xf32>
    %c1_123 = arith.constant 1 : index
    %c0_124 = arith.constant 0 : index
    %c0_125 = arith.constant 0 : index
    %336 = vector.load %arg9[%c1_123, %c0_124, %c0_125] : memref<2x32x64xf32, #tpu.memory_space<vmem>>, vector<1x32x64xf32>
    %337 = vector.shape_cast %336 : vector<1x32x64xf32> to vector<32x64xf32>
    %c1_126 = arith.constant 1 : index
    %c0_127 = arith.constant 0 : index
    %c0_128 = arith.constant 0 : index
    %338 = vector.load %arg11[%c1_126, %c0_127, %c0_128] : memref<2x64x32xf32, #tpu.memory_space<vmem>>, vector<1x64x32xf32>
    %339 = vector.shape_cast %338 : vector<1x64x32xf32> to vector<64x32xf32>
    %cst_129 = arith.constant dense<0.000000e+00> : vector<16x64xf32>
    %340 = tpu.matmul %335, %337, %cst_129 {dimension_numbers = #tpu.dot_dimension_numbers<[1], [0], [0], [1], [0, 0, 1, 1], [], []>} : vector<16x32xf32>, vector<32x64xf32>, vector<16x64xf32> -> vector<16x64xf32>
    %c1_130 = arith.constant 1 : index
    %c0_131 = arith.constant 0 : index
    %c0_132 = arith.constant 0 : index
    %341 = vector.load %arg10[%c1_130, %c0_131, %c0_132] : memref<2x1x64xf32, #tpu.memory_space<vmem>>, vector<1x1x64xf32>
    %342 = vector.shape_cast %341 : vector<1x1x64xf32> to vector<1x64xf32>
    %343 = vector.broadcast %342 : vector<1x64xf32> to vector<16x64xf32>
    %344 = arith.addf %340, %343 : vector<16x64xf32>
    %345 = arith.mulf %344, %344 : vector<16x64xf32>
    %346 = arith.mulf %344, %345 : vector<16x64xf32>
    %cst_133 = arith.constant 4.471500e-02 : f32
    %347 = vector.broadcast %cst_133 : f32 to vector<16x64xf32>
    %348 = arith.mulf %347, %346 : vector<16x64xf32>
    %349 = arith.addf %344, %348 : vector<16x64xf32>
    %cst_134 = arith.constant 0.797884583 : f32
    %350 = vector.broadcast %cst_134 : f32 to vector<16x64xf32>
    %351 = arith.mulf %350, %349 : vector<16x64xf32>
    %352 = math.tanh %351 : vector<16x64xf32>
    %cst_135 = arith.constant 1.000000e+00 : f32
    %353 = vector.broadcast %cst_135 : f32 to vector<16x64xf32>
    %354 = arith.addf %353, %352 : vector<16x64xf32>
    %cst_136 = arith.constant 5.000000e-01 : f32
    %355 = vector.broadcast %cst_136 : f32 to vector<16x64xf32>
    %356 = arith.mulf %355, %354 : vector<16x64xf32>
    %357 = arith.mulf %344, %356 : vector<16x64xf32>
    %cst_137 = arith.constant dense<0.000000e+00> : vector<16x32xf32>
    %358 = tpu.matmul %357, %339, %cst_137 {dimension_numbers = #tpu.dot_dimension_numbers<[1], [0], [0], [1], [0, 0, 1, 1], [], []>} : vector<16x64xf32>, vector<64x32xf32>, vector<16x32xf32> -> vector<16x32xf32>
    %c1_138 = arith.constant 1 : index
    %c0_139 = arith.constant 0 : index
    %c0_140 = arith.constant 0 : index
    %359 = vector.load %arg12[%c1_138, %c0_139, %c0_140] : memref<2x1x32xf32, #tpu.memory_space<vmem>>, vector<1x1x32xf32>
    %360 = vector.shape_cast %359 : vector<1x1x32xf32> to vector<1x32xf32>
    %361 = vector.broadcast %360 : vector<1x32xf32> to vector<16x32xf32>
    %362 = arith.addf %358, %361 : vector<16x32xf32>
    %363 = arith.addf %362, %335 : vector<16x32xf32>
    %364 = vector.extract_strided_slice %218 {offsets = [2, 0], sizes = [1, 32], strides = [1, 1]} : vector<4x32xf32> to vector<1x32xf32>
    %365 = vector.extract_strided_slice %218 {offsets = [3, 0], sizes = [1, 32], strides = [1, 1]} : vector<4x32xf32> to vector<1x32xf32>
    %cst_141 = arith.constant dense<0.000000e+00> : vector<16xf32>
    %366 = vector.multi_reduction <add>, %363, %cst_141 [1] : vector<16x32xf32> to vector<16xf32>
    %367 = vector.shape_cast %366 : vector<16xf32> to vector<16x1xf32>
    %cst_142 = arith.constant 3.200000e+01 : f32
    %368 = vector.broadcast %cst_142 : f32 to vector<16x1xf32>
    %369 = arith.divf %367, %368 : vector<16x1xf32>
    %370 = arith.mulf %363, %363 : vector<16x32xf32>
    %cst_143 = arith.constant dense<0.000000e+00> : vector<16xf32>
    %371 = vector.multi_reduction <add>, %370, %cst_143 [1] : vector<16x32xf32> to vector<16xf32>
    %372 = vector.shape_cast %371 : vector<16xf32> to vector<16x1xf32>
    %cst_144 = arith.constant 3.200000e+01 : f32
    %373 = vector.broadcast %cst_144 : f32 to vector<16x1xf32>
    %374 = arith.divf %372, %373 : vector<16x1xf32>
    %375 = arith.mulf %369, %369 : vector<16x1xf32>
    %376 = arith.subf %374, %375 : vector<16x1xf32>
    %cst_145 = arith.constant 0.000000e+00 : f32
    %377 = vector.broadcast %cst_145 : f32 to vector<16x1xf32>
    %378 = arith.maximumf %376, %377 : vector<16x1xf32>
    %379 = vector.broadcast %369 : vector<16x1xf32> to vector<16x32xf32>
    %380 = arith.subf %363, %379 : vector<16x32xf32>
    %cst_146 = arith.constant 9.99999996E-13 : f32
    %381 = vector.broadcast %cst_146 : f32 to vector<16x1xf32>
    %382 = arith.addf %378, %381 : vector<16x1xf32>
    %383 = math.rsqrt %382 : vector<16x1xf32>
    %384 = vector.broadcast %383 : vector<16x1xf32> to vector<16x32xf32>
    %385 = arith.mulf %380, %384 : vector<16x32xf32>
    %386 = vector.broadcast %364 : vector<1x32xf32> to vector<16x32xf32>
    %387 = arith.mulf %385, %386 : vector<16x32xf32>
    %388 = vector.broadcast %365 : vector<1x32xf32> to vector<16x32xf32>
    %389 = arith.addf %387, %388 : vector<16x32xf32>
    %390 = vector.shape_cast %389 : vector<16x32xf32> to vector<2x8x32xf32>
    %391 = vector.extract_strided_slice %390 {offsets = [0, 0, 0], sizes = [2, 1, 32], strides = [1, 1, 1]} : vector<2x8x32xf32> to vector<2x1x32xf32>
    %392 = vector.shape_cast %391 : vector<2x1x32xf32> to vector<2x32xf32>
    %393 = vector.extract_strided_slice %392 {offsets = [0, 0], sizes = [1, 32], strides = [1, 1]} : vector<2x32xf32> to vector<1x32xf32>
    %394 = vector.extract_strided_slice %392 {offsets = [1, 0], sizes = [1, 32], strides = [1, 1]} : vector<2x32xf32> to vector<1x32xf32>
    %395 = arith.subf %393, %394 : vector<1x32xf32>
    %396 = math.absf %395 : vector<1x32xf32>
    %397 = tpu.concatenate %393, %394, %396 in 1 : vector<1x32xf32>, vector<1x32xf32>, vector<1x32xf32> -> vector<1x96xf32>
    %c0_147 = arith.constant 0 : index
    %c0_148 = arith.constant 0 : index
    %398 = vector.load %arg13[%c0_147, %c0_148] : memref<96x512xf32, #tpu.memory_space<vmem>>, vector<96x512xf32>
    %c0_149 = arith.constant 0 : index
    %c0_150 = arith.constant 0 : index
    %399 = vector.load %arg15[%c0_149, %c0_150] : memref<512x128xf32, #tpu.memory_space<vmem>>, vector<512x128xf32>
    %cst_151 = arith.constant dense<0.000000e+00> : vector<1x512xf32>
    %400 = tpu.matmul %397, %398, %cst_151 {dimension_numbers = #tpu.dot_dimension_numbers<[1], [0], [0], [1], [0, 0, 1, 1], [], []>} : vector<1x96xf32>, vector<96x512xf32>, vector<1x512xf32> -> vector<1x512xf32>
    %c0_152 = arith.constant 0 : index
    %c0_153 = arith.constant 0 : index
    %401 = vector.load %arg14[%c0_152, %c0_153] : memref<1x512xf32, #tpu.memory_space<vmem>>, vector<1x512xf32>
    %402 = arith.addf %400, %401 : vector<1x512xf32>
    %cst_154 = arith.constant 0.000000e+00 : f32
    %403 = vector.broadcast %cst_154 : f32 to vector<1x512xf32>
    %404 = arith.maximumf %402, %403 : vector<1x512xf32>
    %cst_155 = arith.constant dense<0.000000e+00> : vector<1x128xf32>
    %405 = tpu.matmul %404, %399, %cst_155 {dimension_numbers = #tpu.dot_dimension_numbers<[1], [0], [0], [1], [0, 0, 1, 1], [], []>} : vector<1x512xf32>, vector<512x128xf32>, vector<1x128xf32> -> vector<1x128xf32>
    %c0_156 = arith.constant 0 : index
    %c0_157 = arith.constant 0 : index
    %406 = vector.load %arg16[%c0_156, %c0_157] : memref<1x128xf32, #tpu.memory_space<vmem>>, vector<1x128xf32>
    %407 = arith.addf %405, %406 : vector<1x128xf32>
    %cst_158 = arith.constant dense<0xFF800000> : vector<1xf32>
    %408 = vector.multi_reduction <maximumf>, %407, %cst_158 [1] : vector<1x128xf32> to vector<1xf32>
    %409 = vector.shape_cast %408 : vector<1xf32> to vector<1x1xf32>
    %410 = vector.broadcast %409 : vector<1x1xf32> to vector<1x128xf32>
    %411 = arith.subf %407, %410 : vector<1x128xf32>
    %412 = math.exp %411 : vector<1x128xf32>
    %cst_159 = arith.constant dense<0.000000e+00> : vector<1xf32>
    %413 = vector.multi_reduction <add>, %412, %cst_159 [1] : vector<1x128xf32> to vector<1xf32>
    %414 = vector.shape_cast %413 : vector<1xf32> to vector<1x1xf32>
    %415 = vector.broadcast %414 : vector<1x1xf32> to vector<1x128xf32>
    %416 = arith.divf %412, %415 : vector<1x128xf32>
    %417 = vector.shape_cast %416 : vector<1x128xf32> to vector<1x1x128xf32>
    %418 = vector.shape_cast %417 : vector<1x1x128xf32> to vector<1x1x128xf32>
    %419 = vector.broadcast %418 : vector<1x1x128xf32> to vector<1x8x128xf32>
    %c0_160 = arith.constant 0 : index
    %c0_161 = arith.constant 0 : index
    %c0_162 = arith.constant 0 : index
    %420 = vector.load %arg17[%c0_160, %c0_161, %c0_162] : memref<1x8x128xf32, #tpu.memory_space<vmem>>, vector<1x8x128xf32>
    tpu.vector_store %arg17[%c0_160, %c0_161, %c0_162], %419 {strides = array<i32>} : memref<1x8x128xf32, #tpu.memory_space<vmem>>, vector<1x8x128xf32>,
    return
  }
  func.func @transform_0(%arg0: i32) -> (i32, i32, i32, i32) {
    %c0_i32 = arith.constant 0 : i32
    %c0_i32_0 = arith.constant 0 : i32
    %c0_i32_1 = arith.constant 0 : i32
    %c0_i32_2 = arith.constant 0 : i32
    return %arg0, %c0_i32, %c0_i32_0, %c0_i32_1 : i32, i32, i32, i32
  }
  func.func @transform_1(%arg0: i32) -> (i32, i32, i32, i32) {
    %c0_i32 = arith.constant 0 : i32
    %c0_i32_0 = arith.constant 0 : i32
    %c0_i32_1 = arith.constant 0 : i32
    %c0_i32_2 = arith.constant 0 : i32
    return %arg0, %c0_i32, %c0_i32_0, %c0_i32_1 : i32, i32, i32, i32
  }
  func.func @transform_2(%arg0: i32) -> (i32, i32) {
    %c0_i32 = arith.constant 0 : i32
    %c0_i32_0 = arith.constant 0 : i32
    %c0_i32_1 = arith.constant 0 : i32
    return %c0_i32, %c0_i32_0 : i32, i32
  }
  func.func @transform_3(%arg0: i32) -> (i32, i32, i32) {
    %c0_i32 = arith.constant 0 : i32
    %c0_i32_0 = arith.constant 0 : i32
    %c0_i32_1 = arith.constant 0 : i32
    %c0_i32_2 = arith.constant 0 : i32
    return %c0_i32, %c0_i32_0, %c0_i32_1 : i32, i32, i32
  }
  func.func @transform_4(%arg0: i32) -> (i32, i32, i32) {
    %c0_i32 = arith.constant 0 : i32
    %c0_i32_0 = arith.constant 0 : i32
    %c0_i32_1 = arith.constant 0 : i32
    %c0_i32_2 = arith.constant 0 : i32
    return %c0_i32, %c0_i32_0, %c0_i32_1 : i32, i32, i32
  }
  func.func @transform_5(%arg0: i32) -> (i32, i32, i32) {
    %c0_i32 = arith.constant 0 : i32
    %c0_i32_0 = arith.constant 0 : i32
    %c0_i32_1 = arith.constant 0 : i32
    %c0_i32_2 = arith.constant 0 : i32
    return %c0_i32, %c0_i32_0, %c0_i32_1 : i32, i32, i32
  }
  func.func @transform_6(%arg0: i32) -> (i32, i32, i32) {
    %c0_i32 = arith.constant 0 : i32
    %c0_i32_0 = arith.constant 0 : i32
    %c0_i32_1 = arith.constant 0 : i32
    %c0_i32_2 = arith.constant 0 : i32
    return %c0_i32, %c0_i32_0, %c0_i32_1 : i32, i32, i32
  }
  func.func @transform_7(%arg0: i32) -> (i32, i32, i32) {
    %c0_i32 = arith.constant 0 : i32
    %c0_i32_0 = arith.constant 0 : i32
    %c0_i32_1 = arith.constant 0 : i32
    %c0_i32_2 = arith.constant 0 : i32
    return %c0_i32, %c0_i32_0, %c0_i32_1 : i32, i32, i32
  }
  func.func @transform_8(%arg0: i32) -> (i32, i32, i32) {
    %c0_i32 = arith.constant 0 : i32
    %c0_i32_0 = arith.constant 0 : i32
    %c0_i32_1 = arith.constant 0 : i32
    %c0_i32_2 = arith.constant 0 : i32
    return %c0_i32, %c0_i32_0, %c0_i32_1 : i32, i32, i32
  }
  func.func @transform_9(%arg0: i32) -> (i32, i32, i32) {
    %c0_i32 = arith.constant 0 : i32
    %c0_i32_0 = arith.constant 0 : i32
    %c0_i32_1 = arith.constant 0 : i32
    %c0_i32_2 = arith.constant 0 : i32
    return %c0_i32, %c0_i32_0, %c0_i32_1 : i32, i32, i32
  }
  func.func @transform_10(%arg0: i32) -> (i32, i32, i32) {
    %c0_i32 = arith.constant 0 : i32
    %c0_i32_0 = arith.constant 0 : i32
    %c0_i32_1 = arith.constant 0 : i32
    %c0_i32_2 = arith.constant 0 : i32
    return %c0_i32, %c0_i32_0, %c0_i32_1 : i32, i32, i32
  }
  func.func @transform_11(%arg0: i32) -> (i32, i32, i32) {
    %c0_i32 = arith.constant 0 : i32
    %c0_i32_0 = arith.constant 0 : i32
    %c0_i32_1 = arith.constant 0 : i32
    %c0_i32_2 = arith.constant 0 : i32
    return %c0_i32, %c0_i32_0, %c0_i32_1 : i32, i32, i32
  }
  func.func @transform_12(%arg0: i32) -> (i32, i32) {
    %c0_i32 = arith.constant 0 : i32
    %c0_i32_0 = arith.constant 0 : i32
    %c0_i32_1 = arith.constant 0 : i32
    return %c0_i32, %c0_i32_0 : i32, i32
  }
  func.func @transform_13(%arg0: i32) -> (i32, i32) {
    %c0_i32 = arith.constant 0 : i32
    %c0_i32_0 = arith.constant 0 : i32
    %c0_i32_1 = arith.constant 0 : i32
    return %c0_i32, %c0_i32_0 : i32, i32
  }
  func.func @transform_14(%arg0: i32) -> (i32, i32) {
    %c0_i32 = arith.constant 0 : i32
    %c0_i32_0 = arith.constant 0 : i32
    %c0_i32_1 = arith.constant 0 : i32
    return %c0_i32, %c0_i32_0 : i32, i32
  }
  func.func @transform_15(%arg0: i32) -> (i32, i32) {
    %c0_i32 = arith.constant 0 : i32
    %c0_i32_0 = arith.constant 0 : i32
    %c0_i32_1 = arith.constant 0 : i32
    return %c0_i32, %c0_i32_0 : i32, i32
  }
  func.func @transform_16(%arg0: i32) -> (i32, i32, i32) {
    %c0_i32 = arith.constant 0 : i32
    %c0_i32_0 = arith.constant 0 : i32
    %c0_i32_1 = arith.constant 0 : i32
    return %arg0, %c0_i32, %c0_i32_0 : i32, i32, i32
  }
}

</mosaic_0001>

<llo_original>
// kernel: tpu_custom_call.1
$region0: #{tpu_custom_call.1}
  #allocation0 [shape = 'u32[]', space=smem, size = 0x4, offset = 0x4, fixed_abs, tag = 'smem constant byte address 0x4 - core index']
  #allocation1 [shape = 'u32[72,128]{1,0:T(1,128)}', space=vmem, size = 0x9000, scoped, tag = 'internal scratch']
  %s0 = inlined_call_operand.hbm [shape: f32[2,2,8,32], index: 0, kind: input, shape index: {}]
  %s1 = inlined_call_operand.hbm [shape: f32[2,2,1,8], index: 1, kind: input, shape index: {}]
  %s2 = inlined_call_operand.hbm [shape: f32[2,32], index: 2, kind: input, shape index: {}]
  %s3 = inlined_call_operand.vmem [shape: f32[2,32,96], index: 3, kind: input, shape index: {}]
  %s4 = inlined_call_operand.hbm [shape: f32[2,1,96], index: 4, kind: input, shape index: {}]
  %s5 = inlined_call_operand.vmem [shape: f32[2,32,32], index: 5, kind: input, shape index: {}]
  %s6 = inlined_call_operand.hbm [shape: f32[2,1,32], index: 6, kind: input, shape index: {}]
  %s7 = inlined_call_operand.hbm [shape: f32[2,4,32], index: 7, kind: input, shape index: {}]
  %s8 = inlined_call_operand.vmem [shape: f32[2,32,64], index: 8, kind: input, shape index: {}]
  %s9 = inlined_call_operand.vmem [shape: f32[2,1,64], index: 9, kind: input, shape index: {}]
  %s10 = inlined_call_operand.vmem [shape: f32[2,64,32], index: 10, kind: input, shape index: {}]
  %s11 = inlined_call_operand.vmem [shape: f32[2,1,32], index: 11, kind: input, shape index: {}]
  %s12 = inlined_call_operand.hbm [shape: f32[96,512], index: 12, kind: input, shape index: {}]
  %s13 = inlined_call_operand.vmem [shape: f32[1,512], index: 13, kind: input, shape index: {}]
  %s14 = inlined_call_operand.hbm [shape: f32[512,128], index: 14, kind: input, shape index: {}]
  %s15 = inlined_call_operand.vmem [shape: f32[1,128], index: 15, kind: input, shape index: {}]
  %s16 = inlined_call_operand.hbm [shape: f32[2,8,128], index: 16, kind: output, shape index: {}]
  %s17 = sld [smem:[#allocation0]]
  $region129: #{tpu_custom_call.1} parent=0
    _
  %s19 = ssub.s32 1, %s17
  %s20 = scalar_select 0, %s19, %s17
  $region1: #{tpu_custom_call.1} parent=0
    #allocation2 [shape = 'u8[16384]{0}', space=vmem, size = 0x4000, scoped, tag = 'input window, operand 0']
    #allocation3 [shape = 's32[2]{0}', space=sflag, size = 0x8, scoped, tag = 'scoped memory for tpu_custom_call.1']
    #allocation4 [shape = 's32[2]{0}', space=sflag, size = 0x8, scoped, tag = 'scoped memory for tpu_custom_call.1']
    #allocation5 [shape = 'u8[2048]{0}', space=vmem, size = 0x800, scoped, tag = 'input window, operand 1']
    #allocation6 [shape = 's32[2]{0}', space=sflag, size = 0x8, scoped, tag = 'scoped memory for tpu_custom_call.1']
    #allocation7 [shape = 'u8[1024]{0}', space=vmem, size = 0x400, scoped, tag = 'input window, operand 2, single buffered']
    #allocation8 [shape = 'u8[1024]{0}', space=vmem, size = 0x400, scoped, tag = 'input window, operand 4, single buffered']
    #allocation9 [shape = 's32[1]{0}', space=sflag, size = 0x4, scoped, tag = 'scoped memory for tpu_custom_call.1']
    #allocation10 [shape = 'u8[1024]{0}', space=vmem, size = 0x400, scoped, tag = 'input window, operand 6, single buffered']
    #allocation11 [shape = 'u8[4096]{0}', space=vmem, size = 0x1000, scoped, tag = 'input window, operand 7, single buffered']
    #allocation12 [shape = 's32[1]{0}', space=sflag, size = 0x4, scoped, tag = 'scoped memory for tpu_custom_call.1']
    #allocation13 [shape = 'u8[196608]{0}', space=vmem, size = 0x30000, scoped, tag = 'input window, operand 12, single buffered']
    #allocation14 [shape = 'u8[262144]{0}', space=vmem, size = 0x40000, scoped, tag = 'input window, operand 14, single buffered']
    #allocation15 [shape = 's32[1]{0}', space=sflag, size = 0x4, scoped, tag = 'scoped memory for tpu_custom_call.1']
    #allocation16 [shape = 'u8[8192]{0}', space=vmem, size = 0x2000, scoped, tag = 'output window, operand 0']
    %21 = vsyncpa [#allocation3], 0
    %s22 = scalar_lea.sflag [#allocation3], 1
    %23 = vsyncpa %s22, 0
    %24 = vsyncpa [#allocation6], 0
    %s25 = scalar_lea.sflag [#allocation6], 1
    %26 = vsyncpa %s25, 0
    %27 = vsyncpa [#allocation9], 0
    %28 = vsyncpa [#allocation12], 0
    %29 = vsyncpa [#allocation15], 0
    %30 = vsyncpa [#allocation4], 0
    %s31 = scalar_lea.sflag [#allocation4], 1
    %32 = vsyncpa %s31, 0
    loop: start=0, step=1, limit=4
    $region2: #{tpu_custom_call.1} parent=1 // loop_pre_header
      _
    $region3: #{tpu_custom_call.1} parent=1 // loop_header
      %s34 = sphi 0, %s38
      %p35 = scmp.ge.s32.totalorder %s34, 4
      %s44 = sphi 0, %s46
      %s47 = sphi 0, %s44
      %s48 = sphi 0, %s47
      %s64 = sphi 0, %s48
      %s70 = sphi 0, %s72
      %s73 = sphi 0, %s70
      %s74 = sphi 0, %s73
      %s90 = sphi 0, %s74
      %s94 = sphi 0, %s94
      %s96 = sphi 0, %s94
      %s97 = sphi 0, %s96
      %s111 = sphi 0, %s97
      %s115 = sphi 0, %s115
      %s117 = sphi 0, %s115
      %s118 = sphi 0, %s117
      %s132 = sphi 0, %s118
      %s136 = sphi 0, %s136
      %s138 = sphi 0, %s136
      %s139 = sphi 0, %s138
      %s153 = sphi 0, %s139
      %s157 = sphi 0, %s157
      %s159 = sphi 0, %s157
      %s160 = sphi 0, %s159
      %s174 = sphi 0, %s160
      %s178 = sphi 0, %s178
      %s180 = sphi 0, %s178
      %s181 = sphi 0, %s180
      %s195 = sphi 0, %s181
      %s199 = sphi 0, %s199
      %s201 = sphi 0, %s199
      %s202 = sphi 0, %s201
      %s216 = sphi 0, %s202
      %s220 = sphi 0, %s220
      %s222 = sphi 0, %s220
      %s223 = sphi 0, %s222
      %s237 = sphi 0, %s223
      %s241 = sphi 0, %s241
      %s243 = sphi 0, %s241
      %s244 = sphi 0, %s243
      %s258 = sphi 0, %s244
      %s262 = sphi 0, %s262
      %s264 = sphi 0, %s262
      %s265 = sphi 0, %s264
      %s279 = sphi 0, %s265
      %s283 = sphi 0, %s283
      %s285 = sphi 0, %s283
      %s286 = sphi 0, %s285
      %s300 = sphi 0, %s286
      %s304 = sphi 0, %s304
      %s306 = sphi 0, %s304
      %s307 = sphi 0, %s306
      %s321 = sphi 0, %s307
      %s325 = sphi 0, %s325
      %s327 = sphi 0, %s325
      %s328 = sphi 0, %s327
      %s342 = sphi 0, %s328
      %s346 = sphi 0, %s346
      %s348 = sphi 0, %s346
      %s349 = sphi 0, %s348
      %s363 = sphi 0, %s349
      %s367 = sphi 0, %s367
      %s369 = sphi 0, %s367
      %s370 = sphi 0, %s369
      %s384 = sphi 0, %s370
      %s390 = sphi 0, %s392
      %s393 = sphi 0, %s390
      %s394 = sphi 0, %s393
      %s410 = sphi 0, %s394
    $region4: #{tpu_custom_call.1} parent=1 // loop_header_branch
      %37 = sbr.rel (%p35) target = $region8
    $region5: #{tpu_custom_call.1} parent=1 // loop_body
      %s39 = ssub.s32 %s34, 1
      %s40 = ssub.s32 %s34, 2
      %s41 = sadd.s32 %s34, 1
      %s42 = ssub.s32 %s34, %s41
      %p43 = scmp.eq.s32.totalorder %s42, 0
      %s45 = sadd.s32 %s44, 1
      %s46 = scalar_select %p43, %s44, %s45
      %p49 = pneg %p43
      %p50 = scmp.eq.s32.totalorder %s34, 1
      %p51 = por %p49, %p50
      %p52 = scmp.ne.s32.totalorder %s44, %s47
      %p53 = scmp.eq.s32.totalorder %s34, 0
      %p54 = por %p52, %p53
      %p55 = scmp.ne.s32.totalorder %s44, %s47
      %p56 = scmp.eq.s32.totalorder %s39, 1
      %p57 = por %p55, %p56
      %p58 = scmp.ne.s32.totalorder %s47, %s48
      %p59 = scmp.eq.s32.totalorder %s39, 0
      %p60 = por %p58, %p59
      %p61 = scmp.ne.s32.totalorder %s47, %s48
      %p62 = scmp.eq.s32.totalorder %s40, 1
      %p63 = por %p61, %p62
      %p65 = scmp.ne.s32.totalorder %s48, %s64
      %p66 = scmp.eq.s32.totalorder %s40, 0
      %p67 = por %p65, %p66
      %s68 = ssub.s32 %s34, %s41
      %p69 = scmp.eq.s32.totalorder %s68, 0
      %s71 = sadd.s32 %s70, 1
      %s72 = scalar_select %p69, %s70, %s71
      %p75 = pneg %p69
      %p76 = scmp.eq.s32.totalorder %s34, 1
      %p77 = por %p75, %p76
      %p78 = scmp.ne.s32.totalorder %s70, %s73
      %p79 = scmp.eq.s32.totalorder %s34, 0
      %p80 = por %p78, %p79
      %p81 = scmp.ne.s32.totalorder %s70, %s73
      %p82 = scmp.eq.s32.totalorder %s39, 1
      %p83 = por %p81, %p82
      %p84 = scmp.ne.s32.totalorder %s73, %s74
      %p85 = scmp.eq.s32.totalorder %s39, 0
      %p86 = por %p84, %p85
      %p87 = scmp.ne.s32.totalorder %s73, %s74
      %p88 = scmp.eq.s32.totalorder %s40, 1
      %p89 = por %p87, %p88
      %p91 = scmp.ne.s32.totalorder %s74, %s90
      %p92 = scmp.eq.s32.totalorder %s40, 0
      %p93 = por %p91, %p92
      %s95 = sadd.s32 %s94, 1
      %p98 = scmp.eq.s32.totalorder %s34, 1
      %p99 = scmp.ne.s32.totalorder %s94, %s96
      %p100 = scmp.eq.s32.totalorder %s34, 0
      %p101 = por %p99, %p100
      %p102 = scmp.ne.s32.totalorder %s94, %s96
      %p103 = scmp.eq.s32.totalorder %s39, 1
      %p104 = por %p102, %p103
      %p105 = scmp.ne.s32.totalorder %s96, %s97
      %p106 = scmp.eq.s32.totalorder %s39, 0
      %p107 = por %p105, %p106
      %p108 = scmp.ne.s32.totalorder %s96, %s97
      %p109 = scmp.eq.s32.totalorder %s40, 1
      %p110 = por %p108, %p109
      %p112 = scmp.ne.s32.totalorder %s97, %s111
      %p113 = scmp.eq.s32.totalorder %s40, 0
      %p114 = por %p112, %p113
      %s116 = sadd.s32 %s115, 1
      %p119 = scmp.eq.s32.totalorder %s34, 1
      %p120 = scmp.ne.s32.totalorder %s115, %s117
      %p121 = scmp.eq.s32.totalorder %s34, 0
      %p122 = por %p120, %p121
      %p123 = scmp.ne.s32.totalorder %s115, %s117
      %p124 = scmp.eq.s32.totalorder %s39, 1
      %p125 = por %p123, %p124
      %p126 = scmp.ne.s32.totalorder %s117, %s118
      %p127 = scmp.eq.s32.totalorder %s39, 0
      %p128 = por %p126, %p127
      %p129 = scmp.ne.s32.totalorder %s117, %s118
      %p130 = scmp.eq.s32.totalorder %s40, 1
      %p131 = por %p129, %p130
      %p133 = scmp.ne.s32.totalorder %s118, %s132
      %p134 = scmp.eq.s32.totalorder %s40, 0
      %p135 = por %p133, %p134
      %s137 = sadd.s32 %s136, 1
      %p140 = scmp.eq.s32.totalorder %s34, 1
      %p141 = scmp.ne.s32.totalorder %s136, %s138
      %p142 = scmp.eq.s32.totalorder %s34, 0
      %p143 = por %p141, %p142
      %p144 = scmp.ne.s32.totalorder %s136, %s138
      %p145 = scmp.eq.s32.totalorder %s39, 1
      %p146 = por %p144, %p145
      %p147 = scmp.ne.s32.totalorder %s138, %s139
      %p148 = scmp.eq.s32.totalorder %s39, 0
      %p149 = por %p147, %p148
      %p150 = scmp.ne.s32.totalorder %s138, %s139
      %p151 = scmp.eq.s32.totalorder %s40, 1
      %p152 = por %p150, %p151
      %p154 = scmp.ne.s32.totalorder %s139, %s153
      %p155 = scmp.eq.s32.totalorder %s40, 0
      %p156 = por %p154, %p155
      %s158 = sadd.s32 %s157, 1
      %p161 = scmp.eq.s32.totalorder %s34, 1
      %p162 = scmp.ne.s32.totalorder %s157, %s159
      %p163 = scmp.eq.s32.totalorder %s34, 0
      %p164 = por %p162, %p163
      %p165 = scmp.ne.s32.totalorder %s157, %s159
      %p166 = scmp.eq.s32.totalorder %s39, 1
      %p167 = por %p165, %p166
      %p168 = scmp.ne.s32.totalorder %s159, %s160
      %p169 = scmp.eq.s32.totalorder %s39, 0
      %p170 = por %p168, %p169
      %p171 = scmp.ne.s32.totalorder %s159, %s160
      %p172 = scmp.eq.s32.totalorder %s40, 1
      %p173 = por %p171, %p172
      %p175 = scmp.ne.s32.totalorder %s160, %s174
      %p176 = scmp.eq.s32.totalorder %s40, 0
      %p177 = por %p175, %p176
      %s179 = sadd.s32 %s178, 1
      %p182 = scmp.eq.s32.totalorder %s34, 1
      %p183 = scmp.ne.s32.totalorder %s178, %s180
      %p184 = scmp.eq.s32.totalorder %s34, 0
      %p185 = por %p183, %p184
      %p186 = scmp.ne.s32.totalorder %s178, %s180
      %p187 = scmp.eq.s32.totalorder %s39, 1
      %p188 = por %p186, %p187
      %p189 = scmp.ne.s32.totalorder %s180, %s181
      %p190 = scmp.eq.s32.totalorder %s39, 0
      %p191 = por %p189, %p190
      %p192 = scmp.ne.s32.totalorder %s180, %s181
      %p193 = scmp.eq.s32.totalorder %s40, 1
      %p194 = por %p192, %p193
      %p196 = scmp.ne.s32.totalorder %s181, %s195
      %p197 = scmp.eq.s32.totalorder %s40, 0
      %p198 = por %p196, %p197
      %s200 = sadd.s32 %s199, 1
      %p203 = scmp.eq.s32.totalorder %s34, 1
      %p204 = scmp.ne.s32.totalorder %s199, %s201
      %p205 = scmp.eq.s32.totalorder %s34, 0
      %p206 = por %p204, %p205
      %p207 = scmp.ne.s32.totalorder %s199, %s201
      %p208 = scmp.eq.s32.totalorder %s39, 1
      %p209 = por %p207, %p208
      %p210 = scmp.ne.s32.totalorder %s201, %s202
      %p211 = scmp.eq.s32.totalorder %s39, 0
      %p212 = por %p210, %p211
      %p213 = scmp.ne.s32.totalorder %s201, %s202
      %p214 = scmp.eq.s32.totalorder %s40, 1
      %p215 = por %p213, %p214
      %p217 = scmp.ne.s32.totalorder %s202, %s216
      %p218 = scmp.eq.s32.totalorder %s40, 0
      %p219 = por %p217, %p218
      %s221 = sadd.s32 %s220, 1
      %p224 = scmp.eq.s32.totalorder %s34, 1
      %p225 = scmp.ne.s32.totalorder %s220, %s222
      %p226 = scmp.eq.s32.totalorder %s34, 0
      %p227 = por %p225, %p226
      %p228 = scmp.ne.s32.totalorder %s220, %s222
      %p229 = scmp.eq.s32.totalorder %s39, 1
      %p230 = por %p228, %p229
      %p231 = scmp.ne.s32.totalorder %s222, %s223
      %p232 = scmp.eq.s32.totalorder %s39, 0
      %p233 = por %p231, %p232
      %p234 = scmp.ne.s32.totalorder %s222, %s223
      %p235 = scmp.eq.s32.totalorder %s40, 1
      %p236 = por %p234, %p235
      %p238 = scmp.ne.s32.totalorder %s223, %s237
      %p239 = scmp.eq.s32.totalorder %s40, 0
      %p240 = por %p238, %p239
      %s242 = sadd.s32 %s241, 1
      %p245 = scmp.eq.s32.totalorder %s34, 1
      %p246 = scmp.ne.s32.totalorder %s241, %s243
      %p247 = scmp.eq.s32.totalorder %s34, 0
      %p248 = por %p246, %p247
      %p249 = scmp.ne.s32.totalorder %s241, %s243
      %p250 = scmp.eq.s32.totalorder %s39, 1
      %p251 = por %p249, %p250
      %p252 = scmp.ne.s32.totalorder %s243, %s244
      %p253 = scmp.eq.s32.totalorder %s39, 0
      %p254 = por %p252, %p253
      %p255 = scmp.ne.s32.totalorder %s243, %s244
      %p256 = scmp.eq.s32.totalorder %s40, 1
      %p257 = por %p255, %p256
      %p259 = scmp.ne.s32.totalorder %s244, %s258
      %p260 = scmp.eq.s32.totalorder %s40, 0
      %p261 = por %p259, %p260
      %s263 = sadd.s32 %s262, 1
      %p266 = scmp.eq.s32.totalorder %s34, 1
      %p267 = scmp.ne.s32.totalorder %s262, %s264
      %p268 = scmp.eq.s32.totalorder %s34, 0
      %p269 = por %p267, %p268
      %p270 = scmp.ne.s32.totalorder %s262, %s264
      %p271 = scmp.eq.s32.totalorder %s39, 1
      %p272 = por %p270, %p271
      %p273 = scmp.ne.s32.totalorder %s264, %s265
      %p274 = scmp.eq.s32.totalorder %s39, 0
      %p275 = por %p273, %p274
      %p276 = scmp.ne.s32.totalorder %s264, %s265
      %p277 = scmp.eq.s32.totalorder %s40, 1
      %p278 = por %p276, %p277
      %p280 = scmp.ne.s32.totalorder %s265, %s279
      %p281 = scmp.eq.s32.totalorder %s40, 0
      %p282 = por %p280, %p281
      %s284 = sadd.s32 %s283, 1
      %p287 = scmp.eq.s32.totalorder %s34, 1
      %p288 = scmp.ne.s32.totalorder %s283, %s285
      %p289 = scmp.eq.s32.totalorder %s34, 0
      %p290 = por %p288, %p289
      %p291 = scmp.ne.s32.totalorder %s283, %s285
      %p292 = scmp.eq.s32.totalorder %s39, 1
      %p293 = por %p291, %p292
      %p294 = scmp.ne.s32.totalorder %s285, %s286
      %p295 = scmp.eq.s32.totalorder %s39, 0
      %p296 = por %p294, %p295
      %p297 = scmp.ne.s32.totalorder %s285, %s286
      %p298 = scmp.eq.s32.totalorder %s40, 1
      %p299 = por %p297, %p298
      %p301 = scmp.ne.s32.totalorder %s286, %s300
      %p302 = scmp.eq.s32.totalorder %s40, 0
      %p303 = por %p301, %p302
      %s305 = sadd.s32 %s304, 1
      %p308 = scmp.eq.s32.totalorder %s34, 1
      %p309 = scmp.ne.s32.totalorder %s304, %s306
      %p310 = scmp.eq.s32.totalorder %s34, 0
      %p311 = por %p309, %p310
      %p312 = scmp.ne.s32.totalorder %s304, %s306
      %p313 = scmp.eq.s32.totalorder %s39, 1
      %p314 = por %p312, %p313
      %p315 = scmp.ne.s32.totalorder %s306, %s307
      %p316 = scmp.eq.s32.totalorder %s39, 0
      %p317 = por %p315, %p316
      %p318 = scmp.ne.s32.totalorder %s306, %s307
      %p319 = scmp.eq.s32.totalorder %s40, 1
      %p320 = por %p318, %p319
      %p322 = scmp.ne.s32.totalorder %s307, %s321
      %p323 = scmp.eq.s32.totalorder %s40, 0
      %p324 = por %p322, %p323
      %s326 = sadd.s32 %s325, 1
      %p329 = scmp.eq.s32.totalorder %s34, 1
      %p330 = scmp.ne.s32.totalorder %s325, %s327
      %p331 = scmp.eq.s32.totalorder %s34, 0
      %p332 = por %p330, %p331
      %p333 = scmp.ne.s32.totalorder %s325, %s327
      %p334 = scmp.eq.s32.totalorder %s39, 1
      %p335 = por %p333, %p334
      %p336 = scmp.ne.s32.totalorder %s327, %s328
      %p337 = scmp.eq.s32.totalorder %s39, 0
      %p338 = por %p336, %p337
      %p339 = scmp.ne.s32.totalorder %s327, %s328
      %p340 = scmp.eq.s32.totalorder %s40, 1
      %p341 = por %p339, %p340
      %p343 = scmp.ne.s32.totalorder %s328, %s342
      %p344 = scmp.eq.s32.totalorder %s40, 0
      %p345 = por %p343, %p344
      %s347 = sadd.s32 %s346, 1
      %p350 = scmp.eq.s32.totalorder %s34, 1
      %p351 = scmp.ne.s32.totalorder %s346, %s348
      %p352 = scmp.eq.s32.totalorder %s34, 0
      %p353 = por %p351, %p352
      %p354 = scmp.ne.s32.totalorder %s346, %s348
      %p355 = scmp.eq.s32.totalorder %s39, 1
      %p356 = por %p354, %p355
      %p357 = scmp.ne.s32.totalorder %s348, %s349
      %p358 = scmp.eq.s32.totalorder %s39, 0
      %p359 = por %p357, %p358
      %p360 = scmp.ne.s32.totalorder %s348, %s349
      %p361 = scmp.eq.s32.totalorder %s40, 1
      %p362 = por %p360, %p361
      %p364 = scmp.ne.s32.totalorder %s349, %s363
      %p365 = scmp.eq.s32.totalorder %s40, 0
      %p366 = por %p364, %p365
      %s368 = sadd.s32 %s367, 1
      %p371 = scmp.eq.s32.totalorder %s34, 1
      %p372 = scmp.ne.s32.totalorder %s367, %s369
      %p373 = scmp.eq.s32.totalorder %s34, 0
      %p374 = por %p372, %p373
      %p375 = scmp.ne.s32.totalorder %s367, %s369
      %p376 = scmp.eq.s32.totalorder %s39, 1
      %p377 = por %p375, %p376
      %p378 = scmp.ne.s32.totalorder %s369, %s370
      %p379 = scmp.eq.s32.totalorder %s39, 0
      %p380 = por %p378, %p379
      %p381 = scmp.ne.s32.totalorder %s369, %s370
      %p382 = scmp.eq.s32.totalorder %s40, 1
      %p383 = por %p381, %p382
      %p385 = scmp.ne.s32.totalorder %s370, %s384
      %p386 = scmp.eq.s32.totalorder %s40, 0
      %p387 = por %p385, %p386
      %s388 = ssub.s32 %s34, %s41
      %p389 = scmp.eq.s32.totalorder %s388, 0
      %s391 = sadd.s32 %s390, 1
      %s392 = scalar_select %p389, %s390, %s391
      %p395 = pneg %p389
      %p396 = scmp.eq.s32.totalorder %s34, 1
      %p397 = por %p395, %p396
      %p398 = scmp.ne.s32.totalorder %s390, %s393
      %p399 = scmp.eq.s32.totalorder %s34, 0
      %p400 = por %p398, %p399
      %p401 = scmp.ne.s32.totalorder %s390, %s393
      %p402 = scmp.eq.s32.totalorder %s39, 1
      %p403 = por %p401, %p402
      %p404 = scmp.ne.s32.totalorder %s393, %s394
      %p405 = scmp.eq.s32.totalorder %s39, 0
      %p406 = por %p404, %p405
      %p407 = scmp.ne.s32.totalorder %s393, %s394
      %p408 = scmp.eq.s32.totalorder %s40, 1
      %p409 = por %p407, %p408
      %p411 = scmp.ne.s32.totalorder %s394, %s410
      %p412 = scmp.eq.s32.totalorder %s40, 0
      %p413 = por %p411, %p412
      %p414 = scmp.le.s32.totalorder 1, %s34
      %p415 = scmp.lt.s32.totalorder %s34, 3
      %p416 = pnand %p414, %p415
      %p417 = pneg %p416
      // Predicated region
      $region9: #{tpu_custom_call.1} parent=5 // pred_check
        _
      $region10: #{tpu_custom_call.1} parent=5 // pred_check_branch
        %419 = sbr.rel (%p416) target = $region12
      $region11: #{tpu_custom_call.1} parent=5 // pred_region
        %s420 = ssub.s32 %s34, 1
        // Predicated region
        $region13: #{tpu_custom_call.1} parent=11 // pred_check
          %p421 = pneg %p107
        $region14: #{tpu_custom_call.1} parent=11 // pred_check_branch
          %423 = sbr.rel (%p421) target = $region16
        $region15: #{tpu_custom_call.1} parent=11 // pred_region
          %425 = vsyncadd [#allocation6], 0
          %s427 = sshll.u32 %s2, 4
          %s428 = int_to_ptr.hbm [resolvable:$true] %s427
          %s429 = sshll.u32 [#allocation7], 4
          %s430 = int_to_ptr.vmem [resolvable:$true] %s429
          %432 = dma.hbm_to_vmem [thread:$0]  %s428, 32, %s430, [#allocation6]
        $region16: #{tpu_custom_call.1} parent=11 // pred_fallthru
          _
        // Predicated region
        $region17: #{tpu_custom_call.1} parent=11 // pred_check
          %p433 = pneg %p128
        $region18: #{tpu_custom_call.1} parent=11 // pred_check_branch
          %435 = sbr.rel (%p433) target = $region20
        $region19: #{tpu_custom_call.1} parent=11 // pred_region
          _
        $region20: #{tpu_custom_call.1} parent=11 // pred_fallthru
          _
        // Predicated region
        $region21: #{tpu_custom_call.1} parent=11 // pred_check
          %p436 = pneg %p149
        $region22: #{tpu_custom_call.1} parent=11 // pred_check_branch
          %438 = sbr.rel (%p436) target = $region24
        $region23: #{tpu_custom_call.1} parent=11 // pred_region
          %440 = vsyncadd [#allocation9], 0
          %s441 = sshll.u32 %s4, 4
          %s442 = int_to_ptr.hbm [resolvable:$true] %s441
          %s443 = sshll.u32 [#allocation8], 4
          %s444 = int_to_ptr.vmem [resolvable:$true] %s443
          %449 = dma.hbm_to_vmem [thread:$0]  %s442, 32, %s444, [#allocation9], 16, 16, 1
        $region24: #{tpu_custom_call.1} parent=11 // pred_fallthru
          _
        // Predicated region
        $region25: #{tpu_custom_call.1} parent=11 // pred_check
          %p450 = pneg %p170
        $region26: #{tpu_custom_call.1} parent=11 // pred_check_branch
          %452 = sbr.rel (%p450) target = $region28
        $region27: #{tpu_custom_call.1} parent=11 // pred_region
          _
        $region28: #{tpu_custom_call.1} parent=11 // pred_fallthru
          _
        // Predicated region
        $region29: #{tpu_custom_call.1} parent=11 // pred_check
          %p453 = pneg %p191
        $region30: #{tpu_custom_call.1} parent=11 // pred_check_branch
          %455 = sbr.rel (%p453) target = $region32
        $region31: #{tpu_custom_call.1} parent=11 // pred_region
          %457 = vsyncadd [#allocation9], 0
          %s458 = sshll.u32 %s6, 4
          %s459 = int_to_ptr.hbm [resolvable:$true] %s458
          %s460 = sshll.u32 [#allocation10], 4
          %s461 = int_to_ptr.vmem [resolvable:$true] %s460
          %466 = dma.hbm_to_vmem [thread:$0]  %s459, 32, %s461, [#allocation9], 16, 16, 1
        $region32: #{tpu_custom_call.1} parent=11 // pred_fallthru
          _
        // Predicated region
        $region33: #{tpu_custom_call.1} parent=11 // pred_check
          %p467 = pneg %p212
        $region34: #{tpu_custom_call.1} parent=11 // pred_check_branch
          %469 = sbr.rel (%p467) target = $region36
        $region35: #{tpu_custom_call.1} parent=11 // pred_region
          %471 = vsyncadd [#allocation12], 0
          %s472 = sshll.u32 %s7, 4
          %s473 = int_to_ptr.hbm [resolvable:$true] %s472
          %s474 = sshll.u32 [#allocation11], 4
          %s475 = int_to_ptr.vmem [resolvable:$true] %s474
          %480 = dma.hbm_to_vmem [thread:$0]  %s473, 128, %s475, [#allocation12], 64, 64, 4
        $region36: #{tpu_custom_call.1} parent=11 // pred_fallthru
          _
        // Predicated region
        $region37: #{tpu_custom_call.1} parent=11 // pred_check
          %p481 = pneg %p233
        $region38: #{tpu_custom_call.1} parent=11 // pred_check_branch
          %483 = sbr.rel (%p481) target = $region40
        $region39: #{tpu_custom_call.1} parent=11 // pred_region
          _
        $region40: #{tpu_custom_call.1} parent=11 // pred_fallthru
          _
        // Predicated region
        $region41: #{tpu_custom_call.1} parent=11 // pred_check
          %p484 = pneg %p254
        $region42: #{tpu_custom_call.1} parent=11 // pred_check_branch
          %486 = sbr.rel (%p484) target = $region44
        $region43: #{tpu_custom_call.1} parent=11 // pred_region
          _
        $region44: #{tpu_custom_call.1} parent=11 // pred_fallthru
          _
        // Predicated region
        $region45: #{tpu_custom_call.1} parent=11 // pred_check
          %p487 = pneg %p275
        $region46: #{tpu_custom_call.1} parent=11 // pred_check_branch
          %489 = sbr.rel (%p487) target = $region48
        $region47: #{tpu_custom_call.1} parent=11 // pred_region
          _
        $region48: #{tpu_custom_call.1} parent=11 // pred_fallthru
          _
        // Predicated region
        $region49: #{tpu_custom_call.1} parent=11 // pred_check
          %p490 = pneg %p296
        $region50: #{tpu_custom_call.1} parent=11 // pred_check_branch
          %492 = sbr.rel (%p490) target = $region52
        $region51: #{tpu_custom_call.1} parent=11 // pred_region
          _
        $region52: #{tpu_custom_call.1} parent=11 // pred_fallthru
          _
        // Predicated region
        $region53: #{tpu_custom_call.1} parent=11 // pred_check
          %p493 = pneg %p317
        $region54: #{tpu_custom_call.1} parent=11 // pred_check_branch
          %495 = sbr.rel (%p493) target = $region56
        $region55: #{tpu_custom_call.1} parent=11 // pred_region
          %497 = vsyncadd [#allocation12], 0
          %s498 = sshll.u32 %s12, 4
          %s499 = int_to_ptr.hbm [resolvable:$true] %s498
          %s500 = sshll.u32 [#allocation13], 4
          %s501 = int_to_ptr.vmem [resolvable:$true] %s500
          %506 = dma.hbm_to_vmem [thread:$0]  %s499, 6144, %s501, [#allocation12], 512, 512, 32
        $region56: #{tpu_custom_call.1} parent=11 // pred_fallthru
          _
        // Predicated region
        $region57: #{tpu_custom_call.1} parent=11 // pred_check
          %p507 = pneg %p338
        $region58: #{tpu_custom_call.1} parent=11 // pred_check_branch
          %509 = sbr.rel (%p507) target = $region60
        $region59: #{tpu_custom_call.1} parent=11 // pred_region
          _
        $region60: #{tpu_custom_call.1} parent=11 // pred_fallthru
          _
        // Predicated region
        $region61: #{tpu_custom_call.1} parent=11 // pred_check
          %p510 = pneg %p359
        $region62: #{tpu_custom_call.1} parent=11 // pred_check_branch
          %512 = sbr.rel (%p510) target = $region64
        $region63: #{tpu_custom_call.1} parent=11 // pred_region
          %514 = vsyncadd [#allocation15], 0
          %s515 = sshll.u32 %s14, 4
          %s516 = int_to_ptr.hbm [resolvable:$true] %s515
          %s517 = sshll.u32 [#allocation14], 4
          %s518 = int_to_ptr.vmem [resolvable:$true] %s517
          %523 = dma.hbm_to_vmem [thread:$0]  %s516, 8192, %s518, [#allocation15], 128, 128, 8
        $region64: #{tpu_custom_call.1} parent=11 // pred_fallthru
          _
        // Predicated region
        $region65: #{tpu_custom_call.1} parent=11 // pred_check
          %p524 = pneg %p380
        $region66: #{tpu_custom_call.1} parent=11 // pred_check_branch
          %526 = sbr.rel (%p524) target = $region68
        $region67: #{tpu_custom_call.1} parent=11 // pred_region
          _
        $region68: #{tpu_custom_call.1} parent=11 // pred_fallthru
          _
      $region12: #{tpu_custom_call.1} parent=5 // pred_fallthru
        _
      %p527 = scmp.lt.s32.totalorder %s34, 2
      // Predicated region
      $region69: #{tpu_custom_call.1} parent=5 // pred_check
        %p528 = pneg %p527
      $region70: #{tpu_custom_call.1} parent=5 // pred_check_branch
        %530 = sbr.rel (%p528) target = $region72
      $region71: #{tpu_custom_call.1} parent=5 // pred_region
        // Predicated region
        $region73: #{tpu_custom_call.1} parent=71 // pred_check
          %p531 = pneg %p54
        $region74: #{tpu_custom_call.1} parent=71 // pred_check_branch
          %533 = sbr.rel (%p531) target = $region76
        $region75: #{tpu_custom_call.1} parent=71 // pred_region
          %s534 = sand.u32 %s44, 1
          %s535 = scalar_lea.sflag [#allocation3], %s534
          %s536 = sand.u32 %s44, 1
          %s537 = smul.addr %s536, 16
          %s538 = scalar_lea.vmem [#allocation2], %s537
          %540 = vsyncadd %s535, 0
          %s541 = smul.addr %s34, 2
          %s542 = smul.addr %s541, 8
          %s543 = scalar_lea.hbm %s0, %s542
          %s544 = sshll.u32 %s543, 4
          %s545 = int_to_ptr.hbm [resolvable:$true] %s544
          %s546 = sshll.u32 %s538, 4
          %s547 = int_to_ptr.vmem [resolvable:$true] %s546
          %552 = dma.hbm_to_vmem [thread:$0]  %s545, 256, %s547, %s535, 128, 128, 8
        $region76: #{tpu_custom_call.1} parent=71 // pred_fallthru
          _
        // Predicated region
        $region77: #{tpu_custom_call.1} parent=71 // pred_check
          %p553 = pneg %p80
        $region78: #{tpu_custom_call.1} parent=71 // pred_check_branch
          %555 = sbr.rel (%p553) target = $region80
        $region79: #{tpu_custom_call.1} parent=71 // pred_region
          %s556 = sand.u32 %s34, 1
          %s557 = scalar_lea.sflag [#allocation6], %s556
          %s558 = sand.u32 %s70, 1
          %s559 = smul.addr %s558, 2
          %s560 = scalar_lea.vmem [#allocation5], %s559
          %562 = vsyncadd %s557, 0
          %s563 = smul.addr %s34, 2
          %s564 = scalar_lea.hbm %s1, %s563
          %s565 = sshll.u32 %s564, 4
          %s566 = int_to_ptr.hbm [resolvable:$true] %s565
          %s567 = sshll.u32 %s560, 4
          %s568 = int_to_ptr.vmem [resolvable:$true] %s567
          %573 = dma.hbm_to_vmem [thread:$0]  %s566, 32, %s568, %s557, 16, 16, 1
        $region80: #{tpu_custom_call.1} parent=71 // pred_fallthru
          _
      $region72: #{tpu_custom_call.1} parent=5 // pred_fallthru
        _
      %p574 = scmp.le.s32.totalorder 1, %s34
      %p575 = scmp.lt.s32.totalorder %s34, 3
      %p576 = pnand %p574, %p575
      %p577 = pneg %p576
      // Predicated region
      $region81: #{tpu_custom_call.1} parent=5 // pred_check
        _
      $region82: #{tpu_custom_call.1} parent=5 // pred_check_branch
        %579 = sbr.rel (%p576) target = $region84
      $region83: #{tpu_custom_call.1} parent=5 // pred_region
        %s580 = ssub.s32 %s34, 1
        %s581 = sand.u32 %s47, 1
        %s582 = scalar_lea.sflag [#allocation3], %s581
        %s583 = sand.u32 %s47, 1
        %s584 = smul.addr %s583, 16
        %s585 = scalar_lea.vmem [#allocation2], %s584
        // Predicated region
        $region85: #{tpu_custom_call.1} parent=83 // pred_check
          %p586 = pneg %p60
        $region86: #{tpu_custom_call.1} parent=83 // pred_check_branch
          %588 = sbr.rel (%p586) target = $region88
        $region87: #{tpu_custom_call.1} parent=83 // pred_region
          %590 = dma.done %s582, 256
        $region88: #{tpu_custom_call.1} parent=83 // pred_fallthru
          _
        %s591 = sand.u32 %s39, 1
        %s592 = scalar_lea.sflag [#allocation6], %s591
        %s593 = sand.u32 %s73, 1
        %s594 = smul.addr %s593, 2
        %s595 = scalar_lea.vmem [#allocation5], %s594
        // Predicated region
        $region89: #{tpu_custom_call.1} parent=83 // pred_check
          %p596 = pneg %p86
        $region90: #{tpu_custom_call.1} parent=83 // pred_check_branch
          %598 = sbr.rel (%p596) target = $region92
        $region91: #{tpu_custom_call.1} parent=83 // pred_region
          %600 = dma.done %s592, 32
        $region92: #{tpu_custom_call.1} parent=83 // pred_fallthru
          _
        // Predicated region
        $region93: #{tpu_custom_call.1} parent=83 // pred_check
          %p601 = pneg %p107
        $region94: #{tpu_custom_call.1} parent=83 // pred_check_branch
          %603 = sbr.rel (%p601) target = $region96
        $region95: #{tpu_custom_call.1} parent=83 // pred_region
          %605 = dma.done [#allocation6], 32
        $region96: #{tpu_custom_call.1} parent=83 // pred_fallthru
          _
        // Predicated region
        $region97: #{tpu_custom_call.1} parent=83 // pred_check
          %p606 = pneg %p149
        $region98: #{tpu_custom_call.1} parent=83 // pred_check_branch
          %608 = sbr.rel (%p606) target = $region100
        $region99: #{tpu_custom_call.1} parent=83 // pred_region
          %610 = dma.done [#allocation9], 32
        $region100: #{tpu_custom_call.1} parent=83 // pred_fallthru
          _
        // Predicated region
        $region101: #{tpu_custom_call.1} parent=83 // pred_check
          %p611 = pneg %p191
        $region102: #{tpu_custom_call.1} parent=83 // pred_check_branch
          %613 = sbr.rel (%p611) target = $region104
        $region103: #{tpu_custom_call.1} parent=83 // pred_region
          %615 = dma.done [#allocation9], 32
        $region104: #{tpu_custom_call.1} parent=83 // pred_fallthru
          _
        // Predicated region
        $region105: #{tpu_custom_call.1} parent=83 // pred_check
          %p616 = pneg %p212
        $region106: #{tpu_custom_call.1} parent=83 // pred_check_branch
          %618 = sbr.rel (%p616) target = $region108
        $region107: #{tpu_custom_call.1} parent=83 // pred_region
          %620 = dma.done [#allocation12], 128
        $region108: #{tpu_custom_call.1} parent=83 // pred_fallthru
          _
        // Predicated region
        $region109: #{tpu_custom_call.1} parent=83 // pred_check
          %p621 = pneg %p317
        $region110: #{tpu_custom_call.1} parent=83 // pred_check_branch
          %623 = sbr.rel (%p621) target = $region112
        $region111: #{tpu_custom_call.1} parent=83 // pred_region
          %625 = dma.done [#allocation12], 6144
        $region112: #{tpu_custom_call.1} parent=83 // pred_fallthru
          _
        // Predicated region
        $region113: #{tpu_custom_call.1} parent=83 // pred_check
          %p626 = pneg %p359
        $region114: #{tpu_custom_call.1} parent=83 // pred_check_branch
          %628 = sbr.rel (%p626) target = $region116
        $region115: #{tpu_custom_call.1} parent=83 // pred_region
          %630 = dma.done [#allocation15], 8192
        $region116: #{tpu_custom_call.1} parent=83 // pred_fallthru
          _
        %s631 = sand.u32 %s47, 1
        %s632 = scalar_lea.sflag [#allocation3], %s631
        %s633 = sand.u32 %s47, 1
        %s634 = smul.addr %s633, 16
        %s635 = scalar_lea.vmem [#allocation2], %s634
        %p636 = pneg %p60
        %p637 = pneg %p57
        %s638 = sand.u32 %s39, 1
        %s639 = scalar_lea.sflag [#allocation6], %s638
        %s640 = sand.u32 %s73, 1
        %s641 = smul.addr %s640, 2
        %s642 = scalar_lea.vmem [#allocation5], %s641
        %p643 = pneg %p86
        %p644 = pneg %p83
        %p645 = pneg %p107
        %p646 = pneg %p104
        %p647 = pneg %p128
        %p648 = pneg %p125
        %p649 = pneg %p149
        %p650 = pneg %p146
        %p651 = pneg %p170
        %p652 = pneg %p167
        %p653 = pneg %p191
        %p654 = pneg %p188
        %p655 = pneg %p212
        %p656 = pneg %p209
        %p657 = pneg %p233
        %p658 = pneg %p230
        %p659 = pneg %p254
        %p660 = pneg %p251
        %p661 = pneg %p275
        %p662 = pneg %p272
        %p663 = pneg %p296
        %p664 = pneg %p293
        %p665 = pneg %p317
        %p666 = pneg %p314
        %p667 = pneg %p338
        %p668 = pneg %p335
        %p669 = pneg %p359
        %p670 = pneg %p356
        %p671 = pneg %p380
        %p672 = pneg %p377
        %p673 = pneg %p406
        %p674 = pneg %p403
        %s675 = sand.u32 %s393, 1
        %s676 = scalar_lea.sflag [#allocation4], %s675
        %s677 = sand.u32 %s393, 1
        %s678 = smul.addr %s677, 8
        %s679 = scalar_lea.vmem [#allocation16], %s678
        %v680 = vld [vmem:[#allocation7] sm:$0x3]
        %v681 = vld [vmem:[%s585] sm:$0xff]
        %v682 = vld [vmem:[%s585 + $0x8] sm:$0xff]
        %vm683 = vcmask 261120
        %v684 = vsel %vm683, %v681, 0.0
        %685 = vadd.xlane.f32.xlu0 %v684
        %v686 = vpop.xlane.xlu0 %685
        %v687 = vsel %vm683, %v682, 0.0
        %688 = vadd.xlane.f32.xlu0 %v687
        %v689 = vpop.xlane.xlu0 %688
        %v690 = vrcp.pop 32.0
        %v691 = vmul.f32 32.0, %v690
        %v692 = vsub.f32 1.0, %v691
        %v693 = vmul.f32 %v690, %v692
        %v694 = vadd.f32 %v690, %v693
        %vm695 = vweird.f32 %v690
        %v696 = vsel %vm695, %v690, %v694
        %v697 = vmul.f32 %v686, %v696
        %v698 = vmul.f32 %v689, %v696
        %v699 = vmul.f32 %v681, %v681
        %v700 = vmul.f32 %v682, %v682
        %v701 = vsel %vm683, %v699, 0.0
        %702 = vadd.xlane.f32.xlu0 %v701
        %v703 = vpop.xlane.xlu0 %702
        %v704 = vsel %vm683, %v700, 0.0
        %705 = vadd.xlane.f32.xlu0 %v704
        %v706 = vpop.xlane.xlu0 %705
        %v707 = vmul.f32 %v703, %v696
        %v708 = vmul.f32 %v706, %v696
        %v709 = vmul.f32 %v697, %v697
        %v710 = vmul.f32 %v698, %v698
        %v711 = vsub.f32 %v707, %v709
        %v712 = vsub.f32 %v708, %v710
        %v713 = vmax.f32 %v711, 0.0
        %v714 = vmax.f32 %v712, 0.0
        %v715 = vsub.f32 %v681, %v697
        %v716 = vsub.f32 %v682, %v698
        %v717 = vadd.f32 %v713, 1e-12
        %v718 = vadd.f32 %v714, 1e-12
        %v719 = vrsqrt.pop %v717
        %v720 = vmul.f32 %v719, %v717
        %v721 = vmul.f32 %v720, %v719
        %v722 = vmul.f32 0.5, %v721
        %v723 = vsub.f32 1.5, %v722
        %v724 = vmul.f32 %v719, %v723
        %vm725 = vweird.f32 %v717
        %vm726 = vweird.f32 %v719
        %vm727 = vmor %vm725, %vm726
        %v728 = vsel %vm727, %v719, %v724
        %v729 = vrsqrt.pop %v718
        %v730 = vmul.f32 %v729, %v718
        %v731 = vmul.f32 %v730, %v729
        %v732 = vmul.f32 0.5, %v731
        %v733 = vsub.f32 1.5, %v732
        %v734 = vmul.f32 %v729, %v733
        %vm735 = vweird.f32 %v718
        %vm736 = vweird.f32 %v729
        %vm737 = vmor %vm735, %vm736
        %v738 = vsel %vm737, %v729, %v734
        %v739 = vmul.f32 %v715, %v728
        %v740 = vmul.f32 %v716, %v738
        %v741 = vperm.slane %v680, 0
        %v742 = vmul.f32 %v739, %v741
        %v743 = vmul.f32 %v740, %v741
        %v744 = vperm.slane %v680, 1
        %v745 = vadd.f32 %v742, %v744
        %v746 = vadd.f32 %v743, %v744
        %v747 = vld [vmem:[%s595] sm:$0x1]
        %v748 = vld [vmem:[%s595 + $0x1] sm:$0x1]
        %v751 = vperm.slane %v747, 0
        %v752 = vperm.slane %v748, 0
        %v755 = vld [vmem:[%s3] sm:$0xff]
        %v756 = vld [vmem:[%s3 + $0x8] sm:$0xff]
        %v757 = vld [vmem:[%s3 + $0x10] sm:$0xff]
        %v758 = vld [vmem:[%s3 + $0x18] sm:$0xff]
        %v759 = vld [vmem:[%s5] sm:$0xff]
        %v760 = vld [vmem:[%s5 + $0x8] sm:$0xff]
        %v761 = vld [vmem:[%s5 + $0x10] sm:$0xff]
        %v762 = vld [vmem:[%s5 + $0x18] sm:$0xff]
        %v763 = vld [vmem:[#allocation11] sm:$0xf]
        %v764 = vld [vmem:[#allocation8] sm:$0x1]
        %v766 = vperm.slane %v764, 0
        %v769 = vsel %vm683, %v745, 0
        %v772 = vsel %vm683, %v746, 0
        %774 = vmatpush.msra.mxu0 0.0
        %775 = vmatpush.msra.mxu0 0.0
        %776 = vmatpush.msra.mxu0 0.0
        %777 = vmatpush.msra.mxu0 0.0
        %778 = vmatpush.msra.mxu0 0.0
        %779 = vmatpush.msra.mxu0 0.0
        %780 = vmatpush.msra.mxu0 0.0
        %781 = vmatpush.msra.mxu0 0.0
        %782 = vmatpush.msra.mxu0 0.0
        %783 = vmatpush.msra.mxu0 0.0
        %784 = vmatpush.msra.mxu0 0.0
        %785 = vmatpush.msra.mxu0 0.0
        %786 = vmatpush.msra.mxu0 %v758
        %787 = vmatpush.msra.mxu0 %v757
        %788 = vmatpush.msra.mxu0 %v756
        %789 = vmatpush.msra.mxu0 %v755
        %790 = vmatmul.f32.gmra.mxu0 %v769
        %v791 = vpop.f32.mrf.mxu0
        %v792 = vadd.f32 %v766, %v791
        %793 = vmatmul.f32.gmra.mxu0 %v772
        %v794 = vpop.f32.mrf.mxu0
        %v795 = vadd.f32 %v766, %v794
        %796 = vdwg.mxu0
        %798 = vrot.lane.b32.xlu0 %v792, 96
        %v799 = vpop.permute.xlu0 %798
        %vm800 = vcmask 64512
        %v801 = vsel %vm800, %v792, 0
        %v803 = vsel %vm800, %v799, 0
        %805 = vmatpush.xpose.msra.mxu0 0.0
        %806 = vmatpush.xpose.msra.mxu0 0.0
        %807 = vmatpush.xpose.msra.mxu0 0.0
        %808 = vmatpush.xpose.msra.mxu0 0.0
        %809 = vmatpush.xpose.msra.mxu0 0.0
        %810 = vmatpush.xpose.msra.mxu0 0.0
        %811 = vmatpush.xpose.msra.mxu0 0.0
        %812 = vmatpush.xpose.msra.mxu0 0.0
        %813 = vmatpush.xpose.msra.mxu0 0.0
        %814 = vmatpush.xpose.msra.mxu0 0.0
        %815 = vmatpush.xpose.msra.mxu0 0.0
        %816 = vmatpush.xpose.msra.mxu0 0.0
        %817 = vmatpush.xpose.msra.mxu0 0.0
        %818 = vmatpush.xpose.msra.mxu0 0.0
        %819 = vmatpush.xpose.msra.mxu0 0.0
        %820 = vmatpush.xpose.msra.mxu0 %v803
        %821 = vmatmul.f32.gmra.mxu0 %v801
        %v822 = vpop.f32.mrf.mxu0
        %v823 = vadd.f32 0.0, %v822
        %824 = vdwg.mxu0
        %826 = vrot.lane.b32.xlu0 %v795, 96
        %v827 = vpop.permute.xlu0 %826
        %v828 = vsel %vm800, %v795, 0
        %v830 = vsel %vm800, %v827, 0
        %832 = vmatpush.xpose.msra.mxu0 0.0
        %833 = vmatpush.xpose.msra.mxu0 0.0
        %834 = vmatpush.xpose.msra.mxu0 0.0
        %835 = vmatpush.xpose.msra.mxu0 0.0
        %836 = vmatpush.xpose.msra.mxu0 0.0
        %837 = vmatpush.xpose.msra.mxu0 0.0
        %838 = vmatpush.xpose.msra.mxu0 0.0
        %839 = vmatpush.xpose.msra.mxu0 0.0
        %840 = vmatpush.xpose.msra.mxu0 0.0
        %841 = vmatpush.xpose.msra.mxu0 0.0
        %842 = vmatpush.xpose.msra.mxu0 0.0
        %843 = vmatpush.xpose.msra.mxu0 0.0
        %844 = vmatpush.xpose.msra.mxu0 0.0
        %845 = vmatpush.xpose.msra.mxu0 0.0
        %846 = vmatpush.xpose.msra.mxu0 0.0
        %847 = vmatpush.xpose.msra.mxu0 %v830
        %848 = vmatmul.f32.gmra.mxu0 %v828
        %v849 = vpop.f32.mrf.mxu0
        %v850 = vadd.f32 0.0, %v849
        %851 = vdwg.mxu0
        %v852 = vmul.f32 %v823, 0.35355338
        %v853 = vmul.f32 %v850, 0.35355338
        %v854 = vadd.f32 %v852, %v751
        %v855 = vadd.f32 %v853, %v752
        %v856 = vsel %vm800, %v854, -inf
        %857 = vmax.xlane.f32.xlu0 %v856
        %v858 = vpop.xlane.xlu0 %857
        %v859 = vsel %vm800, %v855, -inf
        %860 = vmax.xlane.f32.xlu0 %v859
        %v861 = vpop.xlane.xlu0 %860
        %v862 = vsub.f32 %v854, %v858
        %v863 = vsub.f32 %v855, %v861
        %v864 = vmul.f32 %v862, 1.442695
        %v865 = vpow.pop %v864
        %v866 = vmul.f32 %v863, 1.442695
        %v867 = vpow.pop %v866
        %v868 = vsel %vm800, %v865, 0.0
        %869 = vadd.xlane.f32.xlu0 %v868
        %v870 = vpop.xlane.xlu0 %869
        %v871 = vsel %vm800, %v867, 0.0
        %872 = vadd.xlane.f32.xlu0 %v871
        %v873 = vpop.xlane.xlu0 %872
        %v874 = vrcp.pop %v870
        %v875 = vrcp.pop %v873
        %v876 = vmul.f32 %v865, %v874
        %v877 = vmul.f32 %v867, %v875
        %878 = vrot.lane.b32.xlu0 %v792, 64
        %v879 = vpop.permute.xlu0 %878
        %v882 = vsel %vm800, %v876, 0
        %884 = vmatpush.msra.mxu0 0.0
        %885 = vmatpush.msra.mxu0 0.0
        %886 = vmatpush.msra.mxu0 0.0
        %887 = vmatpush.msra.mxu0 0.0
        %888 = vmatpush.msra.mxu0 0.0
        %889 = vmatpush.msra.mxu0 0.0
        %890 = vmatpush.msra.mxu0 0.0
        %891 = vmatpush.msra.mxu0 0.0
        %892 = vmatpush.msra.mxu0 0.0
        %893 = vmatpush.msra.mxu0 0.0
        %894 = vmatpush.msra.mxu0 0.0
        %895 = vmatpush.msra.mxu0 0.0
        %896 = vmatpush.msra.mxu0 0.0
        %897 = vmatpush.msra.mxu0 0.0
        %898 = vmatpush.msra.mxu0 0.0
        %899 = vmatpush.msra.mxu0 %v879
        %900 = vmatmul.f32.gmra.mxu0 %v882
        %v901 = vpop.f32.mrf.mxu0
        %v902 = vadd.f32 0.0, %v901
        %903 = vdwg.mxu0
        %904 = vrot.lane.b32.xlu0 %v795, 64
        %v905 = vpop.permute.xlu0 %904
        %v908 = vsel %vm800, %v877, 0
        %910 = vmatpush.msra.mxu0 0.0
        %911 = vmatpush.msra.mxu0 0.0
        %912 = vmatpush.msra.mxu0 0.0
        %913 = vmatpush.msra.mxu0 0.0
        %914 = vmatpush.msra.mxu0 0.0
        %915 = vmatpush.msra.mxu0 0.0
        %916 = vmatpush.msra.mxu0 0.0
        %917 = vmatpush.msra.mxu0 0.0
        %918 = vmatpush.msra.mxu0 0.0
        %919 = vmatpush.msra.mxu0 0.0
        %920 = vmatpush.msra.mxu0 0.0
        %921 = vmatpush.msra.mxu0 0.0
        %922 = vmatpush.msra.mxu0 0.0
        %923 = vmatpush.msra.mxu0 0.0
        %924 = vmatpush.msra.mxu0 0.0
        %925 = vmatpush.msra.mxu0 %v905
        %926 = vmatmul.f32.gmra.mxu0 %v908
        %v927 = vpop.f32.mrf.mxu0
        %v928 = vadd.f32 0.0, %v927
        %929 = vdwg.mxu0
        %930 = vrot.lane.b32.xlu0 %v792, 120
        %v931 = vpop.permute.xlu0 %930
        %932 = vrot.lane.b32.xlu0 %v792, 88
        %v933 = vpop.permute.xlu0 %932
        %v934 = vsel %vm800, %v931, 0
        %v936 = vsel %vm800, %v933, 0
        %938 = vmatpush.xpose.msra.mxu0 0.0
        %939 = vmatpush.xpose.msra.mxu0 0.0
        %940 = vmatpush.xpose.msra.mxu0 0.0
        %941 = vmatpush.xpose.msra.mxu0 0.0
        %942 = vmatpush.xpose.msra.mxu0 0.0
        %943 = vmatpush.xpose.msra.mxu0 0.0
        %944 = vmatpush.xpose.msra.mxu0 0.0
        %945 = vmatpush.xpose.msra.mxu0 0.0
        %946 = vmatpush.xpose.msra.mxu0 0.0
        %947 = vmatpush.xpose.msra.mxu0 0.0
        %948 = vmatpush.xpose.msra.mxu0 0.0
        %949 = vmatpush.xpose.msra.mxu0 0.0
        %950 = vmatpush.xpose.msra.mxu0 0.0
        %951 = vmatpush.xpose.msra.mxu0 0.0
        %952 = vmatpush.xpose.msra.mxu0 0.0
        %953 = vmatpush.xpose.msra.mxu0 %v936
        %954 = vmatmul.f32.gmra.mxu0 %v934
        %v955 = vpop.f32.mrf.mxu0
        %v956 = vadd.f32 0.0, %v955
        %957 = vdwg.mxu0
        %958 = vrot.lane.b32.xlu0 %v795, 120
        %v959 = vpop.permute.xlu0 %958
        %960 = vrot.lane.b32.xlu0 %v795, 88
        %v961 = vpop.permute.xlu0 %960
        %v962 = vsel %vm800, %v959, 0
        %v964 = vsel %vm800, %v961, 0
        %966 = vmatpush.xpose.msra.mxu0 0.0
        %967 = vmatpush.xpose.msra.mxu0 0.0
        %968 = vmatpush.xpose.msra.mxu0 0.0
        %969 = vmatpush.xpose.msra.mxu0 0.0
        %970 = vmatpush.xpose.msra.mxu0 0.0
        %971 = vmatpush.xpose.msra.mxu0 0.0
        %972 = vmatpush.xpose.msra.mxu0 0.0
        %973 = vmatpush.xpose.msra.mxu0 0.0
        %974 = vmatpush.xpose.msra.mxu0 0.0
        %975 = vmatpush.xpose.msra.mxu0 0.0
        %976 = vmatpush.xpose.msra.mxu0 0.0
        %977 = vmatpush.xpose.msra.mxu0 0.0
        %978 = vmatpush.xpose.msra.mxu0 0.0
        %979 = vmatpush.xpose.msra.mxu0 0.0
        %980 = vmatpush.xpose.msra.mxu0 0.0
        %981 = vmatpush.xpose.msra.mxu0 %v964
        %982 = vmatmul.f32.gmra.mxu0 %v962
        %v983 = vpop.f32.mrf.mxu0
        %v984 = vadd.f32 0.0, %v983
        %985 = vdwg.mxu0
        %v986 = vmul.f32 %v956, 0.35355338
        %v987 = vmul.f32 %v984, 0.35355338
        %v988 = vadd.f32 %v986, %v751
        %v989 = vadd.f32 %v987, %v752
        %v990 = vsel %vm800, %v988, -inf
        %991 = vmax.xlane.f32.xlu0 %v990
        %v992 = vpop.xlane.xlu0 %991
        %v993 = vsel %vm800, %v989, -inf
        %994 = vmax.xlane.f32.xlu0 %v993
        %v995 = vpop.xlane.xlu0 %994
        %v996 = vsub.f32 %v988, %v992
        %v997 = vsub.f32 %v989, %v995
        %v998 = vmul.f32 %v996, 1.442695
        %v999 = vpow.pop %v998
        %v1000 = vmul.f32 %v997, 1.442695
        %v1001 = vpow.pop %v1000
        %v1002 = vsel %vm800, %v999, 0.0
        %1003 = vadd.xlane.f32.xlu0 %v1002
        %v1004 = vpop.xlane.xlu0 %1003
        %v1005 = vsel %vm800, %v1001, 0.0
        %1006 = vadd.xlane.f32.xlu0 %v1005
        %v1007 = vpop.xlane.xlu0 %1006
        %v1008 = vrcp.pop %v1004
        %v1009 = vrcp.pop %v1007
        %v1010 = vmul.f32 %v999, %v1008
        %v1011 = vmul.f32 %v1001, %v1009
        %1012 = vrot.lane.b32.xlu0 %v792, 56
        %v1013 = vpop.permute.xlu0 %1012
        %v1016 = vsel %vm800, %v1010, 0
        %1018 = vmatpush.msra.mxu0 0.0
        %1019 = vmatpush.msra.mxu0 0.0
        %1020 = vmatpush.msra.mxu0 0.0
        %1021 = vmatpush.msra.mxu0 0.0
        %1022 = vmatpush.msra.mxu0 0.0
        %1023 = vmatpush.msra.mxu0 0.0
        %1024 = vmatpush.msra.mxu0 0.0
        %1025 = vmatpush.msra.mxu0 0.0
        %1026 = vmatpush.msra.mxu0 0.0
        %1027 = vmatpush.msra.mxu0 0.0
        %1028 = vmatpush.msra.mxu0 0.0
        %1029 = vmatpush.msra.mxu0 0.0
        %1030 = vmatpush.msra.mxu0 0.0
        %1031 = vmatpush.msra.mxu0 0.0
        %1032 = vmatpush.msra.mxu0 0.0
        %1033 = vmatpush.msra.mxu0 %v1013
        %1034 = vmatmul.f32.gmra.mxu0 %v1016
        %v1035 = vpop.f32.mrf.mxu0
        %v1036 = vadd.f32 0.0, %v1035
        %1037 = vdwg.mxu0
        %1038 = vrot.lane.b32.xlu0 %v795, 56
        %v1039 = vpop.permute.xlu0 %1038
        %v1042 = vsel %vm800, %v1011, 0
        %1044 = vmatpush.msra.mxu0 0.0
        %1045 = vmatpush.msra.mxu0 0.0
        %1046 = vmatpush.msra.mxu0 0.0
        %1047 = vmatpush.msra.mxu0 0.0
        %1048 = vmatpush.msra.mxu0 0.0
        %1049 = vmatpush.msra.mxu0 0.0
        %1050 = vmatpush.msra.mxu0 0.0
        %1051 = vmatpush.msra.mxu0 0.0
        %1052 = vmatpush.msra.mxu0 0.0
        %1053 = vmatpush.msra.mxu0 0.0
        %1054 = vmatpush.msra.mxu0 0.0
        %1055 = vmatpush.msra.mxu0 0.0
        %1056 = vmatpush.msra.mxu0 0.0
        %1057 = vmatpush.msra.mxu0 0.0
        %1058 = vmatpush.msra.mxu0 0.0
        %1059 = vmatpush.msra.mxu0 %v1039
        %1060 = vmatmul.f32.gmra.mxu0 %v1042
        %v1061 = vpop.f32.mrf.mxu0
        %v1062 = vadd.f32 0.0, %v1061
        %1063 = vdwg.mxu0
        %1064 = vrot.lane.b32.xlu0 %v792, 112
        %v1065 = vpop.permute.xlu0 %1064
        %1066 = vrot.lane.b32.xlu0 %v792, 80
        %v1067 = vpop.permute.xlu0 %1066
        %v1068 = vsel %vm800, %v1065, 0
        %v1070 = vsel %vm800, %v1067, 0
        %1072 = vmatpush.xpose.msra.mxu0 0.0
        %1073 = vmatpush.xpose.msra.mxu0 0.0
        %1074 = vmatpush.xpose.msra.mxu0 0.0
        %1075 = vmatpush.xpose.msra.mxu0 0.0
        %1076 = vmatpush.xpose.msra.mxu0 0.0
        %1077 = vmatpush.xpose.msra.mxu0 0.0
        %1078 = vmatpush.xpose.msra.mxu0 0.0
        %1079 = vmatpush.xpose.msra.mxu0 0.0
        %1080 = vmatpush.xpose.msra.mxu0 0.0
        %1081 = vmatpush.xpose.msra.mxu0 0.0
        %1082 = vmatpush.xpose.msra.mxu0 0.0
        %1083 = vmatpush.xpose.msra.mxu0 0.0
        %1084 = vmatpush.xpose.msra.mxu0 0.0
        %1085 = vmatpush.xpose.msra.mxu0 0.0
        %1086 = vmatpush.xpose.msra.mxu0 0.0
        %1087 = vmatpush.xpose.msra.mxu0 %v1070
        %1088 = vmatmul.f32.gmra.mxu0 %v1068
        %v1089 = vpop.f32.mrf.mxu0
        %v1090 = vadd.f32 0.0, %v1089
        %1091 = vdwg.mxu0
        %1092 = vrot.lane.b32.xlu0 %v795, 112
        %v1093 = vpop.permute.xlu0 %1092
        %1094 = vrot.lane.b32.xlu0 %v795, 80
        %v1095 = vpop.permute.xlu0 %1094
        %v1096 = vsel %vm800, %v1093, 0
        %v1098 = vsel %vm800, %v1095, 0
        %1100 = vmatpush.xpose.msra.mxu0 0.0
        %1101 = vmatpush.xpose.msra.mxu0 0.0
        %1102 = vmatpush.xpose.msra.mxu0 0.0
        %1103 = vmatpush.xpose.msra.mxu0 0.0
        %1104 = vmatpush.xpose.msra.mxu0 0.0
        %1105 = vmatpush.xpose.msra.mxu0 0.0
        %1106 = vmatpush.xpose.msra.mxu0 0.0
        %1107 = vmatpush.xpose.msra.mxu0 0.0
        %1108 = vmatpush.xpose.msra.mxu0 0.0
        %1109 = vmatpush.xpose.msra.mxu0 0.0
        %1110 = vmatpush.xpose.msra.mxu0 0.0
        %1111 = vmatpush.xpose.msra.mxu0 0.0
        %1112 = vmatpush.xpose.msra.mxu0 0.0
        %1113 = vmatpush.xpose.msra.mxu0 0.0
        %1114 = vmatpush.xpose.msra.mxu0 0.0
        %1115 = vmatpush.xpose.msra.mxu0 %v1098
        %1116 = vmatmul.f32.gmra.mxu0 %v1096
        %v1117 = vpop.f32.mrf.mxu0
        %v1118 = vadd.f32 0.0, %v1117
        %1119 = vdwg.mxu0
        %v1120 = vmul.f32 %v1090, 0.35355338
        %v1121 = vmul.f32 %v1118, 0.35355338
        %v1122 = vadd.f32 %v1120, %v751
        %v1123 = vadd.f32 %v1121, %v752
        %v1124 = vsel %vm800, %v1122, -inf
        %1125 = vmax.xlane.f32.xlu0 %v1124
        %v1126 = vpop.xlane.xlu0 %1125
        %v1127 = vsel %vm800, %v1123, -inf
        %1128 = vmax.xlane.f32.xlu0 %v1127
        %v1129 = vpop.xlane.xlu0 %1128
        %v1130 = vsub.f32 %v1122, %v1126
        %v1131 = vsub.f32 %v1123, %v1129
        %v1132 = vmul.f32 %v1130, 1.442695
        %v1133 = vpow.pop %v1132
        %v1134 = vmul.f32 %v1131, 1.442695
        %v1135 = vpow.pop %v1134
        %v1136 = vsel %vm800, %v1133, 0.0
        %1137 = vadd.xlane.f32.xlu0 %v1136
        %v1138 = vpop.xlane.xlu0 %1137
        %v1139 = vsel %vm800, %v1135, 0.0
        %1140 = vadd.xlane.f32.xlu0 %v1139
        %v1141 = vpop.xlane.xlu0 %1140
        %v1142 = vrcp.pop %v1138
        %v1143 = vrcp.pop %v1141
        %v1144 = vmul.f32 %v1133, %v1142
        %v1145 = vmul.f32 %v1135, %v1143
        %1146 = vrot.lane.b32.xlu0 %v792, 48
        %v1147 = vpop.permute.xlu0 %1146
        %v1150 = vsel %vm800, %v1144, 0
        %1152 = vmatpush.msra.mxu0 0.0
        %1153 = vmatpush.msra.mxu0 0.0
        %1154 = vmatpush.msra.mxu0 0.0
        %1155 = vmatpush.msra.mxu0 0.0
        %1156 = vmatpush.msra.mxu0 0.0
        %1157 = vmatpush.msra.mxu0 0.0
        %1158 = vmatpush.msra.mxu0 0.0
        %1159 = vmatpush.msra.mxu0 0.0
        %1160 = vmatpush.msra.mxu0 0.0
        %1161 = vmatpush.msra.mxu0 0.0
        %1162 = vmatpush.msra.mxu0 0.0
        %1163 = vmatpush.msra.mxu0 0.0
        %1164 = vmatpush.msra.mxu0 0.0
        %1165 = vmatpush.msra.mxu0 0.0
        %1166 = vmatpush.msra.mxu0 0.0
        %1167 = vmatpush.msra.mxu0 %v1147
        %1168 = vmatmul.f32.gmra.mxu0 %v1150
        %v1169 = vpop.f32.mrf.mxu0
        %v1170 = vadd.f32 0.0, %v1169
        %1171 = vdwg.mxu0
        %1172 = vrot.lane.b32.xlu0 %v795, 48
        %v1173 = vpop.permute.xlu0 %1172
        %v1176 = vsel %vm800, %v1145, 0
        %1178 = vmatpush.msra.mxu0 0.0
        %1179 = vmatpush.msra.mxu0 0.0
        %1180 = vmatpush.msra.mxu0 0.0
        %1181 = vmatpush.msra.mxu0 0.0
        %1182 = vmatpush.msra.mxu0 0.0
        %1183 = vmatpush.msra.mxu0 0.0
        %1184 = vmatpush.msra.mxu0 0.0
        %1185 = vmatpush.msra.mxu0 0.0
        %1186 = vmatpush.msra.mxu0 0.0
        %1187 = vmatpush.msra.mxu0 0.0
        %1188 = vmatpush.msra.mxu0 0.0
        %1189 = vmatpush.msra.mxu0 0.0
        %1190 = vmatpush.msra.mxu0 0.0
        %1191 = vmatpush.msra.mxu0 0.0
        %1192 = vmatpush.msra.mxu0 0.0
        %1193 = vmatpush.msra.mxu0 %v1173
        %1194 = vmatmul.f32.gmra.mxu0 %v1176
        %v1195 = vpop.f32.mrf.mxu0
        %v1196 = vadd.f32 0.0, %v1195
        %1197 = vdwg.mxu0
        %1198 = vrot.lane.b32.xlu0 %v792, 104
        %v1199 = vpop.permute.xlu0 %1198
        %1200 = vrot.lane.b32.xlu0 %v792, 72
        %v1201 = vpop.permute.xlu0 %1200
        %v1202 = vsel %vm800, %v1199, 0
        %v1204 = vsel %vm800, %v1201, 0
        %1206 = vmatpush.xpose.msra.mxu0 0.0
        %1207 = vmatpush.xpose.msra.mxu0 0.0
        %1208 = vmatpush.xpose.msra.mxu0 0.0
        %1209 = vmatpush.xpose.msra.mxu0 0.0
        %1210 = vmatpush.xpose.msra.mxu0 0.0
        %1211 = vmatpush.xpose.msra.mxu0 0.0
        %1212 = vmatpush.xpose.msra.mxu0 0.0
        %1213 = vmatpush.xpose.msra.mxu0 0.0
        %1214 = vmatpush.xpose.msra.mxu0 0.0
        %1215 = vmatpush.xpose.msra.mxu0 0.0
        %1216 = vmatpush.xpose.msra.mxu0 0.0
        %1217 = vmatpush.xpose.msra.mxu0 0.0
        %1218 = vmatpush.xpose.msra.mxu0 0.0
        %1219 = vmatpush.xpose.msra.mxu0 0.0
        %1220 = vmatpush.xpose.msra.mxu0 0.0
        %1221 = vmatpush.xpose.msra.mxu0 %v1204
        %1222 = vmatmul.f32.gmra.mxu0 %v1202
        %v1223 = vpop.f32.mrf.mxu0
        %v1224 = vadd.f32 0.0, %v1223
        %1225 = vdwg.mxu0
        %1226 = vrot.lane.b32.xlu0 %v795, 104
        %v1227 = vpop.permute.xlu0 %1226
        %1228 = vrot.lane.b32.xlu0 %v795, 72
        %v1229 = vpop.permute.xlu0 %1228
        %v1230 = vsel %vm800, %v1227, 0
        %v1232 = vsel %vm800, %v1229, 0
        %1234 = vmatpush.xpose.msra.mxu0 0.0
        %1235 = vmatpush.xpose.msra.mxu0 0.0
        %1236 = vmatpush.xpose.msra.mxu0 0.0
        %1237 = vmatpush.xpose.msra.mxu0 0.0
        %1238 = vmatpush.xpose.msra.mxu0 0.0
        %1239 = vmatpush.xpose.msra.mxu0 0.0
        %1240 = vmatpush.xpose.msra.mxu0 0.0
        %1241 = vmatpush.xpose.msra.mxu0 0.0
        %1242 = vmatpush.xpose.msra.mxu0 0.0
        %1243 = vmatpush.xpose.msra.mxu0 0.0
        %1244 = vmatpush.xpose.msra.mxu0 0.0
        %1245 = vmatpush.xpose.msra.mxu0 0.0
        %1246 = vmatpush.xpose.msra.mxu0 0.0
        %1247 = vmatpush.xpose.msra.mxu0 0.0
        %1248 = vmatpush.xpose.msra.mxu0 0.0
        %1249 = vmatpush.xpose.msra.mxu0 %v1232
        %1250 = vmatmul.f32.gmra.mxu0 %v1230
        %v1251 = vpop.f32.mrf.mxu0
        %v1252 = vadd.f32 0.0, %v1251
        %1253 = vdwg.mxu0
        %v1254 = vmul.f32 %v1224, 0.35355338
        %v1255 = vmul.f32 %v1252, 0.35355338
        %v1256 = vadd.f32 %v1254, %v751
        %v1257 = vadd.f32 %v1255, %v752
        %v1258 = vsel %vm800, %v1256, -inf
        %1259 = vmax.xlane.f32.xlu0 %v1258
        %v1260 = vpop.xlane.xlu0 %1259
        %v1261 = vsel %vm800, %v1257, -inf
        %1262 = vmax.xlane.f32.xlu0 %v1261
        %v1263 = vpop.xlane.xlu0 %1262
        %v1264 = vsub.f32 %v1256, %v1260
        %v1265 = vsub.f32 %v1257, %v1263
        %v1266 = vmul.f32 %v1264, 1.442695
        %v1267 = vpow.pop %v1266
        %v1268 = vmul.f32 %v1265, 1.442695
        %v1269 = vpow.pop %v1268
        %v1270 = vsel %vm800, %v1267, 0.0
        %1271 = vadd.xlane.f32.xlu0 %v1270
        %v1272 = vpop.xlane.xlu0 %1271
        %v1273 = vsel %vm800, %v1269, 0.0
        %1274 = vadd.xlane.f32.xlu0 %v1273
        %v1275 = vpop.xlane.xlu0 %1274
        %v1276 = vrcp.pop %v1272
        %v1277 = vrcp.pop %v1275
        %v1278 = vmul.f32 %v1267, %v1276
        %v1279 = vmul.f32 %v1269, %v1277
        %1280 = vrot.lane.b32.xlu0 %v792, 40
        %v1281 = vpop.permute.xlu0 %1280
        %v1284 = vsel %vm800, %v1278, 0
        %1286 = vmatpush.msra.mxu0 0.0
        %1287 = vmatpush.msra.mxu0 0.0
        %1288 = vmatpush.msra.mxu0 0.0
        %1289 = vmatpush.msra.mxu0 0.0
        %1290 = vmatpush.msra.mxu0 0.0
        %1291 = vmatpush.msra.mxu0 0.0
        %1292 = vmatpush.msra.mxu0 0.0
        %1293 = vmatpush.msra.mxu0 0.0
        %1294 = vmatpush.msra.mxu0 0.0
        %1295 = vmatpush.msra.mxu0 0.0
        %1296 = vmatpush.msra.mxu0 0.0
        %1297 = vmatpush.msra.mxu0 0.0
        %1298 = vmatpush.msra.mxu0 0.0
        %1299 = vmatpush.msra.mxu0 0.0
        %1300 = vmatpush.msra.mxu0 0.0
        %1301 = vmatpush.msra.mxu0 %v1281
        %1302 = vmatmul.f32.gmra.mxu0 %v1284
        %v1303 = vpop.f32.mrf.mxu0
        %v1304 = vadd.f32 0.0, %v1303
        %1305 = vdwg.mxu0
        %1306 = vrot.lane.b32.xlu0 %v795, 40
        %v1307 = vpop.permute.xlu0 %1306
        %v1310 = vsel %vm800, %v1279, 0
        %1312 = vmatpush.msra.mxu0 0.0
        %1313 = vmatpush.msra.mxu0 0.0
        %1314 = vmatpush.msra.mxu0 0.0
        %1315 = vmatpush.msra.mxu0 0.0
        %1316 = vmatpush.msra.mxu0 0.0
        %1317 = vmatpush.msra.mxu0 0.0
        %1318 = vmatpush.msra.mxu0 0.0
        %1319 = vmatpush.msra.mxu0 0.0
        %1320 = vmatpush.msra.mxu0 0.0
        %1321 = vmatpush.msra.mxu0 0.0
        %1322 = vmatpush.msra.mxu0 0.0
        %1323 = vmatpush.msra.mxu0 0.0
        %1324 = vmatpush.msra.mxu0 0.0
        %1325 = vmatpush.msra.mxu0 0.0
        %1326 = vmatpush.msra.mxu0 0.0
        %1327 = vmatpush.msra.mxu0 %v1307
        %1328 = vmatmul.f32.gmra.mxu0 %v1310
        %v1329 = vpop.f32.mrf.mxu0
        %v1330 = vadd.f32 0.0, %v1329
        %1331 = vdwg.mxu0
        %1334 = vrot.lane.b32.xlu0 %v1036, 8
        %v1335 = vpop.permute.xlu0 %1334
        %1336 = vrot.lane.b32.xlu0 %v1062, 8
        %v1337 = vpop.permute.xlu0 %1336
        %1342 = vrot.lane.b32.xlu0 %v1170, 16
        %v1343 = vpop.permute.xlu0 %1342
        %1344 = vrot.lane.b32.xlu0 %v1196, 16
        %v1345 = vpop.permute.xlu0 %1344
        %1350 = vrot.lane.b32.xlu0 %v1304, 24
        %v1351 = vpop.permute.xlu0 %1350
        %1352 = vrot.lane.b32.xlu0 %v1330, 24
        %v1353 = vpop.permute.xlu0 %1352
        %v1356 = vsel %vm800, %v902, %v1335
        %v1357 = vsel %vm800, %v928, %v1337
        %vm1358 = vcmask 130048
        %v1359 = vsel %vm1358, %v1356, %v1343
        %v1360 = vsel %vm1358, %v1357, %v1345
        %vm1361 = vcmask 195584
        %v1362 = vsel %vm1361, %v1359, %v1351
        %v1363 = vsel %vm1361, %v1360, %v1353
        %v1364 = vld [vmem:[#allocation10] sm:$0x1]
        %v1366 = vperm.slane %v1364, 0
        %v1369 = vsel %vm683, %v1362, 0
        %v1372 = vsel %vm683, %v1363, 0
        %1374 = vmatpush.msra.mxu0 0.0
        %1375 = vmatpush.msra.mxu0 0.0
        %1376 = vmatpush.msra.mxu0 0.0
        %1377 = vmatpush.msra.mxu0 0.0
        %1378 = vmatpush.msra.mxu0 0.0
        %1379 = vmatpush.msra.mxu0 0.0
        %1380 = vmatpush.msra.mxu0 0.0
        %1381 = vmatpush.msra.mxu0 0.0
        %1382 = vmatpush.msra.mxu0 0.0
        %1383 = vmatpush.msra.mxu0 0.0
        %1384 = vmatpush.msra.mxu0 0.0
        %1385 = vmatpush.msra.mxu0 0.0
        %1386 = vmatpush.msra.mxu0 %v762
        %1387 = vmatpush.msra.mxu0 %v761
        %1388 = vmatpush.msra.mxu0 %v760
        %1389 = vmatpush.msra.mxu0 %v759
        %1390 = vmatmul.f32.gmra.mxu0 %v1369
        %v1391 = vpop.f32.mrf.mxu0
        %v1392 = vadd.f32 %v1366, %v1391
        %1393 = vmatmul.f32.gmra.mxu0 %v1372
        %v1394 = vpop.f32.mrf.mxu0
        %v1395 = vadd.f32 %v1366, %v1394
        %1396 = vdwg.mxu0
        %v1397 = vadd.f32 %v1392, %v745
        %v1398 = vadd.f32 %v1395, %v746
        %v1399 = vsel %vm683, %v1397, 0.0
        %1400 = vadd.xlane.f32.xlu0 %v1399
        %v1401 = vpop.xlane.xlu0 %1400
        %v1402 = vsel %vm683, %v1398, 0.0
        %1403 = vadd.xlane.f32.xlu0 %v1402
        %v1404 = vpop.xlane.xlu0 %1403
        %v1405 = vmul.f32 %v1401, %v696
        %v1406 = vmul.f32 %v1404, %v696
        %v1407 = vmul.f32 %v1397, %v1397
        %v1408 = vmul.f32 %v1398, %v1398
        %v1409 = vsel %vm683, %v1407, 0.0
        %1410 = vadd.xlane.f32.xlu0 %v1409
        %v1411 = vpop.xlane.xlu0 %1410
        %v1412 = vsel %vm683, %v1408, 0.0
        %1413 = vadd.xlane.f32.xlu0 %v1412
        %v1414 = vpop.xlane.xlu0 %1413
        %v1415 = vmul.f32 %v1411, %v696
        %v1416 = vmul.f32 %v1414, %v696
        %v1417 = vmul.f32 %v1405, %v1405
        %v1418 = vmul.f32 %v1406, %v1406
        %v1419 = vsub.f32 %v1415, %v1417
        %v1420 = vsub.f32 %v1416, %v1418
        %v1421 = vmax.f32 %v1419, 0.0
        %v1422 = vmax.f32 %v1420, 0.0
        %v1423 = vsub.f32 %v1397, %v1405
        %v1424 = vsub.f32 %v1398, %v1406
        %v1425 = vadd.f32 %v1421, 1e-12
        %v1426 = vadd.f32 %v1422, 1e-12
        %v1427 = vrsqrt.pop %v1425
        %v1428 = vmul.f32 %v1427, %v1425
        %v1429 = vmul.f32 %v1428, %v1427
        %v1430 = vmul.f32 0.5, %v1429
        %v1431 = vsub.f32 1.5, %v1430
        %v1432 = vmul.f32 %v1427, %v1431
        %vm1433 = vweird.f32 %v1425
        %vm1434 = vweird.f32 %v1427
        %vm1435 = vmor %vm1433, %vm1434
        %v1436 = vsel %vm1435, %v1427, %v1432
        %v1437 = vrsqrt.pop %v1426
        %v1438 = vmul.f32 %v1437, %v1426
        %v1439 = vmul.f32 %v1438, %v1437
        %v1440 = vmul.f32 0.5, %v1439
        %v1441 = vsub.f32 1.5, %v1440
        %v1442 = vmul.f32 %v1437, %v1441
        %vm1443 = vweird.f32 %v1426
        %vm1444 = vweird.f32 %v1437
        %vm1445 = vmor %vm1443, %vm1444
        %v1446 = vsel %vm1445, %v1437, %v1442
        %v1447 = vmul.f32 %v1423, %v1436
        %v1448 = vmul.f32 %v1424, %v1446
        %v1449 = vperm.slane %v763, 0
        %v1450 = vmul.f32 %v1447, %v1449
        %v1451 = vmul.f32 %v1448, %v1449
        %v1452 = vperm.slane %v763, 1
        %v1453 = vadd.f32 %v1450, %v1452
        %v1454 = vadd.f32 %v1451, %v1452
        %v1455 = vld [vmem:[%s8] sm:$0xff]
        %v1456 = vld [vmem:[%s8 + $0x8] sm:$0xff]
        %v1457 = vld [vmem:[%s8 + $0x10] sm:$0xff]
        %v1458 = vld [vmem:[%s8 + $0x18] sm:$0xff]
        %v1459 = vld [vmem:[%s10] sm:$0xff]
        %v1460 = vld [vmem:[%s10 + $0x8] sm:$0xff]
        %v1461 = vld [vmem:[%s10 + $0x10] sm:$0xff]
        %v1462 = vld [vmem:[%s10 + $0x18] sm:$0xff]
        %v1463 = vld [vmem:[%s10 + $0x20] sm:$0xff]
        %v1464 = vld [vmem:[%s10 + $0x28] sm:$0xff]
        %v1465 = vld [vmem:[%s10 + $0x30] sm:$0xff]
        %v1466 = vld [vmem:[%s10 + $0x38] sm:$0xff]
        %v1467 = vld [vmem:[%s9] sm:$0x1]
        %v1469 = vperm.slane %v1467, 0
        %v1472 = vsel %vm683, %v1453, 0
        %v1475 = vsel %vm683, %v1454, 0
        %1477 = vmatpush.msra.mxu0 0.0
        %1478 = vmatpush.msra.mxu0 0.0
        %1479 = vmatpush.msra.mxu0 0.0
        %1480 = vmatpush.msra.mxu0 0.0
        %1481 = vmatpush.msra.mxu0 0.0
        %1482 = vmatpush.msra.mxu0 0.0
        %1483 = vmatpush.msra.mxu0 0.0
        %1484 = vmatpush.msra.mxu0 0.0
        %1485 = vmatpush.msra.mxu0 0.0
        %1486 = vmatpush.msra.mxu0 0.0
        %1487 = vmatpush.msra.mxu0 0.0
        %1488 = vmatpush.msra.mxu0 0.0
        %1489 = vmatpush.msra.mxu0 %v1458
        %1490 = vmatpush.msra.mxu0 %v1457
        %1491 = vmatpush.msra.mxu0 %v1456
        %1492 = vmatpush.msra.mxu0 %v1455
        %1493 = vmatmul.f32.gmra.mxu0 %v1472
        %v1494 = vpop.f32.mrf.mxu0
        %v1495 = vadd.f32 %v1469, %v1494
        %1496 = vmatmul.f32.gmra.mxu0 %v1475
        %v1497 = vpop.f32.mrf.mxu0
        %v1498 = vadd.f32 %v1469, %v1497
        %1499 = vdwg.mxu0
        %v1500 = vmul.f32 %v1495, %v1495
        %v1501 = vmul.f32 %v1498, %v1498
        %v1502 = vmul.f32 %v1495, %v1500
        %v1503 = vmul.f32 %v1498, %v1501
        %v1504 = vmul.f32 %v1502, 0.044715
        %v1505 = vmul.f32 %v1503, 0.044715
        %v1506 = vadd.f32 %v1495, %v1504
        %v1507 = vadd.f32 %v1498, %v1505
        %v1508 = vmul.f32 %v1506, 0.7978846
        %v1509 = vmul.f32 %v1507, 0.7978846
        %v1510 = vtanh.pop %v1508
        %v1511 = vtanh.pop %v1509
        %v1512 = vadd.f32 %v1510, 1.0
        %v1513 = vadd.f32 %v1511, 1.0
        %v1514 = vmul.f32 %v1512, 0.5
        %v1515 = vmul.f32 %v1513, 0.5
        %v1516 = vmul.f32 %v1495, %v1514
        %v1517 = vmul.f32 %v1498, %v1515
        %v1518 = vld [vmem:[%s11] sm:$0x1]
        %v1520 = vperm.slane %v1518, 0
        %vm1522 = vcmask 523264
        %v1524 = vsel %vm1522, %v1516, 0
        %v1527 = vsel %vm1522, %v1517, 0
        %1529 = vmatpush.msra.mxu0 0.0
        %1530 = vmatpush.msra.mxu0 0.0
        %1531 = vmatpush.msra.mxu0 0.0
        %1532 = vmatpush.msra.mxu0 0.0
        %1533 = vmatpush.msra.mxu0 0.0
        %1534 = vmatpush.msra.mxu0 0.0
        %1535 = vmatpush.msra.mxu0 0.0
        %1536 = vmatpush.msra.mxu0 0.0
        %1537 = vmatpush.msra.mxu0 %v1466
        %1538 = vmatpush.msra.mxu0 %v1465
        %1539 = vmatpush.msra.mxu0 %v1464
        %1540 = vmatpush.msra.mxu0 %v1463
        %1541 = vmatpush.msra.mxu0 %v1462
        %1542 = vmatpush.msra.mxu0 %v1461
        %1543 = vmatpush.msra.mxu0 %v1460
        %1544 = vmatpush.msra.mxu0 %v1459
        %1545 = vmatmul.f32.gmra.mxu0 %v1524
        %v1546 = vpop.f32.mrf.mxu0
        %v1547 = vadd.f32 %v1520, %v1546
        %1548 = vmatmul.f32.gmra.mxu0 %v1527
        %v1549 = vpop.f32.mrf.mxu0
        %v1550 = vadd.f32 %v1520, %v1549
        %1551 = vdwg.mxu0
        %v1552 = vadd.f32 %v1547, %v1453
        %v1553 = vadd.f32 %v1550, %v1454
        %v1554 = vsel %vm683, %v1552, 0.0
        %1555 = vadd.xlane.f32.xlu0 %v1554
        %v1556 = vpop.xlane.xlu0 %1555
        %v1557 = vsel %vm683, %v1553, 0.0
        %1558 = vadd.xlane.f32.xlu0 %v1557
        %v1559 = vpop.xlane.xlu0 %1558
        %v1560 = vmul.f32 %v1556, %v696
        %v1561 = vmul.f32 %v1559, %v696
        %v1562 = vmul.f32 %v1552, %v1552
        %v1563 = vmul.f32 %v1553, %v1553
        %v1564 = vsel %vm683, %v1562, 0.0
        %1565 = vadd.xlane.f32.xlu0 %v1564
        %v1566 = vpop.xlane.xlu0 %1565
        %v1567 = vsel %vm683, %v1563, 0.0
        %1568 = vadd.xlane.f32.xlu0 %v1567
        %v1569 = vpop.xlane.xlu0 %1568
        %v1570 = vmul.f32 %v1566, %v696
        %v1571 = vmul.f32 %v1569, %v696
        %v1572 = vmul.f32 %v1560, %v1560
        %v1573 = vmul.f32 %v1561, %v1561
        %v1574 = vsub.f32 %v1570, %v1572
        %v1575 = vsub.f32 %v1571, %v1573
        %v1576 = vmax.f32 %v1574, 0.0
        %v1577 = vmax.f32 %v1575, 0.0
        %v1578 = vsub.f32 %v1552, %v1560
        %v1579 = vsub.f32 %v1553, %v1561
        %v1580 = vadd.f32 %v1576, 1e-12
        %v1581 = vadd.f32 %v1577, 1e-12
        %v1582 = vrsqrt.pop %v1580
        %v1583 = vmul.f32 %v1582, %v1580
        %v1584 = vmul.f32 %v1583, %v1582
        %v1585 = vmul.f32 0.5, %v1584
        %v1586 = vsub.f32 1.5, %v1585
        %v1587 = vmul.f32 %v1582, %v1586
        %vm1588 = vweird.f32 %v1580
        %vm1589 = vweird.f32 %v1582
        %vm1590 = vmor %vm1588, %vm1589
        %v1591 = vsel %vm1590, %v1582, %v1587
        %v1592 = vrsqrt.pop %v1581
        %v1593 = vmul.f32 %v1592, %v1581
        %v1594 = vmul.f32 %v1593, %v1592
        %v1595 = vmul.f32 0.5, %v1594
        %v1596 = vsub.f32 1.5, %v1595
        %v1597 = vmul.f32 %v1592, %v1596
        %vm1598 = vweird.f32 %v1581
        %vm1599 = vweird.f32 %v1592
        %vm1600 = vmor %vm1598, %vm1599
        %v1601 = vsel %vm1600, %v1592, %v1597
        %v1602 = vmul.f32 %v1578, %v1591
        %v1603 = vmul.f32 %v1579, %v1601
        %v1604 = vperm.slane %v763, 2
        %v1605 = vmul.f32 %v1602, %v1604
        %v1606 = vmul.f32 %v1603, %v1604
        %v1607 = vperm.slane %v763, 3
        %v1608 = vadd.f32 %v1605, %v1607
        %v1609 = vadd.f32 %v1606, %v1607
        %s1610 = scalar_lea.vmem %s3, 32
        %v1611 = vld [vmem:[%s1610] sm:$0xff]
        %v1612 = vld [vmem:[%s1610 + $0x8] sm:$0xff]
        %v1613 = vld [vmem:[%s1610 + $0x10] sm:$0xff]
        %v1614 = vld [vmem:[%s1610 + $0x18] sm:$0xff]
        %s1615 = scalar_lea.vmem %s5, 32
        %v1616 = vld [vmem:[%s1615] sm:$0xff]
        %v1617 = vld [vmem:[%s1615 + $0x8] sm:$0xff]
        %v1618 = vld [vmem:[%s1615 + $0x10] sm:$0xff]
        %v1619 = vld [vmem:[%s1615 + $0x18] sm:$0xff]
        %s1620 = scalar_lea.vmem [#allocation11], 4
        %v1621 = vld [vmem:[%s1620] sm:$0xf]
        %s1622 = scalar_lea.vmem [#allocation8], 1
        %v1623 = vld [vmem:[%s1622] sm:$0x1]
        %v1625 = vperm.slane %v1623, 0
        %v1628 = vsel %vm683, %v1608, 0
        %v1631 = vsel %vm683, %v1609, 0
        %1633 = vmatpush.msra.mxu0 0.0
        %1634 = vmatpush.msra.mxu0 0.0
        %1635 = vmatpush.msra.mxu0 0.0
        %1636 = vmatpush.msra.mxu0 0.0
        %1637 = vmatpush.msra.mxu0 0.0
        %1638 = vmatpush.msra.mxu0 0.0
        %1639 = vmatpush.msra.mxu0 0.0
        %1640 = vmatpush.msra.mxu0 0.0
        %1641 = vmatpush.msra.mxu0 0.0
        %1642 = vmatpush.msra.mxu0 0.0
        %1643 = vmatpush.msra.mxu0 0.0
        %1644 = vmatpush.msra.mxu0 0.0
        %1645 = vmatpush.msra.mxu0 %v1614
        %1646 = vmatpush.msra.mxu0 %v1613
        %1647 = vmatpush.msra.mxu0 %v1612
        %1648 = vmatpush.msra.mxu0 %v1611
        %1649 = vmatmul.f32.gmra.mxu0 %v1628
        %v1650 = vpop.f32.mrf.mxu0
        %v1651 = vadd.f32 %v1625, %v1650
        %1652 = vmatmul.f32.gmra.mxu0 %v1631
        %v1653 = vpop.f32.mrf.mxu0
        %v1654 = vadd.f32 %v1625, %v1653
        %1655 = vdwg.mxu0
        %1657 = vrot.lane.b32.xlu0 %v1651, 96
        %v1658 = vpop.permute.xlu0 %1657
        %v1659 = vsel %vm800, %v1651, 0
        %v1661 = vsel %vm800, %v1658, 0
        %1663 = vmatpush.xpose.msra.mxu0 0.0
        %1664 = vmatpush.xpose.msra.mxu0 0.0
        %1665 = vmatpush.xpose.msra.mxu0 0.0
        %1666 = vmatpush.xpose.msra.mxu0 0.0
        %1667 = vmatpush.xpose.msra.mxu0 0.0
        %1668 = vmatpush.xpose.msra.mxu0 0.0
        %1669 = vmatpush.xpose.msra.mxu0 0.0
        %1670 = vmatpush.xpose.msra.mxu0 0.0
        %1671 = vmatpush.xpose.msra.mxu0 0.0
        %1672 = vmatpush.xpose.msra.mxu0 0.0
        %1673 = vmatpush.xpose.msra.mxu0 0.0
        %1674 = vmatpush.xpose.msra.mxu0 0.0
        %1675 = vmatpush.xpose.msra.mxu0 0.0
        %1676 = vmatpush.xpose.msra.mxu0 0.0
        %1677 = vmatpush.xpose.msra.mxu0 0.0
        %1678 = vmatpush.xpose.msra.mxu0 %v1661
        %1679 = vmatmul.f32.gmra.mxu0 %v1659
        %v1680 = vpop.f32.mrf.mxu0
        %v1681 = vadd.f32 0.0, %v1680
        %1682 = vdwg.mxu0
        %1684 = vrot.lane.b32.xlu0 %v1654, 96
        %v1685 = vpop.permute.xlu0 %1684
        %v1686 = vsel %vm800, %v1654, 0
        %v1688 = vsel %vm800, %v1685, 0
        %1690 = vmatpush.xpose.msra.mxu0 0.0
        %1691 = vmatpush.xpose.msra.mxu0 0.0
        %1692 = vmatpush.xpose.msra.mxu0 0.0
        %1693 = vmatpush.xpose.msra.mxu0 0.0
        %1694 = vmatpush.xpose.msra.mxu0 0.0
        %1695 = vmatpush.xpose.msra.mxu0 0.0
        %1696 = vmatpush.xpose.msra.mxu0 0.0
        %1697 = vmatpush.xpose.msra.mxu0 0.0
        %1698 = vmatpush.xpose.msra.mxu0 0.0
        %1699 = vmatpush.xpose.msra.mxu0 0.0
        %1700 = vmatpush.xpose.msra.mxu0 0.0
        %1701 = vmatpush.xpose.msra.mxu0 0.0
        %1702 = vmatpush.xpose.msra.mxu0 0.0
        %1703 = vmatpush.xpose.msra.mxu0 0.0
        %1704 = vmatpush.xpose.msra.mxu0 0.0
        %1705 = vmatpush.xpose.msra.mxu0 %v1688
        %1706 = vmatmul.f32.gmra.mxu0 %v1686
        %v1707 = vpop.f32.mrf.mxu0
        %v1708 = vadd.f32 0.0, %v1707
        %1709 = vdwg.mxu0
        %v1710 = vmul.f32 %v1681, 0.35355338
        %v1711 = vmul.f32 %v1708, 0.35355338
        %v1712 = vadd.f32 %v1710, %v751
        %v1713 = vadd.f32 %v1711, %v752
        %v1714 = vsel %vm800, %v1712, -inf
        %1715 = vmax.xlane.f32.xlu0 %v1714
        %v1716 = vpop.xlane.xlu0 %1715
        %v1717 = vsel %vm800, %v1713, -inf
        %1718 = vmax.xlane.f32.xlu0 %v1717
        %v1719 = vpop.xlane.xlu0 %1718
        %v1720 = vsub.f32 %v1712, %v1716
        %v1721 = vsub.f32 %v1713, %v1719
        %v1722 = vmul.f32 %v1720, 1.442695
        %v1723 = vpow.pop %v1722
        %v1724 = vmul.f32 %v1721, 1.442695
        %v1725 = vpow.pop %v1724
        %v1726 = vsel %vm800, %v1723, 0.0
        %1727 = vadd.xlane.f32.xlu0 %v1726
        %v1728 = vpop.xlane.xlu0 %1727
        %v1729 = vsel %vm800, %v1725, 0.0
        %1730 = vadd.xlane.f32.xlu0 %v1729
        %v1731 = vpop.xlane.xlu0 %1730
        %v1732 = vrcp.pop %v1728
        %v1733 = vrcp.pop %v1731
        %v1734 = vmul.f32 %v1723, %v1732
        %v1735 = vmul.f32 %v1725, %v1733
        %1736 = vrot.lane.b32.xlu0 %v1651, 64
        %v1737 = vpop.permute.xlu0 %1736
        %v1740 = vsel %vm800, %v1734, 0
        %1742 = vmatpush.msra.mxu0 0.0
        %1743 = vmatpush.msra.mxu0 0.0
        %1744 = vmatpush.msra.mxu0 0.0
        %1745 = vmatpush.msra.mxu0 0.0
        %1746 = vmatpush.msra.mxu0 0.0
        %1747 = vmatpush.msra.mxu0 0.0
        %1748 = vmatpush.msra.mxu0 0.0
        %1749 = vmatpush.msra.mxu0 0.0
        %1750 = vmatpush.msra.mxu0 0.0
        %1751 = vmatpush.msra.mxu0 0.0
        %1752 = vmatpush.msra.mxu0 0.0
        %1753 = vmatpush.msra.mxu0 0.0
        %1754 = vmatpush.msra.mxu0 0.0
        %1755 = vmatpush.msra.mxu0 0.0
        %1756 = vmatpush.msra.mxu0 0.0
        %1757 = vmatpush.msra.mxu0 %v1737
        %1758 = vmatmul.f32.gmra.mxu0 %v1740
        %v1759 = vpop.f32.mrf.mxu0
        %v1760 = vadd.f32 0.0, %v1759
        %1761 = vdwg.mxu0
        %1762 = vrot.lane.b32.xlu0 %v1654, 64
        %v1763 = vpop.permute.xlu0 %1762
        %v1766 = vsel %vm800, %v1735, 0
        %1768 = vmatpush.msra.mxu0 0.0
        %1769 = vmatpush.msra.mxu0 0.0
        %1770 = vmatpush.msra.mxu0 0.0
        %1771 = vmatpush.msra.mxu0 0.0
        %1772 = vmatpush.msra.mxu0 0.0
        %1773 = vmatpush.msra.mxu0 0.0
        %1774 = vmatpush.msra.mxu0 0.0
        %1775 = vmatpush.msra.mxu0 0.0
        %1776 = vmatpush.msra.mxu0 0.0
        %1777 = vmatpush.msra.mxu0 0.0
        %1778 = vmatpush.msra.mxu0 0.0
        %1779 = vmatpush.msra.mxu0 0.0
        %1780 = vmatpush.msra.mxu0 0.0
        %1781 = vmatpush.msra.mxu0 0.0
        %1782 = vmatpush.msra.mxu0 0.0
        %1783 = vmatpush.msra.mxu0 %v1763
        %1784 = vmatmul.f32.gmra.mxu0 %v1766
        %v1785 = vpop.f32.mrf.mxu0
        %v1786 = vadd.f32 0.0, %v1785
        %1787 = vdwg.mxu0
        %1788 = vrot.lane.b32.xlu0 %v1651, 120
        %v1789 = vpop.permute.xlu0 %1788
        %1790 = vrot.lane.b32.xlu0 %v1651, 88
        %v1791 = vpop.permute.xlu0 %1790
        %v1792 = vsel %vm800, %v1789, 0
        %v1794 = vsel %vm800, %v1791, 0
        %1796 = vmatpush.xpose.msra.mxu0 0.0
        %1797 = vmatpush.xpose.msra.mxu0 0.0
        %1798 = vmatpush.xpose.msra.mxu0 0.0
        %1799 = vmatpush.xpose.msra.mxu0 0.0
        %1800 = vmatpush.xpose.msra.mxu0 0.0
        %1801 = vmatpush.xpose.msra.mxu0 0.0
        %1802 = vmatpush.xpose.msra.mxu0 0.0
        %1803 = vmatpush.xpose.msra.mxu0 0.0
        %1804 = vmatpush.xpose.msra.mxu0 0.0
        %1805 = vmatpush.xpose.msra.mxu0 0.0
        %1806 = vmatpush.xpose.msra.mxu0 0.0
        %1807 = vmatpush.xpose.msra.mxu0 0.0
        %1808 = vmatpush.xpose.msra.mxu0 0.0
        %1809 = vmatpush.xpose.msra.mxu0 0.0
        %1810 = vmatpush.xpose.msra.mxu0 0.0
        %1811 = vmatpush.xpose.msra.mxu0 %v1794
        %1812 = vmatmul.f32.gmra.mxu0 %v1792
        %v1813 = vpop.f32.mrf.mxu0
        %v1814 = vadd.f32 0.0, %v1813
        %1815 = vdwg.mxu0
        %1816 = vrot.lane.b32.xlu0 %v1654, 120
        %v1817 = vpop.permute.xlu0 %1816
        %1818 = vrot.lane.b32.xlu0 %v1654, 88
        %v1819 = vpop.permute.xlu0 %1818
        %v1820 = vsel %vm800, %v1817, 0
        %v1822 = vsel %vm800, %v1819, 0
        %1824 = vmatpush.xpose.msra.mxu0 0.0
        %1825 = vmatpush.xpose.msra.mxu0 0.0
        %1826 = vmatpush.xpose.msra.mxu0 0.0
        %1827 = vmatpush.xpose.msra.mxu0 0.0
        %1828 = vmatpush.xpose.msra.mxu0 0.0
        %1829 = vmatpush.xpose.msra.mxu0 0.0
        %1830 = vmatpush.xpose.msra.mxu0 0.0
        %1831 = vmatpush.xpose.msra.mxu0 0.0
        %1832 = vmatpush.xpose.msra.mxu0 0.0
        %1833 = vmatpush.xpose.msra.mxu0 0.0
        %1834 = vmatpush.xpose.msra.mxu0 0.0
        %1835 = vmatpush.xpose.msra.mxu0 0.0
        %1836 = vmatpush.xpose.msra.mxu0 0.0
        %1837 = vmatpush.xpose.msra.mxu0 0.0
        %1838 = vmatpush.xpose.msra.mxu0 0.0
        %1839 = vmatpush.xpose.msra.mxu0 %v1822
        %1840 = vmatmul.f32.gmra.mxu0 %v1820
        %v1841 = vpop.f32.mrf.mxu0
        %v1842 = vadd.f32 0.0, %v1841
        %1843 = vdwg.mxu0
        %v1844 = vmul.f32 %v1814, 0.35355338
        %v1845 = vmul.f32 %v1842, 0.35355338
        %v1846 = vadd.f32 %v1844, %v751
        %v1847 = vadd.f32 %v1845, %v752
        %v1848 = vsel %vm800, %v1846, -inf
        %1849 = vmax.xlane.f32.xlu0 %v1848
        %v1850 = vpop.xlane.xlu0 %1849
        %v1851 = vsel %vm800, %v1847, -inf
        %1852 = vmax.xlane.f32.xlu0 %v1851
        %v1853 = vpop.xlane.xlu0 %1852
        %v1854 = vsub.f32 %v1846, %v1850
        %v1855 = vsub.f32 %v1847, %v1853
        %v1856 = vmul.f32 %v1854, 1.442695
        %v1857 = vpow.pop %v1856
        %v1858 = vmul.f32 %v1855, 1.442695
        %v1859 = vpow.pop %v1858
        %v1860 = vsel %vm800, %v1857, 0.0
        %1861 = vadd.xlane.f32.xlu0 %v1860
        %v1862 = vpop.xlane.xlu0 %1861
        %v1863 = vsel %vm800, %v1859, 0.0
        %1864 = vadd.xlane.f32.xlu0 %v1863
        %v1865 = vpop.xlane.xlu0 %1864
        %v1866 = vrcp.pop %v1862
        %v1867 = vrcp.pop %v1865
        %v1868 = vmul.f32 %v1857, %v1866
        %v1869 = vmul.f32 %v1859, %v1867
        %1870 = vrot.lane.b32.xlu0 %v1651, 56
        %v1871 = vpop.permute.xlu0 %1870
        %v1874 = vsel %vm800, %v1868, 0
        %1876 = vmatpush.msra.mxu0 0.0
        %1877 = vmatpush.msra.mxu0 0.0
        %1878 = vmatpush.msra.mxu0 0.0
        %1879 = vmatpush.msra.mxu0 0.0
        %1880 = vmatpush.msra.mxu0 0.0
        %1881 = vmatpush.msra.mxu0 0.0
        %1882 = vmatpush.msra.mxu0 0.0
        %1883 = vmatpush.msra.mxu0 0.0
        %1884 = vmatpush.msra.mxu0 0.0
        %1885 = vmatpush.msra.mxu0 0.0
        %1886 = vmatpush.msra.mxu0 0.0
        %1887 = vmatpush.msra.mxu0 0.0
        %1888 = vmatpush.msra.mxu0 0.0
        %1889 = vmatpush.msra.mxu0 0.0
        %1890 = vmatpush.msra.mxu0 0.0
        %1891 = vmatpush.msra.mxu0 %v1871
        %1892 = vmatmul.f32.gmra.mxu0 %v1874
        %v1893 = vpop.f32.mrf.mxu0
        %v1894 = vadd.f32 0.0, %v1893
        %1895 = vdwg.mxu0
        %1896 = vrot.lane.b32.xlu0 %v1654, 56
        %v1897 = vpop.permute.xlu0 %1896
        %v1900 = vsel %vm800, %v1869, 0
        %1902 = vmatpush.msra.mxu0 0.0
        %1903 = vmatpush.msra.mxu0 0.0
        %1904 = vmatpush.msra.mxu0 0.0
        %1905 = vmatpush.msra.mxu0 0.0
        %1906 = vmatpush.msra.mxu0 0.0
        %1907 = vmatpush.msra.mxu0 0.0
        %1908 = vmatpush.msra.mxu0 0.0
        %1909 = vmatpush.msra.mxu0 0.0
        %1910 = vmatpush.msra.mxu0 0.0
        %1911 = vmatpush.msra.mxu0 0.0
        %1912 = vmatpush.msra.mxu0 0.0
        %1913 = vmatpush.msra.mxu0 0.0
        %1914 = vmatpush.msra.mxu0 0.0
        %1915 = vmatpush.msra.mxu0 0.0
        %1916 = vmatpush.msra.mxu0 0.0
        %1917 = vmatpush.msra.mxu0 %v1897
        %1918 = vmatmul.f32.gmra.mxu0 %v1900
        %v1919 = vpop.f32.mrf.mxu0
        %v1920 = vadd.f32 0.0, %v1919
        %1921 = vdwg.mxu0
        %1922 = vrot.lane.b32.xlu0 %v1651, 112
        %v1923 = vpop.permute.xlu0 %1922
        %1924 = vrot.lane.b32.xlu0 %v1651, 80
        %v1925 = vpop.permute.xlu0 %1924
        %v1926 = vsel %vm800, %v1923, 0
        %v1928 = vsel %vm800, %v1925, 0
        %1930 = vmatpush.xpose.msra.mxu0 0.0
        %1931 = vmatpush.xpose.msra.mxu0 0.0
        %1932 = vmatpush.xpose.msra.mxu0 0.0
        %1933 = vmatpush.xpose.msra.mxu0 0.0
        %1934 = vmatpush.xpose.msra.mxu0 0.0
        %1935 = vmatpush.xpose.msra.mxu0 0.0
        %1936 = vmatpush.xpose.msra.mxu0 0.0
        %1937 = vmatpush.xpose.msra.mxu0 0.0
        %1938 = vmatpush.xpose.msra.mxu0 0.0
        %1939 = vmatpush.xpose.msra.mxu0 0.0
        %1940 = vmatpush.xpose.msra.mxu0 0.0
        %1941 = vmatpush.xpose.msra.mxu0 0.0
        %1942 = vmatpush.xpose.msra.mxu0 0.0
        %1943 = vmatpush.xpose.msra.mxu0 0.0
        %1944 = vmatpush.xpose.msra.mxu0 0.0
        %1945 = vmatpush.xpose.msra.mxu0 %v1928
        %1946 = vmatmul.f32.gmra.mxu0 %v1926
        %v1947 = vpop.f32.mrf.mxu0
        %v1948 = vadd.f32 0.0, %v1947
        %1949 = vdwg.mxu0
        %1950 = vrot.lane.b32.xlu0 %v1654, 112
        %v1951 = vpop.permute.xlu0 %1950
        %1952 = vrot.lane.b32.xlu0 %v1654, 80
        %v1953 = vpop.permute.xlu0 %1952
        %v1954 = vsel %vm800, %v1951, 0
        %v1956 = vsel %vm800, %v1953, 0
        %1958 = vmatpush.xpose.msra.mxu0 0.0
        %1959 = vmatpush.xpose.msra.mxu0 0.0
        %1960 = vmatpush.xpose.msra.mxu0 0.0
        %1961 = vmatpush.xpose.msra.mxu0 0.0
        %1962 = vmatpush.xpose.msra.mxu0 0.0
        %1963 = vmatpush.xpose.msra.mxu0 0.0
        %1964 = vmatpush.xpose.msra.mxu0 0.0
        %1965 = vmatpush.xpose.msra.mxu0 0.0
        %1966 = vmatpush.xpose.msra.mxu0 0.0
        %1967 = vmatpush.xpose.msra.mxu0 0.0
        %1968 = vmatpush.xpose.msra.mxu0 0.0
        %1969 = vmatpush.xpose.msra.mxu0 0.0
        %1970 = vmatpush.xpose.msra.mxu0 0.0
        %1971 = vmatpush.xpose.msra.mxu0 0.0
        %1972 = vmatpush.xpose.msra.mxu0 0.0
        %1973 = vmatpush.xpose.msra.mxu0 %v1956
        %1974 = vmatmul.f32.gmra.mxu0 %v1954
        %v1975 = vpop.f32.mrf.mxu0
        %v1976 = vadd.f32 0.0, %v1975
        %1977 = vdwg.mxu0
        %v1978 = vmul.f32 %v1948, 0.35355338
        %v1979 = vmul.f32 %v1976, 0.35355338
        %v1980 = vadd.f32 %v1978, %v751
        %v1981 = vadd.f32 %v1979, %v752
        %v1982 = vsel %vm800, %v1980, -inf
        %1983 = vmax.xlane.f32.xlu0 %v1982
        %v1984 = vpop.xlane.xlu0 %1983
        %v1985 = vsel %vm800, %v1981, -inf
        %1986 = vmax.xlane.f32.xlu0 %v1985
        %v1987 = vpop.xlane.xlu0 %1986
        %v1988 = vsub.f32 %v1980, %v1984
        %v1989 = vsub.f32 %v1981, %v1987
        %v1990 = vmul.f32 %v1988, 1.442695
        %v1991 = vpow.pop %v1990
        %v1992 = vmul.f32 %v1989, 1.442695
        %v1993 = vpow.pop %v1992
        %v1994 = vsel %vm800, %v1991, 0.0
        %1995 = vadd.xlane.f32.xlu0 %v1994
        %v1996 = vpop.xlane.xlu0 %1995
        %v1997 = vsel %vm800, %v1993, 0.0
        %1998 = vadd.xlane.f32.xlu0 %v1997
        %v1999 = vpop.xlane.xlu0 %1998
        %v2000 = vrcp.pop %v1996
        %v2001 = vrcp.pop %v1999
        %v2002 = vmul.f32 %v1991, %v2000
        %v2003 = vmul.f32 %v1993, %v2001
        %2004 = vrot.lane.b32.xlu0 %v1651, 48
        %v2005 = vpop.permute.xlu0 %2004
        %v2008 = vsel %vm800, %v2002, 0
        %2010 = vmatpush.msra.mxu0 0.0
        %2011 = vmatpush.msra.mxu0 0.0
        %2012 = vmatpush.msra.mxu0 0.0
        %2013 = vmatpush.msra.mxu0 0.0
        %2014 = vmatpush.msra.mxu0 0.0
        %2015 = vmatpush.msra.mxu0 0.0
        %2016 = vmatpush.msra.mxu0 0.0
        %2017 = vmatpush.msra.mxu0 0.0
        %2018 = vmatpush.msra.mxu0 0.0
        %2019 = vmatpush.msra.mxu0 0.0
        %2020 = vmatpush.msra.mxu0 0.0
        %2021 = vmatpush.msra.mxu0 0.0
        %2022 = vmatpush.msra.mxu0 0.0
        %2023 = vmatpush.msra.mxu0 0.0
        %2024 = vmatpush.msra.mxu0 0.0
        %2025 = vmatpush.msra.mxu0 %v2005
        %2026 = vmatmul.f32.gmra.mxu0 %v2008
        %v2027 = vpop.f32.mrf.mxu0
        %v2028 = vadd.f32 0.0, %v2027
        %2029 = vdwg.mxu0
        %2030 = vrot.lane.b32.xlu0 %v1654, 48
        %v2031 = vpop.permute.xlu0 %2030
        %v2034 = vsel %vm800, %v2003, 0
        %2036 = vmatpush.msra.mxu0 0.0
        %2037 = vmatpush.msra.mxu0 0.0
        %2038 = vmatpush.msra.mxu0 0.0
        %2039 = vmatpush.msra.mxu0 0.0
        %2040 = vmatpush.msra.mxu0 0.0
        %2041 = vmatpush.msra.mxu0 0.0
        %2042 = vmatpush.msra.mxu0 0.0
        %2043 = vmatpush.msra.mxu0 0.0
        %2044 = vmatpush.msra.mxu0 0.0
        %2045 = vmatpush.msra.mxu0 0.0
        %2046 = vmatpush.msra.mxu0 0.0
        %2047 = vmatpush.msra.mxu0 0.0
        %2048 = vmatpush.msra.mxu0 0.0
        %2049 = vmatpush.msra.mxu0 0.0
        %2050 = vmatpush.msra.mxu0 0.0
        %2051 = vmatpush.msra.mxu0 %v2031
        %2052 = vmatmul.f32.gmra.mxu0 %v2034
        %v2053 = vpop.f32.mrf.mxu0
        %v2054 = vadd.f32 0.0, %v2053
        %2055 = vdwg.mxu0
        %2056 = vrot.lane.b32.xlu0 %v1651, 104
        %v2057 = vpop.permute.xlu0 %2056
        %2058 = vrot.lane.b32.xlu0 %v1651, 72
        %v2059 = vpop.permute.xlu0 %2058
        %v2060 = vsel %vm800, %v2057, 0
        %v2062 = vsel %vm800, %v2059, 0
        %2064 = vmatpush.xpose.msra.mxu0 0.0
        %2065 = vmatpush.xpose.msra.mxu0 0.0
        %2066 = vmatpush.xpose.msra.mxu0 0.0
        %2067 = vmatpush.xpose.msra.mxu0 0.0
        %2068 = vmatpush.xpose.msra.mxu0 0.0
        %2069 = vmatpush.xpose.msra.mxu0 0.0
        %2070 = vmatpush.xpose.msra.mxu0 0.0
        %2071 = vmatpush.xpose.msra.mxu0 0.0
        %2072 = vmatpush.xpose.msra.mxu0 0.0
        %2073 = vmatpush.xpose.msra.mxu0 0.0
        %2074 = vmatpush.xpose.msra.mxu0 0.0
        %2075 = vmatpush.xpose.msra.mxu0 0.0
        %2076 = vmatpush.xpose.msra.mxu0 0.0
        %2077 = vmatpush.xpose.msra.mxu0 0.0
        %2078 = vmatpush.xpose.msra.mxu0 0.0
        %2079 = vmatpush.xpose.msra.mxu0 %v2062
        %2080 = vmatmul.f32.gmra.mxu0 %v2060
        %v2081 = vpop.f32.mrf.mxu0
        %v2082 = vadd.f32 0.0, %v2081
        %2083 = vdwg.mxu0
        %2084 = vrot.lane.b32.xlu0 %v1654, 104
        %v2085 = vpop.permute.xlu0 %2084
        %2086 = vrot.lane.b32.xlu0 %v1654, 72
        %v2087 = vpop.permute.xlu0 %2086
        %v2088 = vsel %vm800, %v2085, 0
        %v2090 = vsel %vm800, %v2087, 0
        %2092 = vmatpush.xpose.msra.mxu0 0.0
        %2093 = vmatpush.xpose.msra.mxu0 0.0
        %2094 = vmatpush.xpose.msra.mxu0 0.0
        %2095 = vmatpush.xpose.msra.mxu0 0.0
        %2096 = vmatpush.xpose.msra.mxu0 0.0
        %2097 = vmatpush.xpose.msra.mxu0 0.0
        %2098 = vmatpush.xpose.msra.mxu0 0.0
        %2099 = vmatpush.xpose.msra.mxu0 0.0
        %2100 = vmatpush.xpose.msra.mxu0 0.0
        %2101 = vmatpush.xpose.msra.mxu0 0.0
        %2102 = vmatpush.xpose.msra.mxu0 0.0
        %2103 = vmatpush.xpose.msra.mxu0 0.0
        %2104 = vmatpush.xpose.msra.mxu0 0.0
        %2105 = vmatpush.xpose.msra.mxu0 0.0
        %2106 = vmatpush.xpose.msra.mxu0 0.0
        %2107 = vmatpush.xpose.msra.mxu0 %v2090
        %2108 = vmatmul.f32.gmra.mxu0 %v2088
        %v2109 = vpop.f32.mrf.mxu0
        %v2110 = vadd.f32 0.0, %v2109
        %2111 = vdwg.mxu0
        %v2112 = vmul.f32 %v2082, 0.35355338
        %v2113 = vmul.f32 %v2110, 0.35355338
        %v2114 = vadd.f32 %v2112, %v751
        %v2115 = vadd.f32 %v2113, %v752
        %v2116 = vsel %vm800, %v2114, -inf
        %2117 = vmax.xlane.f32.xlu0 %v2116
        %v2118 = vpop.xlane.xlu0 %2117
        %v2119 = vsel %vm800, %v2115, -inf
        %2120 = vmax.xlane.f32.xlu0 %v2119
        %v2121 = vpop.xlane.xlu0 %2120
        %v2122 = vsub.f32 %v2114, %v2118
        %v2123 = vsub.f32 %v2115, %v2121
        %v2124 = vmul.f32 %v2122, 1.442695
        %v2125 = vpow.pop %v2124
        %v2126 = vmul.f32 %v2123, 1.442695
        %v2127 = vpow.pop %v2126
        %v2128 = vsel %vm800, %v2125, 0.0
        %2129 = vadd.xlane.f32.xlu0 %v2128
        %v2130 = vpop.xlane.xlu0 %2129
        %v2131 = vsel %vm800, %v2127, 0.0
        %2132 = vadd.xlane.f32.xlu0 %v2131
        %v2133 = vpop.xlane.xlu0 %2132
        %v2134 = vrcp.pop %v2130
        %v2135 = vrcp.pop %v2133
        %v2136 = vmul.f32 %v2125, %v2134
        %v2137 = vmul.f32 %v2127, %v2135
        %2138 = vrot.lane.b32.xlu0 %v1651, 40
        %v2139 = vpop.permute.xlu0 %2138
        %v2142 = vsel %vm800, %v2136, 0
        %2144 = vmatpush.msra.mxu0 0.0
        %2145 = vmatpush.msra.mxu0 0.0
        %2146 = vmatpush.msra.mxu0 0.0
        %2147 = vmatpush.msra.mxu0 0.0
        %2148 = vmatpush.msra.mxu0 0.0
        %2149 = vmatpush.msra.mxu0 0.0
        %2150 = vmatpush.msra.mxu0 0.0
        %2151 = vmatpush.msra.mxu0 0.0
        %2152 = vmatpush.msra.mxu0 0.0
        %2153 = vmatpush.msra.mxu0 0.0
        %2154 = vmatpush.msra.mxu0 0.0
        %2155 = vmatpush.msra.mxu0 0.0
        %2156 = vmatpush.msra.mxu0 0.0
        %2157 = vmatpush.msra.mxu0 0.0
        %2158 = vmatpush.msra.mxu0 0.0
        %2159 = vmatpush.msra.mxu0 %v2139
        %2160 = vmatmul.f32.gmra.mxu0 %v2142
        %v2161 = vpop.f32.mrf.mxu0
        %v2162 = vadd.f32 0.0, %v2161
        %2163 = vdwg.mxu0
        %2164 = vrot.lane.b32.xlu0 %v1654, 40
        %v2165 = vpop.permute.xlu0 %2164
        %v2168 = vsel %vm800, %v2137, 0
        %2170 = vmatpush.msra.mxu0 0.0
        %2171 = vmatpush.msra.mxu0 0.0
        %2172 = vmatpush.msra.mxu0 0.0
        %2173 = vmatpush.msra.mxu0 0.0
        %2174 = vmatpush.msra.mxu0 0.0
        %2175 = vmatpush.msra.mxu0 0.0
        %2176 = vmatpush.msra.mxu0 0.0
        %2177 = vmatpush.msra.mxu0 0.0
        %2178 = vmatpush.msra.mxu0 0.0
        %2179 = vmatpush.msra.mxu0 0.0
        %2180 = vmatpush.msra.mxu0 0.0
        %2181 = vmatpush.msra.mxu0 0.0
        %2182 = vmatpush.msra.mxu0 0.0
        %2183 = vmatpush.msra.mxu0 0.0
        %2184 = vmatpush.msra.mxu0 0.0
        %2185 = vmatpush.msra.mxu0 %v2165
        %2186 = vmatmul.f32.gmra.mxu0 %v2168
        %v2187 = vpop.f32.mrf.mxu0
        %v2188 = vadd.f32 0.0, %v2187
        %2189 = vdwg.mxu0
        %2192 = vrot.lane.b32.xlu0 %v1894, 8
        %v2193 = vpop.permute.xlu0 %2192
        %2194 = vrot.lane.b32.xlu0 %v1920, 8
        %v2195 = vpop.permute.xlu0 %2194
        %2200 = vrot.lane.b32.xlu0 %v2028, 16
        %v2201 = vpop.permute.xlu0 %2200
        %2202 = vrot.lane.b32.xlu0 %v2054, 16
        %v2203 = vpop.permute.xlu0 %2202
        %2208 = vrot.lane.b32.xlu0 %v2162, 24
        %v2209 = vpop.permute.xlu0 %2208
        %2210 = vrot.lane.b32.xlu0 %v2188, 24
        %v2211 = vpop.permute.xlu0 %2210
        %v2214 = vsel %vm800, %v1760, %v2193
        %v2215 = vsel %vm800, %v1786, %v2195
        %v2216 = vsel %vm1358, %v2214, %v2201
        %v2217 = vsel %vm1358, %v2215, %v2203
        %v2218 = vsel %vm1361, %v2216, %v2209
        %v2219 = vsel %vm1361, %v2217, %v2211
        %s2220 = scalar_lea.vmem [#allocation10], 1
        %v2221 = vld [vmem:[%s2220] sm:$0x1]
        %v2223 = vperm.slane %v2221, 0
        %v2226 = vsel %vm683, %v2218, 0
        %v2229 = vsel %vm683, %v2219, 0
        %2231 = vmatpush.msra.mxu0 0.0
        %2232 = vmatpush.msra.mxu0 0.0
        %2233 = vmatpush.msra.mxu0 0.0
        %2234 = vmatpush.msra.mxu0 0.0
        %2235 = vmatpush.msra.mxu0 0.0
        %2236 = vmatpush.msra.mxu0 0.0
        %2237 = vmatpush.msra.mxu0 0.0
        %2238 = vmatpush.msra.mxu0 0.0
        %2239 = vmatpush.msra.mxu0 0.0
        %2240 = vmatpush.msra.mxu0 0.0
        %2241 = vmatpush.msra.mxu0 0.0
        %2242 = vmatpush.msra.mxu0 0.0
        %2243 = vmatpush.msra.mxu0 %v1619
        %2244 = vmatpush.msra.mxu0 %v1618
        %2245 = vmatpush.msra.mxu0 %v1617
        %2246 = vmatpush.msra.mxu0 %v1616
        %2247 = vmatmul.f32.gmra.mxu0 %v2226
        %v2248 = vpop.f32.mrf.mxu0
        %v2249 = vadd.f32 %v2223, %v2248
        %2250 = vmatmul.f32.gmra.mxu0 %v2229
        %v2251 = vpop.f32.mrf.mxu0
        %v2252 = vadd.f32 %v2223, %v2251
        %2253 = vdwg.mxu0
        %v2254 = vadd.f32 %v2249, %v1608
        %v2255 = vadd.f32 %v2252, %v1609
        %v2256 = vsel %vm683, %v2254, 0.0
        %2257 = vadd.xlane.f32.xlu0 %v2256
        %v2258 = vpop.xlane.xlu0 %2257
        %v2259 = vsel %vm683, %v2255, 0.0
        %2260 = vadd.xlane.f32.xlu0 %v2259
        %v2261 = vpop.xlane.xlu0 %2260
        %v2262 = vmul.f32 %v2258, %v696
        %v2263 = vmul.f32 %v2261, %v696
        %v2264 = vmul.f32 %v2254, %v2254
        %v2265 = vmul.f32 %v2255, %v2255
        %v2266 = vsel %vm683, %v2264, 0.0
        %2267 = vadd.xlane.f32.xlu0 %v2266
        %v2268 = vpop.xlane.xlu0 %2267
        %v2269 = vsel %vm683, %v2265, 0.0
        %2270 = vadd.xlane.f32.xlu0 %v2269
        %v2271 = vpop.xlane.xlu0 %2270
        %v2272 = vmul.f32 %v2268, %v696
        %v2273 = vmul.f32 %v2271, %v696
        %v2274 = vmul.f32 %v2262, %v2262
        %v2275 = vmul.f32 %v2263, %v2263
        %v2276 = vsub.f32 %v2272, %v2274
        %v2277 = vsub.f32 %v2273, %v2275
        %v2278 = vmax.f32 %v2276, 0.0
        %v2279 = vmax.f32 %v2277, 0.0
        %v2280 = vsub.f32 %v2254, %v2262
        %v2281 = vsub.f32 %v2255, %v2263
        %v2282 = vadd.f32 %v2278, 1e-12
        %v2283 = vadd.f32 %v2279, 1e-12
        %v2284 = vrsqrt.pop %v2282
        %v2285 = vmul.f32 %v2284, %v2282
        %v2286 = vmul.f32 %v2285, %v2284
        %v2287 = vmul.f32 0.5, %v2286
        %v2288 = vsub.f32 1.5, %v2287
        %v2289 = vmul.f32 %v2284, %v2288
        %vm2290 = vweird.f32 %v2282
        %vm2291 = vweird.f32 %v2284
        %vm2292 = vmor %vm2290, %vm2291
        %v2293 = vsel %vm2292, %v2284, %v2289
        %v2294 = vrsqrt.pop %v2283
        %v2295 = vmul.f32 %v2294, %v2283
        %v2296 = vmul.f32 %v2295, %v2294
        %v2297 = vmul.f32 0.5, %v2296
        %v2298 = vsub.f32 1.5, %v2297
        %v2299 = vmul.f32 %v2294, %v2298
        %vm2300 = vweird.f32 %v2283
        %vm2301 = vweird.f32 %v2294
        %vm2302 = vmor %vm2300, %vm2301
        %v2303 = vsel %vm2302, %v2294, %v2299
        %v2304 = vmul.f32 %v2280, %v2293
        %v2305 = vmul.f32 %v2281, %v2303
        %v2306 = vperm.slane %v1621, 0
        %v2307 = vmul.f32 %v2304, %v2306
        %v2308 = vmul.f32 %v2305, %v2306
        %v2309 = vperm.slane %v1621, 1
        %v2310 = vadd.f32 %v2307, %v2309
        %v2311 = vadd.f32 %v2308, %v2309
        %s2312 = scalar_lea.vmem %s8, 32
        %v2313 = vld [vmem:[%s2312] sm:$0xff]
        %v2314 = vld [vmem:[%s2312 + $0x8] sm:$0xff]
        %v2315 = vld [vmem:[%s2312 + $0x10] sm:$0xff]
        %v2316 = vld [vmem:[%s2312 + $0x18] sm:$0xff]
        %s2317 = scalar_lea.vmem %s10, 64
        %v2318 = vld [vmem:[%s2317] sm:$0xff]
        %v2319 = vld [vmem:[%s2317 + $0x8] sm:$0xff]
        %v2320 = vld [vmem:[%s2317 + $0x10] sm:$0xff]
        %v2321 = vld [vmem:[%s2317 + $0x18] sm:$0xff]
        %v2322 = vld [vmem:[%s2317 + $0x20] sm:$0xff]
        %v2323 = vld [vmem:[%s2317 + $0x28] sm:$0xff]
        %v2324 = vld [vmem:[%s2317 + $0x30] sm:$0xff]
        %v2325 = vld [vmem:[%s2317 + $0x38] sm:$0xff]
        %s2326 = scalar_lea.vmem %s9, 1
        %v2327 = vld [vmem:[%s2326] sm:$0x1]
        %v2329 = vperm.slane %v2327, 0
        %v2332 = vsel %vm683, %v2310, 0
        %v2335 = vsel %vm683, %v2311, 0
        %2337 = vmatpush.msra.mxu0 0.0
        %2338 = vmatpush.msra.mxu0 0.0
        %2339 = vmatpush.msra.mxu0 0.0
        %2340 = vmatpush.msra.mxu0 0.0
        %2341 = vmatpush.msra.mxu0 0.0
        %2342 = vmatpush.msra.mxu0 0.0
        %2343 = vmatpush.msra.mxu0 0.0
        %2344 = vmatpush.msra.mxu0 0.0
        %2345 = vmatpush.msra.mxu0 0.0
        %2346 = vmatpush.msra.mxu0 0.0
        %2347 = vmatpush.msra.mxu0 0.0
        %2348 = vmatpush.msra.mxu0 0.0
        %2349 = vmatpush.msra.mxu0 %v2316
        %2350 = vmatpush.msra.mxu0 %v2315
        %2351 = vmatpush.msra.mxu0 %v2314
        %2352 = vmatpush.msra.mxu0 %v2313
        %2353 = vmatmul.f32.gmra.mxu0 %v2332
        %v2354 = vpop.f32.mrf.mxu0
        %v2355 = vadd.f32 %v2329, %v2354
        %2356 = vmatmul.f32.gmra.mxu0 %v2335
        %v2357 = vpop.f32.mrf.mxu0
        %v2358 = vadd.f32 %v2329, %v2357
        %2359 = vdwg.mxu0
        %v2360 = vmul.f32 %v2355, %v2355
        %v2361 = vmul.f32 %v2358, %v2358
        %v2362 = vmul.f32 %v2355, %v2360
        %v2363 = vmul.f32 %v2358, %v2361
        %v2364 = vmul.f32 %v2362, 0.044715
        %v2365 = vmul.f32 %v2363, 0.044715
        %v2366 = vadd.f32 %v2355, %v2364
        %v2367 = vadd.f32 %v2358, %v2365
        %v2368 = vmul.f32 %v2366, 0.7978846
        %v2369 = vmul.f32 %v2367, 0.7978846
        %v2370 = vtanh.pop %v2368
        %v2371 = vtanh.pop %v2369
        %v2372 = vadd.f32 %v2370, 1.0
        %v2373 = vadd.f32 %v2371, 1.0
        %v2374 = vmul.f32 %v2372, 0.5
        %v2375 = vmul.f32 %v2373, 0.5
        %v2376 = vmul.f32 %v2355, %v2374
        %v2377 = vmul.f32 %v2358, %v2375
        %s2378 = scalar_lea.vmem %s11, 1
        %v2379 = vld [vmem:[%s2378] sm:$0x1]
        %v2381 = vperm.slane %v2379, 0
        %v2384 = vsel %vm1522, %v2376, 0
        %v2387 = vsel %vm1522, %v2377, 0
        %2389 = vmatpush.msra.mxu0 0.0
        %2390 = vmatpush.msra.mxu0 0.0
        %2391 = vmatpush.msra.mxu0 0.0
        %2392 = vmatpush.msra.mxu0 0.0
        %2393 = vmatpush.msra.mxu0 0.0
        %2394 = vmatpush.msra.mxu0 0.0
        %2395 = vmatpush.msra.mxu0 0.0
        %2396 = vmatpush.msra.mxu0 0.0
        %2397 = vmatpush.msra.mxu0 %v2325
        %2398 = vmatpush.msra.mxu0 %v2324
        %2399 = vmatpush.msra.mxu0 %v2323
        %2400 = vmatpush.msra.mxu0 %v2322
        %2401 = vmatpush.msra.mxu0 %v2321
        %2402 = vmatpush.msra.mxu0 %v2320
        %2403 = vmatpush.msra.mxu0 %v2319
        %2404 = vmatpush.msra.mxu0 %v2318
        %2405 = vmatmul.f32.gmra.mxu0 %v2384
        %v2406 = vpop.f32.mrf.mxu0
        %v2407 = vadd.f32 %v2381, %v2406
        %2408 = vmatmul.f32.gmra.mxu0 %v2387
        %v2409 = vpop.f32.mrf.mxu0
        %v2410 = vadd.f32 %v2381, %v2409
        %2411 = vdwg.mxu0
        %v2412 = vadd.f32 %v2407, %v2310
        %v2413 = vadd.f32 %v2410, %v2311
        %v2414 = vsel %vm683, %v2412, 0.0
        %2415 = vadd.xlane.f32.xlu0 %v2414
        %v2416 = vpop.xlane.xlu0 %2415
        %v2417 = vsel %vm683, %v2413, 0.0
        %2418 = vadd.xlane.f32.xlu0 %v2417
        %v2419 = vpop.xlane.xlu0 %2418
        %v2420 = vmul.f32 %v2416, %v696
        %v2421 = vmul.f32 %v2419, %v696
        %v2422 = vmul.f32 %v2412, %v2412
        %v2423 = vmul.f32 %v2413, %v2413
        %v2424 = vsel %vm683, %v2422, 0.0
        %2425 = vadd.xlane.f32.xlu0 %v2424
        %v2426 = vpop.xlane.xlu0 %2425
        %v2427 = vsel %vm683, %v2423, 0.0
        %2428 = vadd.xlane.f32.xlu0 %v2427
        %v2429 = vpop.xlane.xlu0 %2428
        %v2430 = vmul.f32 %v2426, %v696
        %v2431 = vmul.f32 %v2429, %v696
        %v2432 = vmul.f32 %v2420, %v2420
        %v2433 = vmul.f32 %v2421, %v2421
        %v2434 = vsub.f32 %v2430, %v2432
        %v2435 = vsub.f32 %v2431, %v2433
        %v2436 = vmax.f32 %v2434, 0.0
        %v2437 = vmax.f32 %v2435, 0.0
        %v2438 = vsub.f32 %v2412, %v2420
        %v2439 = vsub.f32 %v2413, %v2421
        %v2440 = vadd.f32 %v2436, 1e-12
        %v2441 = vadd.f32 %v2437, 1e-12
        %v2442 = vrsqrt.pop %v2440
        %v2443 = vmul.f32 %v2442, %v2440
        %v2444 = vmul.f32 %v2443, %v2442
        %v2445 = vmul.f32 0.5, %v2444
        %v2446 = vsub.f32 1.5, %v2445
        %v2447 = vmul.f32 %v2442, %v2446
        %vm2448 = vweird.f32 %v2440
        %vm2449 = vweird.f32 %v2442
        %vm2450 = vmor %vm2448, %vm2449
        %v2451 = vsel %vm2450, %v2442, %v2447
        %v2452 = vrsqrt.pop %v2441
        %v2453 = vmul.f32 %v2452, %v2441
        %v2454 = vmul.f32 %v2453, %v2452
        %v2455 = vmul.f32 0.5, %v2454
        %v2456 = vsub.f32 1.5, %v2455
        %v2457 = vmul.f32 %v2452, %v2456
        %vm2458 = vweird.f32 %v2441
        %vm2459 = vweird.f32 %v2452
        %vm2460 = vmor %vm2458, %vm2459
        %v2461 = vsel %vm2460, %v2452, %v2457
        %v2462 = vmul.f32 %v2438, %v2451
        %v2463 = vmul.f32 %v2439, %v2461
        %v2464 = vperm.slane %v1621, 2
        %v2465 = vmul.f32 %v2462, %v2464
        %v2466 = vmul.f32 %v2463, %v2464
        %v2467 = vperm.slane %v1621, 3
        %v2468 = vadd.f32 %v2465, %v2467
        %v2469 = vadd.f32 %v2466, %v2467
        %v2470 = vsub.f32 %v2468, %v2469
        %v2471 = vand.u32 2147483647, %v2470
        %2473 = vrot.lane.b32.xlu0 %v2469, 32
        %v2474 = vpop.permute.xlu0 %2473
        %2477 = vrot.lane.b32.xlu0 %v2471, 64
        %v2478 = vpop.permute.xlu0 %2477
        %v2480 = vsel %vm683, %v2468, %v2474
        %v2481 = vsel %vm1522, %v2480, %v2478
        %v2482 = vld [vmem:[#allocation13] sm:$0xff]
        %v2483 = vld [vmem:[#allocation13 + $0x8] sm:$0xff]
        %v2484 = vld [vmem:[#allocation13 + $0x10] sm:$0xff]
        %v2485 = vld [vmem:[#allocation13 + $0x18] sm:$0xff]
        %v2486 = vld [vmem:[#allocation13 + $0x20] sm:$0xff]
        %v2487 = vld [vmem:[#allocation13 + $0x28] sm:$0xff]
        %v2488 = vld [vmem:[#allocation13 + $0x30] sm:$0xff]
        %v2489 = vld [vmem:[#allocation13 + $0x38] sm:$0xff]
        %v2490 = vld [vmem:[#allocation13 + $0x40] sm:$0xff]
        %v2491 = vld [vmem:[#allocation13 + $0x48] sm:$0xff]
        %v2492 = vld [vmem:[#allocation13 + $0x50] sm:$0xff]
        %v2493 = vld [vmem:[#allocation13 + $0x58] sm:$0xff]
        %v2494 = vld [vmem:[#allocation13 + $0x60] sm:$0xff]
        %v2495 = vld [vmem:[#allocation13 + $0x68] sm:$0xff]
        %v2496 = vld [vmem:[#allocation13 + $0x70] sm:$0xff]
        %v2497 = vld [vmem:[#allocation13 + $0x78] sm:$0xff]
        %v2498 = vld [vmem:[#allocation13 + $0x80] sm:$0xff]
        %v2499 = vld [vmem:[#allocation13 + $0x88] sm:$0xff]
        %v2500 = vld [vmem:[#allocation13 + $0x90] sm:$0xff]
        %v2501 = vld [vmem:[#allocation13 + $0x98] sm:$0xff]
        %v2502 = vld [vmem:[#allocation13 + $0xa0] sm:$0xff]
        %v2503 = vld [vmem:[#allocation13 + $0xa8] sm:$0xff]
        %v2504 = vld [vmem:[#allocation13 + $0xb0] sm:$0xff]
        %v2505 = vld [vmem:[#allocation13 + $0xb8] sm:$0xff]
        %v2506 = vld [vmem:[#allocation13 + $0xc0] sm:$0xff]
        %v2507 = vld [vmem:[#allocation13 + $0xc8] sm:$0xff]
        %v2508 = vld [vmem:[#allocation13 + $0xd0] sm:$0xff]
        %v2509 = vld [vmem:[#allocation13 + $0xd8] sm:$0xff]
        %v2510 = vld [vmem:[#allocation13 + $0xe0] sm:$0xff]
        %v2511 = vld [vmem:[#allocation13 + $0xe8] sm:$0xff]
        %v2512 = vld [vmem:[#allocation13 + $0xf0] sm:$0xff]
        %v2513 = vld [vmem:[#allocation13 + $0xf8] sm:$0xff]
        %v2514 = vld [vmem:[#allocation13 + $0x100] sm:$0xff]
        %v2515 = vld [vmem:[#allocation13 + $0x108] sm:$0xff]
        %v2516 = vld [vmem:[#allocation13 + $0x110] sm:$0xff]
        %v2517 = vld [vmem:[#allocation13 + $0x118] sm:$0xff]
        %v2518 = vld [vmem:[#allocation13 + $0x120] sm:$0xff]
        %v2519 = vld [vmem:[#allocation13 + $0x128] sm:$0xff]
        %v2520 = vld [vmem:[#allocation13 + $0x130] sm:$0xff]
        %v2521 = vld [vmem:[#allocation13 + $0x138] sm:$0xff]
        %v2522 = vld [vmem:[#allocation13 + $0x140] sm:$0xff]
        %v2523 = vld [vmem:[#allocation13 + $0x148] sm:$0xff]
        %v2524 = vld [vmem:[#allocation13 + $0x150] sm:$0xff]
        %v2525 = vld [vmem:[#allocation13 + $0x158] sm:$0xff]
        %v2526 = vld [vmem:[#allocation13 + $0x160] sm:$0xff]
        %v2527 = vld [vmem:[#allocation13 + $0x168] sm:$0xff]
        %v2528 = vld [vmem:[#allocation13 + $0x170] sm:$0xff]
        %v2529 = vld [vmem:[#allocation13 + $0x178] sm:$0xff]
        %v2530 = vld [vmem:[#allocation14] sm:$0xff]
        %v2531 = vld [vmem:[#allocation14 + $0x8] sm:$0xff]
        %v2532 = vld [vmem:[#allocation14 + $0x10] sm:$0xff]
        %v2533 = vld [vmem:[#allocation14 + $0x18] sm:$0xff]
        %v2534 = vld [vmem:[#allocation14 + $0x20] sm:$0xff]
        %v2535 = vld [vmem:[#allocation14 + $0x28] sm:$0xff]
        %v2536 = vld [vmem:[#allocation14 + $0x30] sm:$0xff]
        %v2537 = vld [vmem:[#allocation14 + $0x38] sm:$0xff]
        %v2538 = vld [vmem:[#allocation14 + $0x40] sm:$0xff]
        %v2539 = vld [vmem:[#allocation14 + $0x48] sm:$0xff]
        %v2540 = vld [vmem:[#allocation14 + $0x50] sm:$0xff]
        %v2541 = vld [vmem:[#allocation14 + $0x58] sm:$0xff]
        %v2542 = vld [vmem:[#allocation14 + $0x60] sm:$0xff]
        %v2543 = vld [vmem:[#allocation14 + $0x68] sm:$0xff]
        %v2544 = vld [vmem:[#allocation14 + $0x70] sm:$0xff]
        %v2545 = vld [vmem:[#allocation14 + $0x78] sm:$0xff]
        %v2546 = vld [vmem:[#allocation14 + $0x80] sm:$0xff]
        %v2547 = vld [vmem:[#allocation14 + $0x88] sm:$0xff]
        %v2548 = vld [vmem:[#allocation14 + $0x90] sm:$0xff]
        %v2549 = vld [vmem:[#allocation14 + $0x98] sm:$0xff]
        %v2550 = vld [vmem:[#allocation14 + $0xa0] sm:$0xff]
        %v2551 = vld [vmem:[#allocation14 + $0xa8] sm:$0xff]
        %v2552 = vld [vmem:[#allocation14 + $0xb0] sm:$0xff]
        %v2553 = vld [vmem:[#allocation14 + $0xb8] sm:$0xff]
        %v2554 = vld [vmem:[#allocation14 + $0xc0] sm:$0xff]
        %v2555 = vld [vmem:[#allocation14 + $0xc8] sm:$0xff]
        %v2556 = vld [vmem:[#allocation14 + $0xd0] sm:$0xff]
        %v2557 = vld [vmem:[#allocation14 + $0xd8] sm:$0xff]
        %v2558 = vld [vmem:[#allocation14 + $0xe0] sm:$0xff]
        %v2559 = vld [vmem:[#allocation14 + $0xe8] sm:$0xff]
        %v2560 = vld [vmem:[#allocation14 + $0xf0] sm:$0xff]
        %v2561 = vld [vmem:[#allocation14 + $0xf8] sm:$0xff]
        %v2562 = vld [vmem:[#allocation14 + $0x100] sm:$0xff]
        %v2563 = vld [vmem:[#allocation14 + $0x108] sm:$0xff]
        %v2564 = vld [vmem:[#allocation14 + $0x110] sm:$0xff]
        %v2565 = vld [vmem:[#allocation14 + $0x118] sm:$0xff]
        %v2566 = vld [vmem:[#allocation14 + $0x120] sm:$0xff]
        %v2567 = vld [vmem:[#allocation14 + $0x128] sm:$0xff]
        %v2568 = vld [vmem:[#allocation14 + $0x130] sm:$0xff]
        %v2569 = vld [vmem:[#allocation14 + $0x138] sm:$0xff]
        %v2570 = vld [vmem:[#allocation14 + $0x140] sm:$0xff]
        %v2571 = vld [vmem:[#allocation14 + $0x148] sm:$0xff]
        %v2572 = vld [vmem:[#allocation14 + $0x150] sm:$0xff]
        %v2573 = vld [vmem:[#allocation14 + $0x158] sm:$0xff]
        %v2574 = vld [vmem:[#allocation14 + $0x160] sm:$0xff]
        %v2575 = vld [vmem:[#allocation14 + $0x168] sm:$0xff]
        %v2576 = vld [vmem:[#allocation14 + $0x170] sm:$0xff]
        %v2577 = vld [vmem:[#allocation14 + $0x178] sm:$0xff]
        %v2578 = vld [vmem:[#allocation14 + $0x180] sm:$0xff]
        %v2579 = vld [vmem:[#allocation14 + $0x188] sm:$0xff]
        %v2580 = vld [vmem:[#allocation14 + $0x190] sm:$0xff]
        %v2581 = vld [vmem:[#allocation14 + $0x198] sm:$0xff]
        %v2582 = vld [vmem:[#allocation14 + $0x1a0] sm:$0xff]
        %v2583 = vld [vmem:[#allocation14 + $0x1a8] sm:$0xff]
        %v2584 = vld [vmem:[#allocation14 + $0x1b0] sm:$0xff]
        %v2585 = vld [vmem:[#allocation14 + $0x1b8] sm:$0xff]
        %v2586 = vld [vmem:[#allocation14 + $0x1c0] sm:$0xff]
        %v2587 = vld [vmem:[#allocation14 + $0x1c8] sm:$0xff]
        %v2588 = vld [vmem:[#allocation14 + $0x1d0] sm:$0xff]
        %v2589 = vld [vmem:[#allocation14 + $0x1d8] sm:$0xff]
        %v2590 = vld [vmem:[#allocation14 + $0x1e0] sm:$0xff]
        %v2591 = vld [vmem:[#allocation14 + $0x1e8] sm:$0xff]
        %v2592 = vld [vmem:[#allocation14 + $0x1f0] sm:$0xff]
        %v2593 = vld [vmem:[#allocation14 + $0x1f8] sm:$0xff]
        %v2594 = vld [vmem:[%s13] sm:$0xf]
        %v2596 = vperm.slane %v2594, 0
        %v2597 = vperm.slane %v2594, 1
        %v2598 = vperm.slane %v2594, 2
        %v2599 = vperm.slane %v2594, 3
        %vm2604 = vcmask 785408
        %v2606 = vsel %vm2604, %v2481, 0
        %2608 = vmatpush.msra.mxu0 0.0
        %2609 = vmatpush.msra.mxu0 0.0
        %2610 = vmatpush.msra.mxu0 0.0
        %2611 = vmatpush.msra.mxu0 0.0
        %2612 = vmatpush.msra.mxu0 %v2526
        %2613 = vmatpush.msra.mxu0 %v2522
        %2614 = vmatpush.msra.mxu0 %v2518
        %2615 = vmatpush.msra.mxu0 %v2514
        %2616 = vmatpush.msra.mxu0 %v2510
        %2617 = vmatpush.msra.mxu0 %v2506
        %2618 = vmatpush.msra.mxu0 %v2502
        %2619 = vmatpush.msra.mxu0 %v2498
        %2620 = vmatpush.msra.mxu0 %v2494
        %2621 = vmatpush.msra.mxu0 %v2490
        %2622 = vmatpush.msra.mxu0 %v2486
        %2623 = vmatpush.msra.mxu0 %v2482
        %2624 = vmatmul.f32.gmra.mxu0 %v2606
        %v2625 = vpop.f32.mrf.mxu0
        %v2626 = vadd.f32 %v2596, %v2625
        %2627 = vdwg.mxu0
        %2628 = vmatpush.msra.mxu0 0.0
        %2629 = vmatpush.msra.mxu0 0.0
        %2630 = vmatpush.msra.mxu0 0.0
        %2631 = vmatpush.msra.mxu0 0.0
        %2632 = vmatpush.msra.mxu0 %v2527
        %2633 = vmatpush.msra.mxu0 %v2523
        %2634 = vmatpush.msra.mxu0 %v2519
        %2635 = vmatpush.msra.mxu0 %v2515
        %2636 = vmatpush.msra.mxu0 %v2511
        %2637 = vmatpush.msra.mxu0 %v2507
        %2638 = vmatpush.msra.mxu0 %v2503
        %2639 = vmatpush.msra.mxu0 %v2499
        %2640 = vmatpush.msra.mxu0 %v2495
        %2641 = vmatpush.msra.mxu0 %v2491
        %2642 = vmatpush.msra.mxu0 %v2487
        %2643 = vmatpush.msra.mxu0 %v2483
        %2644 = vmatmul.f32.gmra.mxu0 %v2606
        %v2645 = vpop.f32.mrf.mxu0
        %v2646 = vadd.f32 %v2597, %v2645
        %2647 = vdwg.mxu0
        %2648 = vmatpush.msra.mxu0 0.0
        %2649 = vmatpush.msra.mxu0 0.0
        %2650 = vmatpush.msra.mxu0 0.0
        %2651 = vmatpush.msra.mxu0 0.0
        %2652 = vmatpush.msra.mxu0 %v2528
        %2653 = vmatpush.msra.mxu0 %v2524
        %2654 = vmatpush.msra.mxu0 %v2520
        %2655 = vmatpush.msra.mxu0 %v2516
        %2656 = vmatpush.msra.mxu0 %v2512
        %2657 = vmatpush.msra.mxu0 %v2508
        %2658 = vmatpush.msra.mxu0 %v2504
        %2659 = vmatpush.msra.mxu0 %v2500
        %2660 = vmatpush.msra.mxu0 %v2496
        %2661 = vmatpush.msra.mxu0 %v2492
        %2662 = vmatpush.msra.mxu0 %v2488
        %2663 = vmatpush.msra.mxu0 %v2484
        %2664 = vmatmul.f32.gmra.mxu0 %v2606
        %v2665 = vpop.f32.mrf.mxu0
        %v2666 = vadd.f32 %v2598, %v2665
        %2667 = vdwg.mxu0
        %2668 = vmatpush.msra.mxu0 0.0
        %2669 = vmatpush.msra.mxu0 0.0
        %2670 = vmatpush.msra.mxu0 0.0
        %2671 = vmatpush.msra.mxu0 0.0
        %2672 = vmatpush.msra.mxu0 %v2529
        %2673 = vmatpush.msra.mxu0 %v2525
        %2674 = vmatpush.msra.mxu0 %v2521
        %2675 = vmatpush.msra.mxu0 %v2517
        %2676 = vmatpush.msra.mxu0 %v2513
        %2677 = vmatpush.msra.mxu0 %v2509
        %2678 = vmatpush.msra.mxu0 %v2505
        %2679 = vmatpush.msra.mxu0 %v2501
        %2680 = vmatpush.msra.mxu0 %v2497
        %2681 = vmatpush.msra.mxu0 %v2493
        %2682 = vmatpush.msra.mxu0 %v2489
        %2683 = vmatpush.msra.mxu0 %v2485
        %2684 = vmatmul.f32.gmra.mxu0 %v2606
        %v2685 = vpop.f32.mrf.mxu0
        %v2686 = vadd.f32 %v2599, %v2685
        %2687 = vdwg.mxu0
        %v2688 = vmax.f32 %v2626, 0.0
        %v2689 = vmax.f32 %v2646, 0.0
        %v2690 = vmax.f32 %v2666, 0.0
        %v2691 = vmax.f32 %v2686, 0.0
        %v2692 = vld [vmem:[%s15] sm:$0x1]
        %2693 = vmatpush.msra.mxu0 %v2545
        %2694 = vmatpush.msra.mxu0 %v2544
        %2695 = vmatpush.msra.mxu0 %v2543
        %2696 = vmatpush.msra.mxu0 %v2542
        %2697 = vmatpush.msra.mxu0 %v2541
        %2698 = vmatpush.msra.mxu0 %v2540
        %2699 = vmatpush.msra.mxu0 %v2539
        %2700 = vmatpush.msra.mxu0 %v2538
        %2701 = vmatpush.msra.mxu0 %v2537
        %2702 = vmatpush.msra.mxu0 %v2536
        %2703 = vmatpush.msra.mxu0 %v2535
        %2704 = vmatpush.msra.mxu0 %v2534
        %2705 = vmatpush.msra.mxu0 %v2533
        %2706 = vmatpush.msra.mxu0 %v2532
        %2707 = vmatpush.msra.mxu0 %v2531
        %2708 = vmatpush.msra.mxu0 %v2530
        %2709 = vmatmul.f32.gmra.mxu0 %v2688
        %v2710 = vpop.f32.mrf.mxu0
        %v2711 = vadd.f32 %v2692, %v2710
        %2712 = vdwg.mxu0
        %2713 = vmatpush.msra.mxu0 %v2561
        %2714 = vmatpush.msra.mxu0 %v2560
        %2715 = vmatpush.msra.mxu0 %v2559
        %2716 = vmatpush.msra.mxu0 %v2558
        %2717 = vmatpush.msra.mxu0 %v2557
        %2718 = vmatpush.msra.mxu0 %v2556
        %2719 = vmatpush.msra.mxu0 %v2555
        %2720 = vmatpush.msra.mxu0 %v2554
        %2721 = vmatpush.msra.mxu0 %v2553
        %2722 = vmatpush.msra.mxu0 %v2552
        %2723 = vmatpush.msra.mxu0 %v2551
        %2724 = vmatpush.msra.mxu0 %v2550
        %2725 = vmatpush.msra.mxu0 %v2549
        %2726 = vmatpush.msra.mxu0 %v2548
        %2727 = vmatpush.msra.mxu0 %v2547
        %2728 = vmatpush.msra.mxu0 %v2546
        %2729 = vmatmul.f32.gmra.mxu0 %v2689
        %v2730 = vpop.f32.mrf.mxu0
        %v2731 = vadd.f32 %v2711, %v2730
        %2732 = vdwg.mxu0
        %2733 = vmatpush.msra.mxu0 %v2577
        %2734 = vmatpush.msra.mxu0 %v2576
        %2735 = vmatpush.msra.mxu0 %v2575
        %2736 = vmatpush.msra.mxu0 %v2574
        %2737 = vmatpush.msra.mxu0 %v2573
        %2738 = vmatpush.msra.mxu0 %v2572
        %2739 = vmatpush.msra.mxu0 %v2571
        %2740 = vmatpush.msra.mxu0 %v2570
        %2741 = vmatpush.msra.mxu0 %v2569
        %2742 = vmatpush.msra.mxu0 %v2568
        %2743 = vmatpush.msra.mxu0 %v2567
        %2744 = vmatpush.msra.mxu0 %v2566
        %2745 = vmatpush.msra.mxu0 %v2565
        %2746 = vmatpush.msra.mxu0 %v2564
        %2747 = vmatpush.msra.mxu0 %v2563
        %2748 = vmatpush.msra.mxu0 %v2562
        %2749 = vmatmul.f32.gmra.mxu0 %v2690
        %v2750 = vpop.f32.mrf.mxu0
        %v2751 = vadd.f32 %v2731, %v2750
        %2752 = vdwg.mxu0
        %2753 = vmatpush.msra.mxu0 %v2593
        %2754 = vmatpush.msra.mxu0 %v2592
        %2755 = vmatpush.msra.mxu0 %v2591
        %2756 = vmatpush.msra.mxu0 %v2590
        %2757 = vmatpush.msra.mxu0 %v2589
        %2758 = vmatpush.msra.mxu0 %v2588
        %2759 = vmatpush.msra.mxu0 %v2587
        %2760 = vmatpush.msra.mxu0 %v2586
        %2761 = vmatpush.msra.mxu0 %v2585
        %2762 = vmatpush.msra.mxu0 %v2584
        %2763 = vmatpush.msra.mxu0 %v2583
        %2764 = vmatpush.msra.mxu0 %v2582
        %2765 = vmatpush.msra.mxu0 %v2581
        %2766 = vmatpush.msra.mxu0 %v2580
        %2767 = vmatpush.msra.mxu0 %v2579
        %2768 = vmatpush.msra.mxu0 %v2578
        %2769 = vmatmul.f32.gmra.mxu0 %v2691
        %v2770 = vpop.f32.mrf.mxu0
        %v2771 = vadd.f32 %v2751, %v2770
        %2772 = vdwg.mxu0
        %vm2773 = vcmask 1040384
        %v2774 = vsel %vm2773, %v2771, -inf
        %2775 = vmax.xlane.f32.xlu0 %v2774
        %v2776 = vpop.xlane.xlu0 %2775
        %v2777 = vsub.f32 %v2771, %v2776
        %v2778 = vmul.f32 %v2777, 1.442695
        %v2779 = vpow.pop %v2778
        %v2780 = vsel %vm2773, %v2779, 0.0
        %2781 = vadd.xlane.f32.xlu0 %v2780
        %v2782 = vpop.xlane.xlu0 %2781
        %v2783 = vrcp.pop %v2782
        %v2784 = vmul.f32 %v2782, %v2783
        %v2785 = vsub.f32 1.0, %v2784
        %v2786 = vmul.f32 %v2783, %v2785
        %v2787 = vadd.f32 %v2783, %v2786
        %vm2788 = vweird.f32 %v2782
        %vm2789 = vweird.f32 %v2783
        %vm2790 = vmor %vm2788, %vm2789
        %v2791 = vsel %vm2790, %v2783, %v2787
        %v2792 = vand.u32 2147483647, %v2782
        %vm2793 = vcmp.eq.f32.partialorder %v2792, 8.507059e+37
        %v2794 = vand.u32 %v2782, 2147483648
        %v2795 = vor.u32 1.1754944e-38, %v2794
        %v2796 = vsel %vm2793, %v2795, %v2791
        %v2797 = vmul.f32 %v2779, %v2796
        %v2798 = vperm.slane %v2797, 0
        %2799 = vst [vmem:[%s679] sm:$0xff] %v2798
        %s2800 = sand.u32 %s393, 1
        %s2801 = scalar_lea.sflag [#allocation4], %s2800
        %s2802 = sand.u32 %s393, 1
        %s2803 = smul.addr %s2802, 8
        %s2804 = scalar_lea.vmem [#allocation16], %s2803
        // Predicated region
        $region117: #{tpu_custom_call.1} parent=83 // pred_check
          %p2805 = pneg %p403
        $region118: #{tpu_custom_call.1} parent=83 // pred_check_branch
          %2807 = sbr.rel (%p2805) target = $region120
        $region119: #{tpu_custom_call.1} parent=83 // pred_region
          %2809 = vsyncadd %s2801, 0
          %s2810 = smul.addr %s39, 8
          %s2811 = scalar_lea.hbm %s16, %s2810
          %s2813 = sshll.u32 %s2804, 4
          %s2814 = int_to_ptr.vmem [resolvable:$true] %s2813
          %s2815 = sshll.u32 %s2811, 4
          %s2816 = int_to_ptr.hbm [resolvable:$true] %s2815
          %2818 = dma.vmem_to_hbm [thread:$0]  %s2814, 128, %s2816, %s2801
        $region120: #{tpu_custom_call.1} parent=83 // pred_fallthru
          _
      $region84: #{tpu_custom_call.1} parent=5 // pred_fallthru
        _
      %p2819 = scmp.le.s32.totalorder 2, %s34
      // Predicated region
      $region121: #{tpu_custom_call.1} parent=5 // pred_check
        %p2820 = pneg %p2819
      $region122: #{tpu_custom_call.1} parent=5 // pred_check_branch
        %2822 = sbr.rel (%p2820) target = $region124
      $region123: #{tpu_custom_call.1} parent=5 // pred_region
        %s2823 = ssub.s32 %s34, 2
        // Predicated region
        $region125: #{tpu_custom_call.1} parent=123 // pred_check
          %p2824 = pneg %p409
        $region126: #{tpu_custom_call.1} parent=123 // pred_check_branch
          %2826 = sbr.rel (%p2824) target = $region128
        $region127: #{tpu_custom_call.1} parent=123 // pred_region
          %s2827 = sand.u32 %s394, 1
          %s2828 = scalar_lea.sflag [#allocation4], %s2827
          %s2829 = sand.u32 %s394, 1
          %s2830 = smul.addr %s2829, 8
          %s2831 = scalar_lea.vmem [#allocation16], %s2830
          %2833 = dma.done %s2828, 128
        $region128: #{tpu_custom_call.1} parent=123 // pred_fallthru
          _
      $region124: #{tpu_custom_call.1} parent=5 // pred_fallthru
        _
    $region6: #{tpu_custom_call.1} parent=1 // loop_footer
      %s38 = sadd.s32 1, %s34
    $region7: #{tpu_custom_call.1} parent=1 // loop_footer_branch
      %33 = sbr.rel target = $region3
    $region8: #{tpu_custom_call.1} parent=1 // loop_exit
      _
    %2834 = vsyncpa [#allocation3], 1
    %s2835 = scalar_lea.sflag [#allocation3], 1
    %2836 = vsyncpa %s2835, 1
    %2837 = vsyncpa [#allocation6], 1
    %s2838 = scalar_lea.sflag [#allocation6], 1
    %2839 = vsyncpa %s2838, 1
    %2840 = vsyncpa [#allocation9], 1
    %2841 = vsyncpa [#allocation12], 1
    %2842 = vsyncpa [#allocation15], 1
    %2843 = vsyncpa [#allocation4], 1
    %s2844 = scalar_lea.sflag [#allocation4], 1
    %2845 = vsyncpa %s2844, 1

</llo_original>
